<compile_context>
chip_gen: v6e
topology: v6e:2x2x1
jax: 0.10.0
libtpu: 0.0.40
codegen_flags: <defaults>
</compile_context>

<pallas_src>
import functools

import jax
import jax.numpy as jnp
from jax import lax
from jax.experimental import pallas as pl
from jax.experimental.pallas import tpu as pltpu

EPS = 1e-5


def down_kernel(x_ref, dw1_ref, pw1_ref, b1_ref, dw2_ref, pw2_ref, b2_ref,
                o_ref, pad_ref):
    # x_ref block: (B, Cin, H2, W2)  (pooled input, H on sublanes, W on lanes)
    B, Cin, H2, W2 = x_ref.shape
    Cout = o_ref.shape[1]

    # Zero only the 1-wide halo ring of the shared padded scratch; the interior
    # is fully overwritten before every use.  (v1 zero-filled the whole padded
    # tensor once per conv per grid step.)
    zr = jnp.zeros((B, 1, W2 + 2), jnp.float32)
    zc = jnp.zeros((B, H2 + 2, 1), jnp.float32)
    pad_ref[:, 0:1, :] = zr
    pad_ref[:, H2 + 1:H2 + 2, :] = zr
    pad_ref[:, :, 0:1] = zc
    pad_ref[:, :, W2 + 1:W2 + 2] = zc

    def depthwise3x3(slab, dw_ref, c):
        # 3x3 depthwise conv (padding=1, bias folded into the pointwise) of one
        # channel's (B, H2, W2) slab: 9 statically-shifted windows of the
        # padded scratch, each scaled by an SMEM scalar weight.
        pad_ref[:, 1:1 + H2, 1:1 + W2] = slab
        acc = None
        for kh in range(3):
            for kw in range(3):
                t = pad_ref[:, kh:kh + H2, kw:kw + W2] * dw_ref[c, 3 * kh + kw]
                acc = t if acc is None else acc + t
        return acc

    def pointwise_bn_relu(dw_out, pw_ref, b_ref, co):
        # 1x1 conv as a VPU broadcast-MAC over SMEM scalars, with BN already
        # folded into pw_ref / b_ref, then ReLU.
        acc = dw_out[0] * pw_ref[0, co]
        for ci in range(1, len(dw_out)):
            acc = acc + dw_out[ci] * pw_ref[ci, co]
        return jnp.maximum(acc + b_ref[co], 0.0)

    # ---- DepthwiseSeparableConv #1 (Cin -> Cout) ----
    dw1_out = [depthwise3x3(x_ref[:, c], dw1_ref, c) for c in range(Cin)]
    h1 = [pointwise_bn_relu(dw1_out, pw1_ref, b1_ref, co) for co in range(Cout)]

    # ---- DepthwiseSeparableConv #2 (Cout -> Cout) ----
    dw2_out = [depthwise3x3(h1[c], dw2_ref, c) for c in range(Cout)]
    for co in range(Cout):
        o_ref[:, co] = pointwise_bn_relu(dw2_out, pw2_ref, b2_ref, co)


def down_forward(x_nchw, p, *, block_n=1):
    """Down.forward for NCHW input, using the fused Pallas kernel."""
    N, Cin, H, W = x_nchw.shape
    H2, W2 = H // 2, W // 2
    Cout = p["pw1_w"].shape[1]
    assert N % block_n == 0

    if (H % 2) or (W % 2):          # MaxPool2d(2) floors odd trailing rows/cols
        x_nchw = x_nchw[:, :, :2 * H2, :2 * W2]

    # MaxPool2d(2): single reduce over a zero-copy 6-D view (no transposes).
    x_pooled = jnp.max(x_nchw.reshape(N, Cin, H2, 2, W2, 2), axis=(3, 5))

    # Fold depthwise bias + eval-mode BN into the pointwise weights / bias:
    #   relu(((dwconv(x)+dw_b) @ pw + pw_b) * s + o)
    # = relu( dwconv(x) @ (pw*s) + ((dw_b @ pw + pw_b)*s + o) )
    def fold(dw_b, pw_w, pw_b, gamma, beta, mean, var):
        s = gamma / jnp.sqrt(var + EPS)
        o = beta - mean * s
        return pw_w * s[None, :], (dw_b @ pw_w + pw_b) * s + o

    pw1_f, b1_f = fold(p["dw1_b"], p["pw1_w"], p["pw1_b"],
                       p["bn1_gamma"], p["bn1_beta"], p["bn1_mean"], p["bn1_var"])
    pw2_f, b2_f = fold(p["dw2_b"], p["pw2_w"], p["pw2_b"],
                       p["bn2_gamma"], p["bn2_beta"], p["bn2_mean"], p["bn2_var"])

    # depthwise weights (3,3,C) -> (C,9) scalar tables for SMEM indexing
    dw1_t = jnp.transpose(p["dw1_w"], (2, 0, 1)).reshape(Cin, 9)
    dw2_t = jnp.transpose(p["dw2_w"], (2, 0, 1)).reshape(Cout, 9)

    smem = pl.BlockSpec(memory_space=pltpu.MemorySpace.SMEM)

    return pl.pallas_call(
        down_kernel,
        out_shape=jax.ShapeDtypeStruct((N, Cout, H2, W2), jnp.float32),
        grid=(N // block_n,),
        in_specs=[
            pl.BlockSpec((block_n, Cin, H2, W2), lambda n: (n, 0, 0, 0)),
            smem, smem, smem,          # dw1 (C,9), pw1 folded, b1 folded
            smem, smem, smem,          # dw2 (C,9), pw2 folded, b2 folded
        ],
        out_specs=pl.BlockSpec((block_n, Cout, H2, W2), lambda n: (n, 0, 0, 0)),
        scratch_shapes=[pltpu.VMEM((block_n, H2 + 2, W2 + 2), jnp.float32)],
        compiler_params=pltpu.CompilerParams(
            dimension_semantics=("parallel",)),
    )(x_pooled, dw1_t, pw1_f, b1_f, dw2_t, pw2_f, b2_f)


def down_reference(x, p):
    """Pure-JAX reference (lax convs), NCHW, eval-mode BN."""
    y = lax.reduce_window(x, -jnp.inf, lax.max,
                          (1, 1, 2, 2), (1, 1, 2, 2), "VALID")

    def ds(y, dw_w, dw_b, pw_w, pw_b, gamma, beta, mean, var):
        C = y.shape[1]
        w_dw = jnp.transpose(dw_w, (2, 0, 1))[:, None, :, :]      # (C,1,3,3)
        y = lax.conv_general_dilated(
            y, w_dw, (1, 1), ((1, 1), (1, 1)),
            dimension_numbers=("NCHW", "OIHW", "NCHW"),
            feature_group_count=C)
        y = y + dw_b[None, :, None, None]
        w_pw = jnp.transpose(pw_w, (1, 0))[:, :, None, None]      # (Co,Ci,1,1)
        y = lax.conv_general_dilated(
            y, w_pw, (1, 1), ((0, 0), (0, 0)),
            dimension_numbers=("NCHW", "OIHW", "NCHW"))
        y = y + pw_b[None, :, None, None]
        y = ((y - mean[None, :, None, None])
             / jnp.sqrt(var[None, :, None, None] + EPS)
             * gamma[None, :, None, None] + beta[None, :, None, None])
        return jnp.maximum(y, 0.0)

    y = ds(y, p["dw1_w"], p["dw1_b"], p["pw1_w"], p["pw1_b"],
           p["bn1_gamma"], p["bn1_beta"], p["bn1_mean"], p["bn1_var"])
    y = ds(y, p["dw2_w"], p["dw2_b"], p["pw2_w"], p["pw2_b"],
           p["bn2_gamma"], p["bn2_beta"], p["bn2_mean"], p["bn2_var"])
    return y


def make_params(key, c_in, c_out):
    ks = jax.random.split(key, 16)
    f32 = jnp.float32
    return {
        # DepthwiseSeparableConv #1 (c_in -> c_out)
        "dw1_w": jax.random.normal(ks[0], (3, 3, c_in), f32) * 0.3,   # (kh,kw,C)
        "dw1_b": jax.random.normal(ks[1], (c_in,), f32) * 0.1,
        "pw1_w": jax.random.normal(ks[2], (c_in, c_out), f32) * 0.3,  # (Ci,Co)
        "pw1_b": jax.random.normal(ks[3], (c_out,), f32) * 0.1,
        "bn1_gamma": 1.0 + 0.1 * jax.random.normal(ks[4], (c_out,), f32),
        "bn1_beta": 0.1 * jax.random.normal(ks[5], (c_out,), f32),
        "bn1_mean": 0.1 * jax.random.normal(ks[6], (c_out,), f32),
        "bn1_var": jax.random.uniform(ks[7], (c_out,), f32, 0.5, 1.5),
        # DepthwiseSeparableConv #2 (c_out -> c_out)
        "dw2_w": jax.random.normal(ks[8], (3, 3, c_out), f32) * 0.3,
        "dw2_b": jax.random.normal(ks[9], (c_out,), f32) * 0.1,
        "pw2_w": jax.random.normal(ks[10], (c_out, c_out), f32) * 0.3,
        "pw2_b": jax.random.normal(ks[11], (c_out,), f32) * 0.1,
        "bn2_gamma": 1.0 + 0.1 * jax.random.normal(ks[12], (c_out,), f32),
        "bn2_beta": 0.1 * jax.random.normal(ks[13], (c_out,), f32),
        "bn2_mean": 0.1 * jax.random.normal(ks[14], (c_out,), f32),
        "bn2_var": jax.random.uniform(ks[15], (c_out,), f32, 0.5, 1.5),
    }


if __name__ == "__main__":
    key = jax.random.PRNGKey(0)
    k_x, k_p = jax.random.split(key)

    N, C_IN, C_OUT, H, W = 2, 4, 8, 16, 16
    x = jax.random.normal(k_x, (N, C_IN, H, W), jnp.float32)
    params = make_params(k_p, C_IN, C_OUT)

    run = jax.jit(functools.partial(down_forward, p=params))
    out = jax.block_until_ready(run(x))

    ref = jax.block_until_ready(down_reference(x, params))

    assert out.shape == (N, C_OUT, H // 2, W // 2), out.shape
    assert jnp.allclose(out, ref, atol=1e-4, rtol=1e-4), \
        f"max abs err {jnp.max(jnp.abs(out - ref))}"
    print("KERNEL_OK")
</pallas_src>

<mosaic_0001>
module attributes {stable_mosaic.version = 11 : i64} {
  func.func @down_kernel(%arg0: i32, %arg1: memref<1x4x8x8xf32, #tpu.memory_space<vmem>>, %arg2: memref<4x9xf32, #tpu.memory_space<smem>>, %arg3: memref<4x8xf32, #tpu.memory_space<smem>>, %arg4: memref<8xf32, #tpu.memory_space<smem>>, %arg5: memref<8x9xf32, #tpu.memory_space<smem>>, %arg6: memref<8x8xf32, #tpu.memory_space<smem>>, %arg7: memref<8xf32, #tpu.memory_space<smem>>, %arg8: memref<1x8x8x8xf32, #tpu.memory_space<vmem>>, %arg9: memref<1x10x10xf32, #tpu.memory_space<vmem>>) attributes {dimension_semantics = [#tpu.dimension_semantics<parallel>], iteration_bounds = array<i64: 2>, scalar_prefetch = 0 : i64, scratch_operands = 1 : i64, tpu.core_type = #tpu.core_type<tc>, window_params = [{transform_indices = @transform_0, window_bounds = array<i64: 1, 4, 8, 8>}, {transform_indices = @transform_1, window_bounds = array<i64: 4, 9>}, {transform_indices = @transform_2, window_bounds = array<i64: 4, 8>}, {transform_indices = @transform_3, window_bounds = array<i64: 8>}, {transform_indices = @transform_4, window_bounds = array<i64: 8, 9>}, {transform_indices = @transform_5, window_bounds = array<i64: 8, 8>}, {transform_indices = @transform_6, window_bounds = array<i64: 8>}, {transform_indices = @transform_7, window_bounds = array<i64: 1, 8, 8, 8>}]} {
    %cst = arith.constant 0.000000e+00 : f32
    %0 = vector.broadcast %cst : f32 to vector<1x1x10xf32>
    %cst_0 = arith.constant 0.000000e+00 : f32
    %1 = vector.broadcast %cst_0 : f32 to vector<1x10x1xf32>
    %c0 = arith.constant 0 : index
    %c0_1 = arith.constant 0 : index
    %c0_2 = arith.constant 0 : index
    %2 = vector.load %arg9[%c0, %c0_1, %c0_2] : memref<1x10x10xf32, #tpu.memory_space<vmem>>, vector<1x1x10xf32>
    tpu.vector_store %arg9[%c0, %c0_1, %c0_2], %0 {strides = array<i32>} : memref<1x10x10xf32, #tpu.memory_space<vmem>>, vector<1x1x10xf32>,
    %c0_3 = arith.constant 0 : index
    %c9 = arith.constant 9 : index
    %c0_4 = arith.constant 0 : index
    %3 = vector.load %arg9[%c0_3, %c9, %c0_4] : memref<1x10x10xf32, #tpu.memory_space<vmem>>, vector<1x1x10xf32>
    tpu.vector_store %arg9[%c0_3, %c9, %c0_4], %0 {strides = array<i32>} : memref<1x10x10xf32, #tpu.memory_space<vmem>>, vector<1x1x10xf32>,
    %c0_5 = arith.constant 0 : index
    %c0_6 = arith.constant 0 : index
    %c0_7 = arith.constant 0 : index
    %4 = vector.load %arg9[%c0_5, %c0_6, %c0_7] : memref<1x10x10xf32, #tpu.memory_space<vmem>>, vector<1x10x1xf32>
    tpu.vector_store %arg9[%c0_5, %c0_6, %c0_7], %1 {strides = array<i32>} : memref<1x10x10xf32, #tpu.memory_space<vmem>>, vector<1x10x1xf32>,
    %c0_8 = arith.constant 0 : index
    %c0_9 = arith.constant 0 : index
    %c9_10 = arith.constant 9 : index
    %5 = vector.load %arg9[%c0_8, %c0_9, %c9_10] : memref<1x10x10xf32, #tpu.memory_space<vmem>>, vector<1x10x1xf32>
    tpu.vector_store %arg9[%c0_8, %c0_9, %c9_10], %1 {strides = array<i32>} : memref<1x10x10xf32, #tpu.memory_space<vmem>>, vector<1x10x1xf32>,
    %c0_11 = arith.constant 0 : index
    %c0_12 = arith.constant 0 : index
    %c0_13 = arith.constant 0 : index
    %c0_14 = arith.constant 0 : index
    %6 = vector.load %arg1[%c0_11, %c0_12, %c0_13, %c0_14] : memref<1x4x8x8xf32, #tpu.memory_space<vmem>>, vector<1x1x8x8xf32>
    %7 = vector.shape_cast %6 : vector<1x1x8x8xf32> to vector<1x8x8xf32>
    %c0_15 = arith.constant 0 : index
    %c1 = arith.constant 1 : index
    %c1_16 = arith.constant 1 : index
    %8 = vector.load %arg9[%c0_15, %c1, %c1_16] : memref<1x10x10xf32, #tpu.memory_space<vmem>>, vector<1x8x8xf32>
    tpu.vector_store %arg9[%c0_15, %c1, %c1_16], %7 {strides = array<i32>} : memref<1x10x10xf32, #tpu.memory_space<vmem>>, vector<1x8x8xf32>,
    %c0_17 = arith.constant 0 : index
    %c0_18 = arith.constant 0 : index
    %c0_19 = arith.constant 0 : index
    %9 = vector.load %arg9[%c0_17, %c0_18, %c0_19] : memref<1x10x10xf32, #tpu.memory_space<vmem>>, vector<1x8x8xf32>
    %c0_20 = arith.constant 0 : index
    %c0_21 = arith.constant 0 : index
    %10 = memref.load %arg2[%c0_20, %c0_21] : memref<4x9xf32, #tpu.memory_space<smem>>
    %11 = vector.broadcast %10 : f32 to vector<1x8x8xf32>
    %12 = arith.mulf %9, %11 : vector<1x8x8xf32>
    %c0_22 = arith.constant 0 : index
    %c0_23 = arith.constant 0 : index
    %c1_24 = arith.constant 1 : index
    %13 = vector.load %arg9[%c0_22, %c0_23, %c1_24] : memref<1x10x10xf32, #tpu.memory_space<vmem>>, vector<1x8x8xf32>
    %c0_25 = arith.constant 0 : index
    %c1_26 = arith.constant 1 : index
    %14 = memref.load %arg2[%c0_25, %c1_26] : memref<4x9xf32, #tpu.memory_space<smem>>
    %15 = vector.broadcast %14 : f32 to vector<1x8x8xf32>
    %16 = arith.mulf %13, %15 : vector<1x8x8xf32>
    %17 = arith.addf %12, %16 : vector<1x8x8xf32>
    %c0_27 = arith.constant 0 : index
    %c0_28 = arith.constant 0 : index
    %c2 = arith.constant 2 : index
    %18 = vector.load %arg9[%c0_27, %c0_28, %c2] : memref<1x10x10xf32, #tpu.memory_space<vmem>>, vector<1x8x8xf32>
    %c0_29 = arith.constant 0 : index
    %c2_30 = arith.constant 2 : index
    %19 = memref.load %arg2[%c0_29, %c2_30] : memref<4x9xf32, #tpu.memory_space<smem>>
    %20 = vector.broadcast %19 : f32 to vector<1x8x8xf32>
    %21 = arith.mulf %18, %20 : vector<1x8x8xf32>
    %22 = arith.addf %17, %21 : vector<1x8x8xf32>
    %c0_31 = arith.constant 0 : index
    %c1_32 = arith.constant 1 : index
    %c0_33 = arith.constant 0 : index
    %23 = vector.load %arg9[%c0_31, %c1_32, %c0_33] : memref<1x10x10xf32, #tpu.memory_space<vmem>>, vector<1x8x8xf32>
    %c0_34 = arith.constant 0 : index
    %c3 = arith.constant 3 : index
    %24 = memref.load %arg2[%c0_34, %c3] : memref<4x9xf32, #tpu.memory_space<smem>>
    %25 = vector.broadcast %24 : f32 to vector<1x8x8xf32>
    %26 = arith.mulf %23, %25 : vector<1x8x8xf32>
    %27 = arith.addf %22, %26 : vector<1x8x8xf32>
    %c0_35 = arith.constant 0 : index
    %c1_36 = arith.constant 1 : index
    %c1_37 = arith.constant 1 : index
    %28 = vector.load %arg9[%c0_35, %c1_36, %c1_37] : memref<1x10x10xf32, #tpu.memory_space<vmem>>, vector<1x8x8xf32>
    %c0_38 = arith.constant 0 : index
    %c4 = arith.constant 4 : index
    %29 = memref.load %arg2[%c0_38, %c4] : memref<4x9xf32, #tpu.memory_space<smem>>
    %30 = vector.broadcast %29 : f32 to vector<1x8x8xf32>
    %31 = arith.mulf %28, %30 : vector<1x8x8xf32>
    %32 = arith.addf %27, %31 : vector<1x8x8xf32>
    %c0_39 = arith.constant 0 : index
    %c1_40 = arith.constant 1 : index
    %c2_41 = arith.constant 2 : index
    %33 = vector.load %arg9[%c0_39, %c1_40, %c2_41] : memref<1x10x10xf32, #tpu.memory_space<vmem>>, vector<1x8x8xf32>
    %c0_42 = arith.constant 0 : index
    %c5 = arith.constant 5 : index
    %34 = memref.load %arg2[%c0_42, %c5] : memref<4x9xf32, #tpu.memory_space<smem>>
    %35 = vector.broadcast %34 : f32 to vector<1x8x8xf32>
    %36 = arith.mulf %33, %35 : vector<1x8x8xf32>
    %37 = arith.addf %32, %36 : vector<1x8x8xf32>
    %c0_43 = arith.constant 0 : index
    %c2_44 = arith.constant 2 : index
    %c0_45 = arith.constant 0 : index
    %38 = vector.load %arg9[%c0_43, %c2_44, %c0_45] : memref<1x10x10xf32, #tpu.memory_space<vmem>>, vector<1x8x8xf32>
    %c0_46 = arith.constant 0 : index
    %c6 = arith.constant 6 : index
    %39 = memref.load %arg2[%c0_46, %c6] : memref<4x9xf32, #tpu.memory_space<smem>>
    %40 = vector.broadcast %39 : f32 to vector<1x8x8xf32>
    %41 = arith.mulf %38, %40 : vector<1x8x8xf32>
    %42 = arith.addf %37, %41 : vector<1x8x8xf32>
    %c0_47 = arith.constant 0 : index
    %c2_48 = arith.constant 2 : index
    %c1_49 = arith.constant 1 : index
    %43 = vector.load %arg9[%c0_47, %c2_48, %c1_49] : memref<1x10x10xf32, #tpu.memory_space<vmem>>, vector<1x8x8xf32>
    %c0_50 = arith.constant 0 : index
    %c7 = arith.constant 7 : index
    %44 = memref.load %arg2[%c0_50, %c7] : memref<4x9xf32, #tpu.memory_space<smem>>
    %45 = vector.broadcast %44 : f32 to vector<1x8x8xf32>
    %46 = arith.mulf %43, %45 : vector<1x8x8xf32>
    %47 = arith.addf %42, %46 : vector<1x8x8xf32>
    %c0_51 = arith.constant 0 : index
    %c2_52 = arith.constant 2 : index
    %c2_53 = arith.constant 2 : index
    %48 = vector.load %arg9[%c0_51, %c2_52, %c2_53] : memref<1x10x10xf32, #tpu.memory_space<vmem>>, vector<1x8x8xf32>
    %c0_54 = arith.constant 0 : index
    %c8 = arith.constant 8 : index
    %49 = memref.load %arg2[%c0_54, %c8] : memref<4x9xf32, #tpu.memory_space<smem>>
    %50 = vector.broadcast %49 : f32 to vector<1x8x8xf32>
    %51 = arith.mulf %48, %50 : vector<1x8x8xf32>
    %52 = arith.addf %47, %51 : vector<1x8x8xf32>
    %c0_55 = arith.constant 0 : index
    %c1_56 = arith.constant 1 : index
    %c0_57 = arith.constant 0 : index
    %c0_58 = arith.constant 0 : index
    %53 = vector.load %arg1[%c0_55, %c1_56, %c0_57, %c0_58] : memref<1x4x8x8xf32, #tpu.memory_space<vmem>>, vector<1x1x8x8xf32>
    %54 = vector.shape_cast %53 : vector<1x1x8x8xf32> to vector<1x8x8xf32>
    %c0_59 = arith.constant 0 : index
    %c1_60 = arith.constant 1 : index
    %c1_61 = arith.constant 1 : index
    %55 = vector.load %arg9[%c0_59, %c1_60, %c1_61] : memref<1x10x10xf32, #tpu.memory_space<vmem>>, vector<1x8x8xf32>
    tpu.vector_store %arg9[%c0_59, %c1_60, %c1_61], %54 {strides = array<i32>} : memref<1x10x10xf32, #tpu.memory_space<vmem>>, vector<1x8x8xf32>,
    %c0_62 = arith.constant 0 : index
    %c0_63 = arith.constant 0 : index
    %c0_64 = arith.constant 0 : index
    %56 = vector.load %arg9[%c0_62, %c0_63, %c0_64] : memref<1x10x10xf32, #tpu.memory_space<vmem>>, vector<1x8x8xf32>
    %c1_65 = arith.constant 1 : index
    %c0_66 = arith.constant 0 : index
    %57 = memref.load %arg2[%c1_65, %c0_66] : memref<4x9xf32, #tpu.memory_space<smem>>
    %58 = vector.broadcast %57 : f32 to vector<1x8x8xf32>
    %59 = arith.mulf %56, %58 : vector<1x8x8xf32>
    %c0_67 = arith.constant 0 : index
    %c0_68 = arith.constant 0 : index
    %c1_69 = arith.constant 1 : index
    %60 = vector.load %arg9[%c0_67, %c0_68, %c1_69] : memref<1x10x10xf32, #tpu.memory_space<vmem>>, vector<1x8x8xf32>
    %c1_70 = arith.constant 1 : index
    %c1_71 = arith.constant 1 : index
    %61 = memref.load %arg2[%c1_70, %c1_71] : memref<4x9xf32, #tpu.memory_space<smem>>
    %62 = vector.broadcast %61 : f32 to vector<1x8x8xf32>
    %63 = arith.mulf %60, %62 : vector<1x8x8xf32>
    %64 = arith.addf %59, %63 : vector<1x8x8xf32>
    %c0_72 = arith.constant 0 : index
    %c0_73 = arith.constant 0 : index
    %c2_74 = arith.constant 2 : index
    %65 = vector.load %arg9[%c0_72, %c0_73, %c2_74] : memref<1x10x10xf32, #tpu.memory_space<vmem>>, vector<1x8x8xf32>
    %c1_75 = arith.constant 1 : index
    %c2_76 = arith.constant 2 : index
    %66 = memref.load %arg2[%c1_75, %c2_76] : memref<4x9xf32, #tpu.memory_space<smem>>
    %67 = vector.broadcast %66 : f32 to vector<1x8x8xf32>
    %68 = arith.mulf %65, %67 : vector<1x8x8xf32>
    %69 = arith.addf %64, %68 : vector<1x8x8xf32>
    %c0_77 = arith.constant 0 : index
    %c1_78 = arith.constant 1 : index
    %c0_79 = arith.constant 0 : index
    %70 = vector.load %arg9[%c0_77, %c1_78, %c0_79] : memref<1x10x10xf32, #tpu.memory_space<vmem>>, vector<1x8x8xf32>
    %c1_80 = arith.constant 1 : index
    %c3_81 = arith.constant 3 : index
    %71 = memref.load %arg2[%c1_80, %c3_81] : memref<4x9xf32, #tpu.memory_space<smem>>
    %72 = vector.broadcast %71 : f32 to vector<1x8x8xf32>
    %73 = arith.mulf %70, %72 : vector<1x8x8xf32>
    %74 = arith.addf %69, %73 : vector<1x8x8xf32>
    %c0_82 = arith.constant 0 : index
    %c1_83 = arith.constant 1 : index
    %c1_84 = arith.constant 1 : index
    %75 = vector.load %arg9[%c0_82, %c1_83, %c1_84] : memref<1x10x10xf32, #tpu.memory_space<vmem>>, vector<1x8x8xf32>
    %c1_85 = arith.constant 1 : index
    %c4_86 = arith.constant 4 : index
    %76 = memref.load %arg2[%c1_85, %c4_86] : memref<4x9xf32, #tpu.memory_space<smem>>
    %77 = vector.broadcast %76 : f32 to vector<1x8x8xf32>
    %78 = arith.mulf %75, %77 : vector<1x8x8xf32>
    %79 = arith.addf %74, %78 : vector<1x8x8xf32>
    %c0_87 = arith.constant 0 : index
    %c1_88 = arith.constant 1 : index
    %c2_89 = arith.constant 2 : index
    %80 = vector.load %arg9[%c0_87, %c1_88, %c2_89] : memref<1x10x10xf32, #tpu.memory_space<vmem>>, vector<1x8x8xf32>
    %c1_90 = arith.constant 1 : index
    %c5_91 = arith.constant 5 : index
    %81 = memref.load %arg2[%c1_90, %c5_91] : memref<4x9xf32, #tpu.memory_space<smem>>
    %82 = vector.broadcast %81 : f32 to vector<1x8x8xf32>
    %83 = arith.mulf %80, %82 : vector<1x8x8xf32>
    %84 = arith.addf %79, %83 : vector<1x8x8xf32>
    %c0_92 = arith.constant 0 : index
    %c2_93 = arith.constant 2 : index
    %c0_94 = arith.constant 0 : index
    %85 = vector.load %arg9[%c0_92, %c2_93, %c0_94] : memref<1x10x10xf32, #tpu.memory_space<vmem>>, vector<1x8x8xf32>
    %c1_95 = arith.constant 1 : index
    %c6_96 = arith.constant 6 : index
    %86 = memref.load %arg2[%c1_95, %c6_96] : memref<4x9xf32, #tpu.memory_space<smem>>
    %87 = vector.broadcast %86 : f32 to vector<1x8x8xf32>
    %88 = arith.mulf %85, %87 : vector<1x8x8xf32>
    %89 = arith.addf %84, %88 : vector<1x8x8xf32>
    %c0_97 = arith.constant 0 : index
    %c2_98 = arith.constant 2 : index
    %c1_99 = arith.constant 1 : index
    %90 = vector.load %arg9[%c0_97, %c2_98, %c1_99] : memref<1x10x10xf32, #tpu.memory_space<vmem>>, vector<1x8x8xf32>
    %c1_100 = arith.constant 1 : index
    %c7_101 = arith.constant 7 : index
    %91 = memref.load %arg2[%c1_100, %c7_101] : memref<4x9xf32, #tpu.memory_space<smem>>
    %92 = vector.broadcast %91 : f32 to vector<1x8x8xf32>
    %93 = arith.mulf %90, %92 : vector<1x8x8xf32>
    %94 = arith.addf %89, %93 : vector<1x8x8xf32>
    %c0_102 = arith.constant 0 : index
    %c2_103 = arith.constant 2 : index
    %c2_104 = arith.constant 2 : index
    %95 = vector.load %arg9[%c0_102, %c2_103, %c2_104] : memref<1x10x10xf32, #tpu.memory_space<vmem>>, vector<1x8x8xf32>
    %c1_105 = arith.constant 1 : index
    %c8_106 = arith.constant 8 : index
    %96 = memref.load %arg2[%c1_105, %c8_106] : memref<4x9xf32, #tpu.memory_space<smem>>
    %97 = vector.broadcast %96 : f32 to vector<1x8x8xf32>
    %98 = arith.mulf %95, %97 : vector<1x8x8xf32>
    %99 = arith.addf %94, %98 : vector<1x8x8xf32>
    %c0_107 = arith.constant 0 : index
    %c2_108 = arith.constant 2 : index
    %c0_109 = arith.constant 0 : index
    %c0_110 = arith.constant 0 : index
    %100 = vector.load %arg1[%c0_107, %c2_108, %c0_109, %c0_110] : memref<1x4x8x8xf32, #tpu.memory_space<vmem>>, vector<1x1x8x8xf32>
    %101 = vector.shape_cast %100 : vector<1x1x8x8xf32> to vector<1x8x8xf32>
    %c0_111 = arith.constant 0 : index
    %c1_112 = arith.constant 1 : index
    %c1_113 = arith.constant 1 : index
    %102 = vector.load %arg9[%c0_111, %c1_112, %c1_113] : memref<1x10x10xf32, #tpu.memory_space<vmem>>, vector<1x8x8xf32>
    tpu.vector_store %arg9[%c0_111, %c1_112, %c1_113], %101 {strides = array<i32>} : memref<1x10x10xf32, #tpu.memory_space<vmem>>, vector<1x8x8xf32>,
    %c0_114 = arith.constant 0 : index
    %c0_115 = arith.constant 0 : index
    %c0_116 = arith.constant 0 : index
    %103 = vector.load %arg9[%c0_114, %c0_115, %c0_116] : memref<1x10x10xf32, #tpu.memory_space<vmem>>, vector<1x8x8xf32>
    %c2_117 = arith.constant 2 : index
    %c0_118 = arith.constant 0 : index
    %104 = memref.load %arg2[%c2_117, %c0_118] : memref<4x9xf32, #tpu.memory_space<smem>>
    %105 = vector.broadcast %104 : f32 to vector<1x8x8xf32>
    %106 = arith.mulf %103, %105 : vector<1x8x8xf32>
    %c0_119 = arith.constant 0 : index
    %c0_120 = arith.constant 0 : index
    %c1_121 = arith.constant 1 : index
    %107 = vector.load %arg9[%c0_119, %c0_120, %c1_121] : memref<1x10x10xf32, #tpu.memory_space<vmem>>, vector<1x8x8xf32>
    %c2_122 = arith.constant 2 : index
    %c1_123 = arith.constant 1 : index
    %108 = memref.load %arg2[%c2_122, %c1_123] : memref<4x9xf32, #tpu.memory_space<smem>>
    %109 = vector.broadcast %108 : f32 to vector<1x8x8xf32>
    %110 = arith.mulf %107, %109 : vector<1x8x8xf32>
    %111 = arith.addf %106, %110 : vector<1x8x8xf32>
    %c0_124 = arith.constant 0 : index
    %c0_125 = arith.constant 0 : index
    %c2_126 = arith.constant 2 : index
    %112 = vector.load %arg9[%c0_124, %c0_125, %c2_126] : memref<1x10x10xf32, #tpu.memory_space<vmem>>, vector<1x8x8xf32>
    %c2_127 = arith.constant 2 : index
    %c2_128 = arith.constant 2 : index
    %113 = memref.load %arg2[%c2_127, %c2_128] : memref<4x9xf32, #tpu.memory_space<smem>>
    %114 = vector.broadcast %113 : f32 to vector<1x8x8xf32>
    %115 = arith.mulf %112, %114 : vector<1x8x8xf32>
    %116 = arith.addf %111, %115 : vector<1x8x8xf32>
    %c0_129 = arith.constant 0 : index
    %c1_130 = arith.constant 1 : index
    %c0_131 = arith.constant 0 : index
    %117 = vector.load %arg9[%c0_129, %c1_130, %c0_131] : memref<1x10x10xf32, #tpu.memory_space<vmem>>, vector<1x8x8xf32>
    %c2_132 = arith.constant 2 : index
    %c3_133 = arith.constant 3 : index
    %118 = memref.load %arg2[%c2_132, %c3_133] : memref<4x9xf32, #tpu.memory_space<smem>>
    %119 = vector.broadcast %118 : f32 to vector<1x8x8xf32>
    %120 = arith.mulf %117, %119 : vector<1x8x8xf32>
    %121 = arith.addf %116, %120 : vector<1x8x8xf32>
    %c0_134 = arith.constant 0 : index
    %c1_135 = arith.constant 1 : index
    %c1_136 = arith.constant 1 : index
    %122 = vector.load %arg9[%c0_134, %c1_135, %c1_136] : memref<1x10x10xf32, #tpu.memory_space<vmem>>, vector<1x8x8xf32>
    %c2_137 = arith.constant 2 : index
    %c4_138 = arith.constant 4 : index
    %123 = memref.load %arg2[%c2_137, %c4_138] : memref<4x9xf32, #tpu.memory_space<smem>>
    %124 = vector.broadcast %123 : f32 to vector<1x8x8xf32>
    %125 = arith.mulf %122, %124 : vector<1x8x8xf32>
    %126 = arith.addf %121, %125 : vector<1x8x8xf32>
    %c0_139 = arith.constant 0 : index
    %c1_140 = arith.constant 1 : index
    %c2_141 = arith.constant 2 : index
    %127 = vector.load %arg9[%c0_139, %c1_140, %c2_141] : memref<1x10x10xf32, #tpu.memory_space<vmem>>, vector<1x8x8xf32>
    %c2_142 = arith.constant 2 : index
    %c5_143 = arith.constant 5 : index
    %128 = memref.load %arg2[%c2_142, %c5_143] : memref<4x9xf32, #tpu.memory_space<smem>>
    %129 = vector.broadcast %128 : f32 to vector<1x8x8xf32>
    %130 = arith.mulf %127, %129 : vector<1x8x8xf32>
    %131 = arith.addf %126, %130 : vector<1x8x8xf32>
    %c0_144 = arith.constant 0 : index
    %c2_145 = arith.constant 2 : index
    %c0_146 = arith.constant 0 : index
    %132 = vector.load %arg9[%c0_144, %c2_145, %c0_146] : memref<1x10x10xf32, #tpu.memory_space<vmem>>, vector<1x8x8xf32>
    %c2_147 = arith.constant 2 : index
    %c6_148 = arith.constant 6 : index
    %133 = memref.load %arg2[%c2_147, %c6_148] : memref<4x9xf32, #tpu.memory_space<smem>>
    %134 = vector.broadcast %133 : f32 to vector<1x8x8xf32>
    %135 = arith.mulf %132, %134 : vector<1x8x8xf32>
    %136 = arith.addf %131, %135 : vector<1x8x8xf32>
    %c0_149 = arith.constant 0 : index
    %c2_150 = arith.constant 2 : index
    %c1_151 = arith.constant 1 : index
    %137 = vector.load %arg9[%c0_149, %c2_150, %c1_151] : memref<1x10x10xf32, #tpu.memory_space<vmem>>, vector<1x8x8xf32>
    %c2_152 = arith.constant 2 : index
    %c7_153 = arith.constant 7 : index
    %138 = memref.load %arg2[%c2_152, %c7_153] : memref<4x9xf32, #tpu.memory_space<smem>>
    %139 = vector.broadcast %138 : f32 to vector<1x8x8xf32>
    %140 = arith.mulf %137, %139 : vector<1x8x8xf32>
    %141 = arith.addf %136, %140 : vector<1x8x8xf32>
    %c0_154 = arith.constant 0 : index
    %c2_155 = arith.constant 2 : index
    %c2_156 = arith.constant 2 : index
    %142 = vector.load %arg9[%c0_154, %c2_155, %c2_156] : memref<1x10x10xf32, #tpu.memory_space<vmem>>, vector<1x8x8xf32>
    %c2_157 = arith.constant 2 : index
    %c8_158 = arith.constant 8 : index
    %143 = memref.load %arg2[%c2_157, %c8_158] : memref<4x9xf32, #tpu.memory_space<smem>>
    %144 = vector.broadcast %143 : f32 to vector<1x8x8xf32>
    %145 = arith.mulf %142, %144 : vector<1x8x8xf32>
    %146 = arith.addf %141, %145 : vector<1x8x8xf32>
    %c0_159 = arith.constant 0 : index
    %c3_160 = arith.constant 3 : index
    %c0_161 = arith.constant 0 : index
    %c0_162 = arith.constant 0 : index
    %147 = vector.load %arg1[%c0_159, %c3_160, %c0_161, %c0_162] : memref<1x4x8x8xf32, #tpu.memory_space<vmem>>, vector<1x1x8x8xf32>
    %148 = vector.shape_cast %147 : vector<1x1x8x8xf32> to vector<1x8x8xf32>
    %c0_163 = arith.constant 0 : index
    %c1_164 = arith.constant 1 : index
    %c1_165 = arith.constant 1 : index
    %149 = vector.load %arg9[%c0_163, %c1_164, %c1_165] : memref<1x10x10xf32, #tpu.memory_space<vmem>>, vector<1x8x8xf32>
    tpu.vector_store %arg9[%c0_163, %c1_164, %c1_165], %148 {strides = array<i32>} : memref<1x10x10xf32, #tpu.memory_space<vmem>>, vector<1x8x8xf32>,
    %c0_166 = arith.constant 0 : index
    %c0_167 = arith.constant 0 : index
    %c0_168 = arith.constant 0 : index
    %150 = vector.load %arg9[%c0_166, %c0_167, %c0_168] : memref<1x10x10xf32, #tpu.memory_space<vmem>>, vector<1x8x8xf32>
    %c3_169 = arith.constant 3 : index
    %c0_170 = arith.constant 0 : index
    %151 = memref.load %arg2[%c3_169, %c0_170] : memref<4x9xf32, #tpu.memory_space<smem>>
    %152 = vector.broadcast %151 : f32 to vector<1x8x8xf32>
    %153 = arith.mulf %150, %152 : vector<1x8x8xf32>
    %c0_171 = arith.constant 0 : index
    %c0_172 = arith.constant 0 : index
    %c1_173 = arith.constant 1 : index
    %154 = vector.load %arg9[%c0_171, %c0_172, %c1_173] : memref<1x10x10xf32, #tpu.memory_space<vmem>>, vector<1x8x8xf32>
    %c3_174 = arith.constant 3 : index
    %c1_175 = arith.constant 1 : index
    %155 = memref.load %arg2[%c3_174, %c1_175] : memref<4x9xf32, #tpu.memory_space<smem>>
    %156 = vector.broadcast %155 : f32 to vector<1x8x8xf32>
    %157 = arith.mulf %154, %156 : vector<1x8x8xf32>
    %158 = arith.addf %153, %157 : vector<1x8x8xf32>
    %c0_176 = arith.constant 0 : index
    %c0_177 = arith.constant 0 : index
    %c2_178 = arith.constant 2 : index
    %159 = vector.load %arg9[%c0_176, %c0_177, %c2_178] : memref<1x10x10xf32, #tpu.memory_space<vmem>>, vector<1x8x8xf32>
    %c3_179 = arith.constant 3 : index
    %c2_180 = arith.constant 2 : index
    %160 = memref.load %arg2[%c3_179, %c2_180] : memref<4x9xf32, #tpu.memory_space<smem>>
    %161 = vector.broadcast %160 : f32 to vector<1x8x8xf32>
    %162 = arith.mulf %159, %161 : vector<1x8x8xf32>
    %163 = arith.addf %158, %162 : vector<1x8x8xf32>
    %c0_181 = arith.constant 0 : index
    %c1_182 = arith.constant 1 : index
    %c0_183 = arith.constant 0 : index
    %164 = vector.load %arg9[%c0_181, %c1_182, %c0_183] : memref<1x10x10xf32, #tpu.memory_space<vmem>>, vector<1x8x8xf32>
    %c3_184 = arith.constant 3 : index
    %c3_185 = arith.constant 3 : index
    %165 = memref.load %arg2[%c3_184, %c3_185] : memref<4x9xf32, #tpu.memory_space<smem>>
    %166 = vector.broadcast %165 : f32 to vector<1x8x8xf32>
    %167 = arith.mulf %164, %166 : vector<1x8x8xf32>
    %168 = arith.addf %163, %167 : vector<1x8x8xf32>
    %c0_186 = arith.constant 0 : index
    %c1_187 = arith.constant 1 : index
    %c1_188 = arith.constant 1 : index
    %169 = vector.load %arg9[%c0_186, %c1_187, %c1_188] : memref<1x10x10xf32, #tpu.memory_space<vmem>>, vector<1x8x8xf32>
    %c3_189 = arith.constant 3 : index
    %c4_190 = arith.constant 4 : index
    %170 = memref.load %arg2[%c3_189, %c4_190] : memref<4x9xf32, #tpu.memory_space<smem>>
    %171 = vector.broadcast %170 : f32 to vector<1x8x8xf32>
    %172 = arith.mulf %169, %171 : vector<1x8x8xf32>
    %173 = arith.addf %168, %172 : vector<1x8x8xf32>
    %c0_191 = arith.constant 0 : index
    %c1_192 = arith.constant 1 : index
    %c2_193 = arith.constant 2 : index
    %174 = vector.load %arg9[%c0_191, %c1_192, %c2_193] : memref<1x10x10xf32, #tpu.memory_space<vmem>>, vector<1x8x8xf32>
    %c3_194 = arith.constant 3 : index
    %c5_195 = arith.constant 5 : index
    %175 = memref.load %arg2[%c3_194, %c5_195] : memref<4x9xf32, #tpu.memory_space<smem>>
    %176 = vector.broadcast %175 : f32 to vector<1x8x8xf32>
    %177 = arith.mulf %174, %176 : vector<1x8x8xf32>
    %178 = arith.addf %173, %177 : vector<1x8x8xf32>
    %c0_196 = arith.constant 0 : index
    %c2_197 = arith.constant 2 : index
    %c0_198 = arith.constant 0 : index
    %179 = vector.load %arg9[%c0_196, %c2_197, %c0_198] : memref<1x10x10xf32, #tpu.memory_space<vmem>>, vector<1x8x8xf32>
    %c3_199 = arith.constant 3 : index
    %c6_200 = arith.constant 6 : index
    %180 = memref.load %arg2[%c3_199, %c6_200] : memref<4x9xf32, #tpu.memory_space<smem>>
    %181 = vector.broadcast %180 : f32 to vector<1x8x8xf32>
    %182 = arith.mulf %179, %181 : vector<1x8x8xf32>
    %183 = arith.addf %178, %182 : vector<1x8x8xf32>
    %c0_201 = arith.constant 0 : index
    %c2_202 = arith.constant 2 : index
    %c1_203 = arith.constant 1 : index
    %184 = vector.load %arg9[%c0_201, %c2_202, %c1_203] : memref<1x10x10xf32, #tpu.memory_space<vmem>>, vector<1x8x8xf32>
    %c3_204 = arith.constant 3 : index
    %c7_205 = arith.constant 7 : index
    %185 = memref.load %arg2[%c3_204, %c7_205] : memref<4x9xf32, #tpu.memory_space<smem>>
    %186 = vector.broadcast %185 : f32 to vector<1x8x8xf32>
    %187 = arith.mulf %184, %186 : vector<1x8x8xf32>
    %188 = arith.addf %183, %187 : vector<1x8x8xf32>
    %c0_206 = arith.constant 0 : index
    %c2_207 = arith.constant 2 : index
    %c2_208 = arith.constant 2 : index
    %189 = vector.load %arg9[%c0_206, %c2_207, %c2_208] : memref<1x10x10xf32, #tpu.memory_space<vmem>>, vector<1x8x8xf32>
    %c3_209 = arith.constant 3 : index
    %c8_210 = arith.constant 8 : index
    %190 = memref.load %arg2[%c3_209, %c8_210] : memref<4x9xf32, #tpu.memory_space<smem>>
    %191 = vector.broadcast %190 : f32 to vector<1x8x8xf32>
    %192 = arith.mulf %189, %191 : vector<1x8x8xf32>
    %193 = arith.addf %188, %192 : vector<1x8x8xf32>
    %c0_211 = arith.constant 0 : index
    %c0_212 = arith.constant 0 : index
    %194 = memref.load %arg3[%c0_211, %c0_212] : memref<4x8xf32, #tpu.memory_space<smem>>
    %195 = vector.broadcast %194 : f32 to vector<1x8x8xf32>
    %196 = arith.mulf %52, %195 : vector<1x8x8xf32>
    %c1_213 = arith.constant 1 : index
    %c0_214 = arith.constant 0 : index
    %197 = memref.load %arg3[%c1_213, %c0_214] : memref<4x8xf32, #tpu.memory_space<smem>>
    %198 = vector.broadcast %197 : f32 to vector<1x8x8xf32>
    %199 = arith.mulf %99, %198 : vector<1x8x8xf32>
    %200 = arith.addf %196, %199 : vector<1x8x8xf32>
    %c2_215 = arith.constant 2 : index
    %c0_216 = arith.constant 0 : index
    %201 = memref.load %arg3[%c2_215, %c0_216] : memref<4x8xf32, #tpu.memory_space<smem>>
    %202 = vector.broadcast %201 : f32 to vector<1x8x8xf32>
    %203 = arith.mulf %146, %202 : vector<1x8x8xf32>
    %204 = arith.addf %200, %203 : vector<1x8x8xf32>
    %c3_217 = arith.constant 3 : index
    %c0_218 = arith.constant 0 : index
    %205 = memref.load %arg3[%c3_217, %c0_218] : memref<4x8xf32, #tpu.memory_space<smem>>
    %206 = vector.broadcast %205 : f32 to vector<1x8x8xf32>
    %207 = arith.mulf %193, %206 : vector<1x8x8xf32>
    %208 = arith.addf %204, %207 : vector<1x8x8xf32>
    %c0_219 = arith.constant 0 : index
    %209 = memref.load %arg4[%c0_219] : memref<8xf32, #tpu.memory_space<smem>>
    %210 = vector.broadcast %209 : f32 to vector<1x8x8xf32>
    %211 = arith.addf %208, %210 : vector<1x8x8xf32>
    %cst_220 = arith.constant 0.000000e+00 : f32
    %212 = vector.broadcast %cst_220 : f32 to vector<1x8x8xf32>
    %213 = arith.maximumf %211, %212 : vector<1x8x8xf32>
    %c0_221 = arith.constant 0 : index
    %c1_222 = arith.constant 1 : index
    %214 = memref.load %arg3[%c0_221, %c1_222] : memref<4x8xf32, #tpu.memory_space<smem>>
    %215 = vector.broadcast %214 : f32 to vector<1x8x8xf32>
    %216 = arith.mulf %52, %215 : vector<1x8x8xf32>
    %c1_223 = arith.constant 1 : index
    %c1_224 = arith.constant 1 : index
    %217 = memref.load %arg3[%c1_223, %c1_224] : memref<4x8xf32, #tpu.memory_space<smem>>
    %218 = vector.broadcast %217 : f32 to vector<1x8x8xf32>
    %219 = arith.mulf %99, %218 : vector<1x8x8xf32>
    %220 = arith.addf %216, %219 : vector<1x8x8xf32>
    %c2_225 = arith.constant 2 : index
    %c1_226 = arith.constant 1 : index
    %221 = memref.load %arg3[%c2_225, %c1_226] : memref<4x8xf32, #tpu.memory_space<smem>>
    %222 = vector.broadcast %221 : f32 to vector<1x8x8xf32>
    %223 = arith.mulf %146, %222 : vector<1x8x8xf32>
    %224 = arith.addf %220, %223 : vector<1x8x8xf32>
    %c3_227 = arith.constant 3 : index
    %c1_228 = arith.constant 1 : index
    %225 = memref.load %arg3[%c3_227, %c1_228] : memref<4x8xf32, #tpu.memory_space<smem>>
    %226 = vector.broadcast %225 : f32 to vector<1x8x8xf32>
    %227 = arith.mulf %193, %226 : vector<1x8x8xf32>
    %228 = arith.addf %224, %227 : vector<1x8x8xf32>
    %c1_229 = arith.constant 1 : index
    %229 = memref.load %arg4[%c1_229] : memref<8xf32, #tpu.memory_space<smem>>
    %230 = vector.broadcast %229 : f32 to vector<1x8x8xf32>
    %231 = arith.addf %228, %230 : vector<1x8x8xf32>
    %cst_230 = arith.constant 0.000000e+00 : f32
    %232 = vector.broadcast %cst_230 : f32 to vector<1x8x8xf32>
    %233 = arith.maximumf %231, %232 : vector<1x8x8xf32>
    %c0_231 = arith.constant 0 : index
    %c2_232 = arith.constant 2 : index
    %234 = memref.load %arg3[%c0_231, %c2_232] : memref<4x8xf32, #tpu.memory_space<smem>>
    %235 = vector.broadcast %234 : f32 to vector<1x8x8xf32>
    %236 = arith.mulf %52, %235 : vector<1x8x8xf32>
    %c1_233 = arith.constant 1 : index
    %c2_234 = arith.constant 2 : index
    %237 = memref.load %arg3[%c1_233, %c2_234] : memref<4x8xf32, #tpu.memory_space<smem>>
    %238 = vector.broadcast %237 : f32 to vector<1x8x8xf32>
    %239 = arith.mulf %99, %238 : vector<1x8x8xf32>
    %240 = arith.addf %236, %239 : vector<1x8x8xf32>
    %c2_235 = arith.constant 2 : index
    %c2_236 = arith.constant 2 : index
    %241 = memref.load %arg3[%c2_235, %c2_236] : memref<4x8xf32, #tpu.memory_space<smem>>
    %242 = vector.broadcast %241 : f32 to vector<1x8x8xf32>
    %243 = arith.mulf %146, %242 : vector<1x8x8xf32>
    %244 = arith.addf %240, %243 : vector<1x8x8xf32>
    %c3_237 = arith.constant 3 : index
    %c2_238 = arith.constant 2 : index
    %245 = memref.load %arg3[%c3_237, %c2_238] : memref<4x8xf32, #tpu.memory_space<smem>>
    %246 = vector.broadcast %245 : f32 to vector<1x8x8xf32>
    %247 = arith.mulf %193, %246 : vector<1x8x8xf32>
    %248 = arith.addf %244, %247 : vector<1x8x8xf32>
    %c2_239 = arith.constant 2 : index
    %249 = memref.load %arg4[%c2_239] : memref<8xf32, #tpu.memory_space<smem>>
    %250 = vector.broadcast %249 : f32 to vector<1x8x8xf32>
    %251 = arith.addf %248, %250 : vector<1x8x8xf32>
    %cst_240 = arith.constant 0.000000e+00 : f32
    %252 = vector.broadcast %cst_240 : f32 to vector<1x8x8xf32>
    %253 = arith.maximumf %251, %252 : vector<1x8x8xf32>
    %c0_241 = arith.constant 0 : index
    %c3_242 = arith.constant 3 : index
    %254 = memref.load %arg3[%c0_241, %c3_242] : memref<4x8xf32, #tpu.memory_space<smem>>
    %255 = vector.broadcast %254 : f32 to vector<1x8x8xf32>
    %256 = arith.mulf %52, %255 : vector<1x8x8xf32>
    %c1_243 = arith.constant 1 : index
    %c3_244 = arith.constant 3 : index
    %257 = memref.load %arg3[%c1_243, %c3_244] : memref<4x8xf32, #tpu.memory_space<smem>>
    %258 = vector.broadcast %257 : f32 to vector<1x8x8xf32>
    %259 = arith.mulf %99, %258 : vector<1x8x8xf32>
    %260 = arith.addf %256, %259 : vector<1x8x8xf32>
    %c2_245 = arith.constant 2 : index
    %c3_246 = arith.constant 3 : index
    %261 = memref.load %arg3[%c2_245, %c3_246] : memref<4x8xf32, #tpu.memory_space<smem>>
    %262 = vector.broadcast %261 : f32 to vector<1x8x8xf32>
    %263 = arith.mulf %146, %262 : vector<1x8x8xf32>
    %264 = arith.addf %260, %263 : vector<1x8x8xf32>
    %c3_247 = arith.constant 3 : index
    %c3_248 = arith.constant 3 : index
    %265 = memref.load %arg3[%c3_247, %c3_248] : memref<4x8xf32, #tpu.memory_space<smem>>
    %266 = vector.broadcast %265 : f32 to vector<1x8x8xf32>
    %267 = arith.mulf %193, %266 : vector<1x8x8xf32>
    %268 = arith.addf %264, %267 : vector<1x8x8xf32>
    %c3_249 = arith.constant 3 : index
    %269 = memref.load %arg4[%c3_249] : memref<8xf32, #tpu.memory_space<smem>>
    %270 = vector.broadcast %269 : f32 to vector<1x8x8xf32>
    %271 = arith.addf %268, %270 : vector<1x8x8xf32>
    %cst_250 = arith.constant 0.000000e+00 : f32
    %272 = vector.broadcast %cst_250 : f32 to vector<1x8x8xf32>
    %273 = arith.maximumf %271, %272 : vector<1x8x8xf32>
    %c0_251 = arith.constant 0 : index
    %c4_252 = arith.constant 4 : index
    %274 = memref.load %arg3[%c0_251, %c4_252] : memref<4x8xf32, #tpu.memory_space<smem>>
    %275 = vector.broadcast %274 : f32 to vector<1x8x8xf32>
    %276 = arith.mulf %52, %275 : vector<1x8x8xf32>
    %c1_253 = arith.constant 1 : index
    %c4_254 = arith.constant 4 : index
    %277 = memref.load %arg3[%c1_253, %c4_254] : memref<4x8xf32, #tpu.memory_space<smem>>
    %278 = vector.broadcast %277 : f32 to vector<1x8x8xf32>
    %279 = arith.mulf %99, %278 : vector<1x8x8xf32>
    %280 = arith.addf %276, %279 : vector<1x8x8xf32>
    %c2_255 = arith.constant 2 : index
    %c4_256 = arith.constant 4 : index
    %281 = memref.load %arg3[%c2_255, %c4_256] : memref<4x8xf32, #tpu.memory_space<smem>>
    %282 = vector.broadcast %281 : f32 to vector<1x8x8xf32>
    %283 = arith.mulf %146, %282 : vector<1x8x8xf32>
    %284 = arith.addf %280, %283 : vector<1x8x8xf32>
    %c3_257 = arith.constant 3 : index
    %c4_258 = arith.constant 4 : index
    %285 = memref.load %arg3[%c3_257, %c4_258] : memref<4x8xf32, #tpu.memory_space<smem>>
    %286 = vector.broadcast %285 : f32 to vector<1x8x8xf32>
    %287 = arith.mulf %193, %286 : vector<1x8x8xf32>
    %288 = arith.addf %284, %287 : vector<1x8x8xf32>
    %c4_259 = arith.constant 4 : index
    %289 = memref.load %arg4[%c4_259] : memref<8xf32, #tpu.memory_space<smem>>
    %290 = vector.broadcast %289 : f32 to vector<1x8x8xf32>
    %291 = arith.addf %288, %290 : vector<1x8x8xf32>
    %cst_260 = arith.constant 0.000000e+00 : f32
    %292 = vector.broadcast %cst_260 : f32 to vector<1x8x8xf32>
    %293 = arith.maximumf %291, %292 : vector<1x8x8xf32>
    %c0_261 = arith.constant 0 : index
    %c5_262 = arith.constant 5 : index
    %294 = memref.load %arg3[%c0_261, %c5_262] : memref<4x8xf32, #tpu.memory_space<smem>>
    %295 = vector.broadcast %294 : f32 to vector<1x8x8xf32>
    %296 = arith.mulf %52, %295 : vector<1x8x8xf32>
    %c1_263 = arith.constant 1 : index
    %c5_264 = arith.constant 5 : index
    %297 = memref.load %arg3[%c1_263, %c5_264] : memref<4x8xf32, #tpu.memory_space<smem>>
    %298 = vector.broadcast %297 : f32 to vector<1x8x8xf32>
    %299 = arith.mulf %99, %298 : vector<1x8x8xf32>
    %300 = arith.addf %296, %299 : vector<1x8x8xf32>
    %c2_265 = arith.constant 2 : index
    %c5_266 = arith.constant 5 : index
    %301 = memref.load %arg3[%c2_265, %c5_266] : memref<4x8xf32, #tpu.memory_space<smem>>
    %302 = vector.broadcast %301 : f32 to vector<1x8x8xf32>
    %303 = arith.mulf %146, %302 : vector<1x8x8xf32>
    %304 = arith.addf %300, %303 : vector<1x8x8xf32>
    %c3_267 = arith.constant 3 : index
    %c5_268 = arith.constant 5 : index
    %305 = memref.load %arg3[%c3_267, %c5_268] : memref<4x8xf32, #tpu.memory_space<smem>>
    %306 = vector.broadcast %305 : f32 to vector<1x8x8xf32>
    %307 = arith.mulf %193, %306 : vector<1x8x8xf32>
    %308 = arith.addf %304, %307 : vector<1x8x8xf32>
    %c5_269 = arith.constant 5 : index
    %309 = memref.load %arg4[%c5_269] : memref<8xf32, #tpu.memory_space<smem>>
    %310 = vector.broadcast %309 : f32 to vector<1x8x8xf32>
    %311 = arith.addf %308, %310 : vector<1x8x8xf32>
    %cst_270 = arith.constant 0.000000e+00 : f32
    %312 = vector.broadcast %cst_270 : f32 to vector<1x8x8xf32>
    %313 = arith.maximumf %311, %312 : vector<1x8x8xf32>
    %c0_271 = arith.constant 0 : index
    %c6_272 = arith.constant 6 : index
    %314 = memref.load %arg3[%c0_271, %c6_272] : memref<4x8xf32, #tpu.memory_space<smem>>
    %315 = vector.broadcast %314 : f32 to vector<1x8x8xf32>
    %316 = arith.mulf %52, %315 : vector<1x8x8xf32>
    %c1_273 = arith.constant 1 : index
    %c6_274 = arith.constant 6 : index
    %317 = memref.load %arg3[%c1_273, %c6_274] : memref<4x8xf32, #tpu.memory_space<smem>>
    %318 = vector.broadcast %317 : f32 to vector<1x8x8xf32>
    %319 = arith.mulf %99, %318 : vector<1x8x8xf32>
    %320 = arith.addf %316, %319 : vector<1x8x8xf32>
    %c2_275 = arith.constant 2 : index
    %c6_276 = arith.constant 6 : index
    %321 = memref.load %arg3[%c2_275, %c6_276] : memref<4x8xf32, #tpu.memory_space<smem>>
    %322 = vector.broadcast %321 : f32 to vector<1x8x8xf32>
    %323 = arith.mulf %146, %322 : vector<1x8x8xf32>
    %324 = arith.addf %320, %323 : vector<1x8x8xf32>
    %c3_277 = arith.constant 3 : index
    %c6_278 = arith.constant 6 : index
    %325 = memref.load %arg3[%c3_277, %c6_278] : memref<4x8xf32, #tpu.memory_space<smem>>
    %326 = vector.broadcast %325 : f32 to vector<1x8x8xf32>
    %327 = arith.mulf %193, %326 : vector<1x8x8xf32>
    %328 = arith.addf %324, %327 : vector<1x8x8xf32>
    %c6_279 = arith.constant 6 : index
    %329 = memref.load %arg4[%c6_279] : memref<8xf32, #tpu.memory_space<smem>>
    %330 = vector.broadcast %329 : f32 to vector<1x8x8xf32>
    %331 = arith.addf %328, %330 : vector<1x8x8xf32>
    %cst_280 = arith.constant 0.000000e+00 : f32
    %332 = vector.broadcast %cst_280 : f32 to vector<1x8x8xf32>
    %333 = arith.maximumf %331, %332 : vector<1x8x8xf32>
    %c0_281 = arith.constant 0 : index
    %c7_282 = arith.constant 7 : index
    %334 = memref.load %arg3[%c0_281, %c7_282] : memref<4x8xf32, #tpu.memory_space<smem>>
    %335 = vector.broadcast %334 : f32 to vector<1x8x8xf32>
    %336 = arith.mulf %52, %335 : vector<1x8x8xf32>
    %c1_283 = arith.constant 1 : index
    %c7_284 = arith.constant 7 : index
    %337 = memref.load %arg3[%c1_283, %c7_284] : memref<4x8xf32, #tpu.memory_space<smem>>
    %338 = vector.broadcast %337 : f32 to vector<1x8x8xf32>
    %339 = arith.mulf %99, %338 : vector<1x8x8xf32>
    %340 = arith.addf %336, %339 : vector<1x8x8xf32>
    %c2_285 = arith.constant 2 : index
    %c7_286 = arith.constant 7 : index
    %341 = memref.load %arg3[%c2_285, %c7_286] : memref<4x8xf32, #tpu.memory_space<smem>>
    %342 = vector.broadcast %341 : f32 to vector<1x8x8xf32>
    %343 = arith.mulf %146, %342 : vector<1x8x8xf32>
    %344 = arith.addf %340, %343 : vector<1x8x8xf32>
    %c3_287 = arith.constant 3 : index
    %c7_288 = arith.constant 7 : index
    %345 = memref.load %arg3[%c3_287, %c7_288] : memref<4x8xf32, #tpu.memory_space<smem>>
    %346 = vector.broadcast %345 : f32 to vector<1x8x8xf32>
    %347 = arith.mulf %193, %346 : vector<1x8x8xf32>
    %348 = arith.addf %344, %347 : vector<1x8x8xf32>
    %c7_289 = arith.constant 7 : index
    %349 = memref.load %arg4[%c7_289] : memref<8xf32, #tpu.memory_space<smem>>
    %350 = vector.broadcast %349 : f32 to vector<1x8x8xf32>
    %351 = arith.addf %348, %350 : vector<1x8x8xf32>
    %cst_290 = arith.constant 0.000000e+00 : f32
    %352 = vector.broadcast %cst_290 : f32 to vector<1x8x8xf32>
    %353 = arith.maximumf %351, %352 : vector<1x8x8xf32>
    %c0_291 = arith.constant 0 : index
    %c1_292 = arith.constant 1 : index
    %c1_293 = arith.constant 1 : index
    %354 = vector.load %arg9[%c0_291, %c1_292, %c1_293] : memref<1x10x10xf32, #tpu.memory_space<vmem>>, vector<1x8x8xf32>
    tpu.vector_store %arg9[%c0_291, %c1_292, %c1_293], %213 {strides = array<i32>} : memref<1x10x10xf32, #tpu.memory_space<vmem>>, vector<1x8x8xf32>,
    %c0_294 = arith.constant 0 : index
    %c0_295 = arith.constant 0 : index
    %c0_296 = arith.constant 0 : index
    %355 = vector.load %arg9[%c0_294, %c0_295, %c0_296] : memref<1x10x10xf32, #tpu.memory_space<vmem>>, vector<1x8x8xf32>
    %c0_297 = arith.constant 0 : index
    %c0_298 = arith.constant 0 : index
    %356 = memref.load %arg5[%c0_297, %c0_298] : memref<8x9xf32, #tpu.memory_space<smem>>
    %357 = vector.broadcast %356 : f32 to vector<1x8x8xf32>
    %358 = arith.mulf %355, %357 : vector<1x8x8xf32>
    %c0_299 = arith.constant 0 : index
    %c0_300 = arith.constant 0 : index
    %c1_301 = arith.constant 1 : index
    %359 = vector.load %arg9[%c0_299, %c0_300, %c1_301] : memref<1x10x10xf32, #tpu.memory_space<vmem>>, vector<1x8x8xf32>
    %c0_302 = arith.constant 0 : index
    %c1_303 = arith.constant 1 : index
    %360 = memref.load %arg5[%c0_302, %c1_303] : memref<8x9xf32, #tpu.memory_space<smem>>
    %361 = vector.broadcast %360 : f32 to vector<1x8x8xf32>
    %362 = arith.mulf %359, %361 : vector<1x8x8xf32>
    %363 = arith.addf %358, %362 : vector<1x8x8xf32>
    %c0_304 = arith.constant 0 : index
    %c0_305 = arith.constant 0 : index
    %c2_306 = arith.constant 2 : index
    %364 = vector.load %arg9[%c0_304, %c0_305, %c2_306] : memref<1x10x10xf32, #tpu.memory_space<vmem>>, vector<1x8x8xf32>
    %c0_307 = arith.constant 0 : index
    %c2_308 = arith.constant 2 : index
    %365 = memref.load %arg5[%c0_307, %c2_308] : memref<8x9xf32, #tpu.memory_space<smem>>
    %366 = vector.broadcast %365 : f32 to vector<1x8x8xf32>
    %367 = arith.mulf %364, %366 : vector<1x8x8xf32>
    %368 = arith.addf %363, %367 : vector<1x8x8xf32>
    %c0_309 = arith.constant 0 : index
    %c1_310 = arith.constant 1 : index
    %c0_311 = arith.constant 0 : index
    %369 = vector.load %arg9[%c0_309, %c1_310, %c0_311] : memref<1x10x10xf32, #tpu.memory_space<vmem>>, vector<1x8x8xf32>
    %c0_312 = arith.constant 0 : index
    %c3_313 = arith.constant 3 : index
    %370 = memref.load %arg5[%c0_312, %c3_313] : memref<8x9xf32, #tpu.memory_space<smem>>
    %371 = vector.broadcast %370 : f32 to vector<1x8x8xf32>
    %372 = arith.mulf %369, %371 : vector<1x8x8xf32>
    %373 = arith.addf %368, %372 : vector<1x8x8xf32>
    %c0_314 = arith.constant 0 : index
    %c1_315 = arith.constant 1 : index
    %c1_316 = arith.constant 1 : index
    %374 = vector.load %arg9[%c0_314, %c1_315, %c1_316] : memref<1x10x10xf32, #tpu.memory_space<vmem>>, vector<1x8x8xf32>
    %c0_317 = arith.constant 0 : index
    %c4_318 = arith.constant 4 : index
    %375 = memref.load %arg5[%c0_317, %c4_318] : memref<8x9xf32, #tpu.memory_space<smem>>
    %376 = vector.broadcast %375 : f32 to vector<1x8x8xf32>
    %377 = arith.mulf %374, %376 : vector<1x8x8xf32>
    %378 = arith.addf %373, %377 : vector<1x8x8xf32>
    %c0_319 = arith.constant 0 : index
    %c1_320 = arith.constant 1 : index
    %c2_321 = arith.constant 2 : index
    %379 = vector.load %arg9[%c0_319, %c1_320, %c2_321] : memref<1x10x10xf32, #tpu.memory_space<vmem>>, vector<1x8x8xf32>
    %c0_322 = arith.constant 0 : index
    %c5_323 = arith.constant 5 : index
    %380 = memref.load %arg5[%c0_322, %c5_323] : memref<8x9xf32, #tpu.memory_space<smem>>
    %381 = vector.broadcast %380 : f32 to vector<1x8x8xf32>
    %382 = arith.mulf %379, %381 : vector<1x8x8xf32>
    %383 = arith.addf %378, %382 : vector<1x8x8xf32>
    %c0_324 = arith.constant 0 : index
    %c2_325 = arith.constant 2 : index
    %c0_326 = arith.constant 0 : index
    %384 = vector.load %arg9[%c0_324, %c2_325, %c0_326] : memref<1x10x10xf32, #tpu.memory_space<vmem>>, vector<1x8x8xf32>
    %c0_327 = arith.constant 0 : index
    %c6_328 = arith.constant 6 : index
    %385 = memref.load %arg5[%c0_327, %c6_328] : memref<8x9xf32, #tpu.memory_space<smem>>
    %386 = vector.broadcast %385 : f32 to vector<1x8x8xf32>
    %387 = arith.mulf %384, %386 : vector<1x8x8xf32>
    %388 = arith.addf %383, %387 : vector<1x8x8xf32>
    %c0_329 = arith.constant 0 : index
    %c2_330 = arith.constant 2 : index
    %c1_331 = arith.constant 1 : index
    %389 = vector.load %arg9[%c0_329, %c2_330, %c1_331] : memref<1x10x10xf32, #tpu.memory_space<vmem>>, vector<1x8x8xf32>
    %c0_332 = arith.constant 0 : index
    %c7_333 = arith.constant 7 : index
    %390 = memref.load %arg5[%c0_332, %c7_333] : memref<8x9xf32, #tpu.memory_space<smem>>
    %391 = vector.broadcast %390 : f32 to vector<1x8x8xf32>
    %392 = arith.mulf %389, %391 : vector<1x8x8xf32>
    %393 = arith.addf %388, %392 : vector<1x8x8xf32>
    %c0_334 = arith.constant 0 : index
    %c2_335 = arith.constant 2 : index
    %c2_336 = arith.constant 2 : index
    %394 = vector.load %arg9[%c0_334, %c2_335, %c2_336] : memref<1x10x10xf32, #tpu.memory_space<vmem>>, vector<1x8x8xf32>
    %c0_337 = arith.constant 0 : index
    %c8_338 = arith.constant 8 : index
    %395 = memref.load %arg5[%c0_337, %c8_338] : memref<8x9xf32, #tpu.memory_space<smem>>
    %396 = vector.broadcast %395 : f32 to vector<1x8x8xf32>
    %397 = arith.mulf %394, %396 : vector<1x8x8xf32>
    %398 = arith.addf %393, %397 : vector<1x8x8xf32>
    %c0_339 = arith.constant 0 : index
    %c1_340 = arith.constant 1 : index
    %c1_341 = arith.constant 1 : index
    %399 = vector.load %arg9[%c0_339, %c1_340, %c1_341] : memref<1x10x10xf32, #tpu.memory_space<vmem>>, vector<1x8x8xf32>
    tpu.vector_store %arg9[%c0_339, %c1_340, %c1_341], %233 {strides = array<i32>} : memref<1x10x10xf32, #tpu.memory_space<vmem>>, vector<1x8x8xf32>,
    %c0_342 = arith.constant 0 : index
    %c0_343 = arith.constant 0 : index
    %c0_344 = arith.constant 0 : index
    %400 = vector.load %arg9[%c0_342, %c0_343, %c0_344] : memref<1x10x10xf32, #tpu.memory_space<vmem>>, vector<1x8x8xf32>
    %c1_345 = arith.constant 1 : index
    %c0_346 = arith.constant 0 : index
    %401 = memref.load %arg5[%c1_345, %c0_346] : memref<8x9xf32, #tpu.memory_space<smem>>
    %402 = vector.broadcast %401 : f32 to vector<1x8x8xf32>
    %403 = arith.mulf %400, %402 : vector<1x8x8xf32>
    %c0_347 = arith.constant 0 : index
    %c0_348 = arith.constant 0 : index
    %c1_349 = arith.constant 1 : index
    %404 = vector.load %arg9[%c0_347, %c0_348, %c1_349] : memref<1x10x10xf32, #tpu.memory_space<vmem>>, vector<1x8x8xf32>
    %c1_350 = arith.constant 1 : index
    %c1_351 = arith.constant 1 : index
    %405 = memref.load %arg5[%c1_350, %c1_351] : memref<8x9xf32, #tpu.memory_space<smem>>
    %406 = vector.broadcast %405 : f32 to vector<1x8x8xf32>
    %407 = arith.mulf %404, %406 : vector<1x8x8xf32>
    %408 = arith.addf %403, %407 : vector<1x8x8xf32>
    %c0_352 = arith.constant 0 : index
    %c0_353 = arith.constant 0 : index
    %c2_354 = arith.constant 2 : index
    %409 = vector.load %arg9[%c0_352, %c0_353, %c2_354] : memref<1x10x10xf32, #tpu.memory_space<vmem>>, vector<1x8x8xf32>
    %c1_355 = arith.constant 1 : index
    %c2_356 = arith.constant 2 : index
    %410 = memref.load %arg5[%c1_355, %c2_356] : memref<8x9xf32, #tpu.memory_space<smem>>
    %411 = vector.broadcast %410 : f32 to vector<1x8x8xf32>
    %412 = arith.mulf %409, %411 : vector<1x8x8xf32>
    %413 = arith.addf %408, %412 : vector<1x8x8xf32>
    %c0_357 = arith.constant 0 : index
    %c1_358 = arith.constant 1 : index
    %c0_359 = arith.constant 0 : index
    %414 = vector.load %arg9[%c0_357, %c1_358, %c0_359] : memref<1x10x10xf32, #tpu.memory_space<vmem>>, vector<1x8x8xf32>
    %c1_360 = arith.constant 1 : index
    %c3_361 = arith.constant 3 : index
    %415 = memref.load %arg5[%c1_360, %c3_361] : memref<8x9xf32, #tpu.memory_space<smem>>
    %416 = vector.broadcast %415 : f32 to vector<1x8x8xf32>
    %417 = arith.mulf %414, %416 : vector<1x8x8xf32>
    %418 = arith.addf %413, %417 : vector<1x8x8xf32>
    %c0_362 = arith.constant 0 : index
    %c1_363 = arith.constant 1 : index
    %c1_364 = arith.constant 1 : index
    %419 = vector.load %arg9[%c0_362, %c1_363, %c1_364] : memref<1x10x10xf32, #tpu.memory_space<vmem>>, vector<1x8x8xf32>
    %c1_365 = arith.constant 1 : index
    %c4_366 = arith.constant 4 : index
    %420 = memref.load %arg5[%c1_365, %c4_366] : memref<8x9xf32, #tpu.memory_space<smem>>
    %421 = vector.broadcast %420 : f32 to vector<1x8x8xf32>
    %422 = arith.mulf %419, %421 : vector<1x8x8xf32>
    %423 = arith.addf %418, %422 : vector<1x8x8xf32>
    %c0_367 = arith.constant 0 : index
    %c1_368 = arith.constant 1 : index
    %c2_369 = arith.constant 2 : index
    %424 = vector.load %arg9[%c0_367, %c1_368, %c2_369] : memref<1x10x10xf32, #tpu.memory_space<vmem>>, vector<1x8x8xf32>
    %c1_370 = arith.constant 1 : index
    %c5_371 = arith.constant 5 : index
    %425 = memref.load %arg5[%c1_370, %c5_371] : memref<8x9xf32, #tpu.memory_space<smem>>
    %426 = vector.broadcast %425 : f32 to vector<1x8x8xf32>
    %427 = arith.mulf %424, %426 : vector<1x8x8xf32>
    %428 = arith.addf %423, %427 : vector<1x8x8xf32>
    %c0_372 = arith.constant 0 : index
    %c2_373 = arith.constant 2 : index
    %c0_374 = arith.constant 0 : index
    %429 = vector.load %arg9[%c0_372, %c2_373, %c0_374] : memref<1x10x10xf32, #tpu.memory_space<vmem>>, vector<1x8x8xf32>
    %c1_375 = arith.constant 1 : index
    %c6_376 = arith.constant 6 : index
    %430 = memref.load %arg5[%c1_375, %c6_376] : memref<8x9xf32, #tpu.memory_space<smem>>
    %431 = vector.broadcast %430 : f32 to vector<1x8x8xf32>
    %432 = arith.mulf %429, %431 : vector<1x8x8xf32>
    %433 = arith.addf %428, %432 : vector<1x8x8xf32>
    %c0_377 = arith.constant 0 : index
    %c2_378 = arith.constant 2 : index
    %c1_379 = arith.constant 1 : index
    %434 = vector.load %arg9[%c0_377, %c2_378, %c1_379] : memref<1x10x10xf32, #tpu.memory_space<vmem>>, vector<1x8x8xf32>
    %c1_380 = arith.constant 1 : index
    %c7_381 = arith.constant 7 : index
    %435 = memref.load %arg5[%c1_380, %c7_381] : memref<8x9xf32, #tpu.memory_space<smem>>
    %436 = vector.broadcast %435 : f32 to vector<1x8x8xf32>
    %437 = arith.mulf %434, %436 : vector<1x8x8xf32>
    %438 = arith.addf %433, %437 : vector<1x8x8xf32>
    %c0_382 = arith.constant 0 : index
    %c2_383 = arith.constant 2 : index
    %c2_384 = arith.constant 2 : index
    %439 = vector.load %arg9[%c0_382, %c2_383, %c2_384] : memref<1x10x10xf32, #tpu.memory_space<vmem>>, vector<1x8x8xf32>
    %c1_385 = arith.constant 1 : index
    %c8_386 = arith.constant 8 : index
    %440 = memref.load %arg5[%c1_385, %c8_386] : memref<8x9xf32, #tpu.memory_space<smem>>
    %441 = vector.broadcast %440 : f32 to vector<1x8x8xf32>
    %442 = arith.mulf %439, %441 : vector<1x8x8xf32>
    %443 = arith.addf %438, %442 : vector<1x8x8xf32>
    %c0_387 = arith.constant 0 : index
    %c1_388 = arith.constant 1 : index
    %c1_389 = arith.constant 1 : index
    %444 = vector.load %arg9[%c0_387, %c1_388, %c1_389] : memref<1x10x10xf32, #tpu.memory_space<vmem>>, vector<1x8x8xf32>
    tpu.vector_store %arg9[%c0_387, %c1_388, %c1_389], %253 {strides = array<i32>} : memref<1x10x10xf32, #tpu.memory_space<vmem>>, vector<1x8x8xf32>,
    %c0_390 = arith.constant 0 : index
    %c0_391 = arith.constant 0 : index
    %c0_392 = arith.constant 0 : index
    %445 = vector.load %arg9[%c0_390, %c0_391, %c0_392] : memref<1x10x10xf32, #tpu.memory_space<vmem>>, vector<1x8x8xf32>
    %c2_393 = arith.constant 2 : index
    %c0_394 = arith.constant 0 : index
    %446 = memref.load %arg5[%c2_393, %c0_394] : memref<8x9xf32, #tpu.memory_space<smem>>
    %447 = vector.broadcast %446 : f32 to vector<1x8x8xf32>
    %448 = arith.mulf %445, %447 : vector<1x8x8xf32>
    %c0_395 = arith.constant 0 : index
    %c0_396 = arith.constant 0 : index
    %c1_397 = arith.constant 1 : index
    %449 = vector.load %arg9[%c0_395, %c0_396, %c1_397] : memref<1x10x10xf32, #tpu.memory_space<vmem>>, vector<1x8x8xf32>
    %c2_398 = arith.constant 2 : index
    %c1_399 = arith.constant 1 : index
    %450 = memref.load %arg5[%c2_398, %c1_399] : memref<8x9xf32, #tpu.memory_space<smem>>
    %451 = vector.broadcast %450 : f32 to vector<1x8x8xf32>
    %452 = arith.mulf %449, %451 : vector<1x8x8xf32>
    %453 = arith.addf %448, %452 : vector<1x8x8xf32>
    %c0_400 = arith.constant 0 : index
    %c0_401 = arith.constant 0 : index
    %c2_402 = arith.constant 2 : index
    %454 = vector.load %arg9[%c0_400, %c0_401, %c2_402] : memref<1x10x10xf32, #tpu.memory_space<vmem>>, vector<1x8x8xf32>
    %c2_403 = arith.constant 2 : index
    %c2_404 = arith.constant 2 : index
    %455 = memref.load %arg5[%c2_403, %c2_404] : memref<8x9xf32, #tpu.memory_space<smem>>
    %456 = vector.broadcast %455 : f32 to vector<1x8x8xf32>
    %457 = arith.mulf %454, %456 : vector<1x8x8xf32>
    %458 = arith.addf %453, %457 : vector<1x8x8xf32>
    %c0_405 = arith.constant 0 : index
    %c1_406 = arith.constant 1 : index
    %c0_407 = arith.constant 0 : index
    %459 = vector.load %arg9[%c0_405, %c1_406, %c0_407] : memref<1x10x10xf32, #tpu.memory_space<vmem>>, vector<1x8x8xf32>
    %c2_408 = arith.constant 2 : index
    %c3_409 = arith.constant 3 : index
    %460 = memref.load %arg5[%c2_408, %c3_409] : memref<8x9xf32, #tpu.memory_space<smem>>
    %461 = vector.broadcast %460 : f32 to vector<1x8x8xf32>
    %462 = arith.mulf %459, %461 : vector<1x8x8xf32>
    %463 = arith.addf %458, %462 : vector<1x8x8xf32>
    %c0_410 = arith.constant 0 : index
    %c1_411 = arith.constant 1 : index
    %c1_412 = arith.constant 1 : index
    %464 = vector.load %arg9[%c0_410, %c1_411, %c1_412] : memref<1x10x10xf32, #tpu.memory_space<vmem>>, vector<1x8x8xf32>
    %c2_413 = arith.constant 2 : index
    %c4_414 = arith.constant 4 : index
    %465 = memref.load %arg5[%c2_413, %c4_414] : memref<8x9xf32, #tpu.memory_space<smem>>
    %466 = vector.broadcast %465 : f32 to vector<1x8x8xf32>
    %467 = arith.mulf %464, %466 : vector<1x8x8xf32>
    %468 = arith.addf %463, %467 : vector<1x8x8xf32>
    %c0_415 = arith.constant 0 : index
    %c1_416 = arith.constant 1 : index
    %c2_417 = arith.constant 2 : index
    %469 = vector.load %arg9[%c0_415, %c1_416, %c2_417] : memref<1x10x10xf32, #tpu.memory_space<vmem>>, vector<1x8x8xf32>
    %c2_418 = arith.constant 2 : index
    %c5_419 = arith.constant 5 : index
    %470 = memref.load %arg5[%c2_418, %c5_419] : memref<8x9xf32, #tpu.memory_space<smem>>
    %471 = vector.broadcast %470 : f32 to vector<1x8x8xf32>
    %472 = arith.mulf %469, %471 : vector<1x8x8xf32>
    %473 = arith.addf %468, %472 : vector<1x8x8xf32>
    %c0_420 = arith.constant 0 : index
    %c2_421 = arith.constant 2 : index
    %c0_422 = arith.constant 0 : index
    %474 = vector.load %arg9[%c0_420, %c2_421, %c0_422] : memref<1x10x10xf32, #tpu.memory_space<vmem>>, vector<1x8x8xf32>
    %c2_423 = arith.constant 2 : index
    %c6_424 = arith.constant 6 : index
    %475 = memref.load %arg5[%c2_423, %c6_424] : memref<8x9xf32, #tpu.memory_space<smem>>
    %476 = vector.broadcast %475 : f32 to vector<1x8x8xf32>
    %477 = arith.mulf %474, %476 : vector<1x8x8xf32>
    %478 = arith.addf %473, %477 : vector<1x8x8xf32>
    %c0_425 = arith.constant 0 : index
    %c2_426 = arith.constant 2 : index
    %c1_427 = arith.constant 1 : index
    %479 = vector.load %arg9[%c0_425, %c2_426, %c1_427] : memref<1x10x10xf32, #tpu.memory_space<vmem>>, vector<1x8x8xf32>
    %c2_428 = arith.constant 2 : index
    %c7_429 = arith.constant 7 : index
    %480 = memref.load %arg5[%c2_428, %c7_429] : memref<8x9xf32, #tpu.memory_space<smem>>
    %481 = vector.broadcast %480 : f32 to vector<1x8x8xf32>
    %482 = arith.mulf %479, %481 : vector<1x8x8xf32>
    %483 = arith.addf %478, %482 : vector<1x8x8xf32>
    %c0_430 = arith.constant 0 : index
    %c2_431 = arith.constant 2 : index
    %c2_432 = arith.constant 2 : index
    %484 = vector.load %arg9[%c0_430, %c2_431, %c2_432] : memref<1x10x10xf32, #tpu.memory_space<vmem>>, vector<1x8x8xf32>
    %c2_433 = arith.constant 2 : index
    %c8_434 = arith.constant 8 : index
    %485 = memref.load %arg5[%c2_433, %c8_434] : memref<8x9xf32, #tpu.memory_space<smem>>
    %486 = vector.broadcast %485 : f32 to vector<1x8x8xf32>
    %487 = arith.mulf %484, %486 : vector<1x8x8xf32>
    %488 = arith.addf %483, %487 : vector<1x8x8xf32>
    %c0_435 = arith.constant 0 : index
    %c1_436 = arith.constant 1 : index
    %c1_437 = arith.constant 1 : index
    %489 = vector.load %arg9[%c0_435, %c1_436, %c1_437] : memref<1x10x10xf32, #tpu.memory_space<vmem>>, vector<1x8x8xf32>
    tpu.vector_store %arg9[%c0_435, %c1_436, %c1_437], %273 {strides = array<i32>} : memref<1x10x10xf32, #tpu.memory_space<vmem>>, vector<1x8x8xf32>,
    %c0_438 = arith.constant 0 : index
    %c0_439 = arith.constant 0 : index
    %c0_440 = arith.constant 0 : index
    %490 = vector.load %arg9[%c0_438, %c0_439, %c0_440] : memref<1x10x10xf32, #tpu.memory_space<vmem>>, vector<1x8x8xf32>
    %c3_441 = arith.constant 3 : index
    %c0_442 = arith.constant 0 : index
    %491 = memref.load %arg5[%c3_441, %c0_442] : memref<8x9xf32, #tpu.memory_space<smem>>
    %492 = vector.broadcast %491 : f32 to vector<1x8x8xf32>
    %493 = arith.mulf %490, %492 : vector<1x8x8xf32>
    %c0_443 = arith.constant 0 : index
    %c0_444 = arith.constant 0 : index
    %c1_445 = arith.constant 1 : index
    %494 = vector.load %arg9[%c0_443, %c0_444, %c1_445] : memref<1x10x10xf32, #tpu.memory_space<vmem>>, vector<1x8x8xf32>
    %c3_446 = arith.constant 3 : index
    %c1_447 = arith.constant 1 : index
    %495 = memref.load %arg5[%c3_446, %c1_447] : memref<8x9xf32, #tpu.memory_space<smem>>
    %496 = vector.broadcast %495 : f32 to vector<1x8x8xf32>
    %497 = arith.mulf %494, %496 : vector<1x8x8xf32>
    %498 = arith.addf %493, %497 : vector<1x8x8xf32>
    %c0_448 = arith.constant 0 : index
    %c0_449 = arith.constant 0 : index
    %c2_450 = arith.constant 2 : index
    %499 = vector.load %arg9[%c0_448, %c0_449, %c2_450] : memref<1x10x10xf32, #tpu.memory_space<vmem>>, vector<1x8x8xf32>
    %c3_451 = arith.constant 3 : index
    %c2_452 = arith.constant 2 : index
    %500 = memref.load %arg5[%c3_451, %c2_452] : memref<8x9xf32, #tpu.memory_space<smem>>
    %501 = vector.broadcast %500 : f32 to vector<1x8x8xf32>
    %502 = arith.mulf %499, %501 : vector<1x8x8xf32>
    %503 = arith.addf %498, %502 : vector<1x8x8xf32>
    %c0_453 = arith.constant 0 : index
    %c1_454 = arith.constant 1 : index
    %c0_455 = arith.constant 0 : index
    %504 = vector.load %arg9[%c0_453, %c1_454, %c0_455] : memref<1x10x10xf32, #tpu.memory_space<vmem>>, vector<1x8x8xf32>
    %c3_456 = arith.constant 3 : index
    %c3_457 = arith.constant 3 : index
    %505 = memref.load %arg5[%c3_456, %c3_457] : memref<8x9xf32, #tpu.memory_space<smem>>
    %506 = vector.broadcast %505 : f32 to vector<1x8x8xf32>
    %507 = arith.mulf %504, %506 : vector<1x8x8xf32>
    %508 = arith.addf %503, %507 : vector<1x8x8xf32>
    %c0_458 = arith.constant 0 : index
    %c1_459 = arith.constant 1 : index
    %c1_460 = arith.constant 1 : index
    %509 = vector.load %arg9[%c0_458, %c1_459, %c1_460] : memref<1x10x10xf32, #tpu.memory_space<vmem>>, vector<1x8x8xf32>
    %c3_461 = arith.constant 3 : index
    %c4_462 = arith.constant 4 : index
    %510 = memref.load %arg5[%c3_461, %c4_462] : memref<8x9xf32, #tpu.memory_space<smem>>
    %511 = vector.broadcast %510 : f32 to vector<1x8x8xf32>
    %512 = arith.mulf %509, %511 : vector<1x8x8xf32>
    %513 = arith.addf %508, %512 : vector<1x8x8xf32>
    %c0_463 = arith.constant 0 : index
    %c1_464 = arith.constant 1 : index
    %c2_465 = arith.constant 2 : index
    %514 = vector.load %arg9[%c0_463, %c1_464, %c2_465] : memref<1x10x10xf32, #tpu.memory_space<vmem>>, vector<1x8x8xf32>
    %c3_466 = arith.constant 3 : index
    %c5_467 = arith.constant 5 : index
    %515 = memref.load %arg5[%c3_466, %c5_467] : memref<8x9xf32, #tpu.memory_space<smem>>
    %516 = vector.broadcast %515 : f32 to vector<1x8x8xf32>
    %517 = arith.mulf %514, %516 : vector<1x8x8xf32>
    %518 = arith.addf %513, %517 : vector<1x8x8xf32>
    %c0_468 = arith.constant 0 : index
    %c2_469 = arith.constant 2 : index
    %c0_470 = arith.constant 0 : index
    %519 = vector.load %arg9[%c0_468, %c2_469, %c0_470] : memref<1x10x10xf32, #tpu.memory_space<vmem>>, vector<1x8x8xf32>
    %c3_471 = arith.constant 3 : index
    %c6_472 = arith.constant 6 : index
    %520 = memref.load %arg5[%c3_471, %c6_472] : memref<8x9xf32, #tpu.memory_space<smem>>
    %521 = vector.broadcast %520 : f32 to vector<1x8x8xf32>
    %522 = arith.mulf %519, %521 : vector<1x8x8xf32>
    %523 = arith.addf %518, %522 : vector<1x8x8xf32>
    %c0_473 = arith.constant 0 : index
    %c2_474 = arith.constant 2 : index
    %c1_475 = arith.constant 1 : index
    %524 = vector.load %arg9[%c0_473, %c2_474, %c1_475] : memref<1x10x10xf32, #tpu.memory_space<vmem>>, vector<1x8x8xf32>
    %c3_476 = arith.constant 3 : index
    %c7_477 = arith.constant 7 : index
    %525 = memref.load %arg5[%c3_476, %c7_477] : memref<8x9xf32, #tpu.memory_space<smem>>
    %526 = vector.broadcast %525 : f32 to vector<1x8x8xf32>
    %527 = arith.mulf %524, %526 : vector<1x8x8xf32>
    %528 = arith.addf %523, %527 : vector<1x8x8xf32>
    %c0_478 = arith.constant 0 : index
    %c2_479 = arith.constant 2 : index
    %c2_480 = arith.constant 2 : index
    %529 = vector.load %arg9[%c0_478, %c2_479, %c2_480] : memref<1x10x10xf32, #tpu.memory_space<vmem>>, vector<1x8x8xf32>
    %c3_481 = arith.constant 3 : index
    %c8_482 = arith.constant 8 : index
    %530 = memref.load %arg5[%c3_481, %c8_482] : memref<8x9xf32, #tpu.memory_space<smem>>
    %531 = vector.broadcast %530 : f32 to vector<1x8x8xf32>
    %532 = arith.mulf %529, %531 : vector<1x8x8xf32>
    %533 = arith.addf %528, %532 : vector<1x8x8xf32>
    %c0_483 = arith.constant 0 : index
    %c1_484 = arith.constant 1 : index
    %c1_485 = arith.constant 1 : index
    %534 = vector.load %arg9[%c0_483, %c1_484, %c1_485] : memref<1x10x10xf32, #tpu.memory_space<vmem>>, vector<1x8x8xf32>
    tpu.vector_store %arg9[%c0_483, %c1_484, %c1_485], %293 {strides = array<i32>} : memref<1x10x10xf32, #tpu.memory_space<vmem>>, vector<1x8x8xf32>,
    %c0_486 = arith.constant 0 : index
    %c0_487 = arith.constant 0 : index
    %c0_488 = arith.constant 0 : index
    %535 = vector.load %arg9[%c0_486, %c0_487, %c0_488] : memref<1x10x10xf32, #tpu.memory_space<vmem>>, vector<1x8x8xf32>
    %c4_489 = arith.constant 4 : index
    %c0_490 = arith.constant 0 : index
    %536 = memref.load %arg5[%c4_489, %c0_490] : memref<8x9xf32, #tpu.memory_space<smem>>
    %537 = vector.broadcast %536 : f32 to vector<1x8x8xf32>
    %538 = arith.mulf %535, %537 : vector<1x8x8xf32>
    %c0_491 = arith.constant 0 : index
    %c0_492 = arith.constant 0 : index
    %c1_493 = arith.constant 1 : index
    %539 = vector.load %arg9[%c0_491, %c0_492, %c1_493] : memref<1x10x10xf32, #tpu.memory_space<vmem>>, vector<1x8x8xf32>
    %c4_494 = arith.constant 4 : index
    %c1_495 = arith.constant 1 : index
    %540 = memref.load %arg5[%c4_494, %c1_495] : memref<8x9xf32, #tpu.memory_space<smem>>
    %541 = vector.broadcast %540 : f32 to vector<1x8x8xf32>
    %542 = arith.mulf %539, %541 : vector<1x8x8xf32>
    %543 = arith.addf %538, %542 : vector<1x8x8xf32>
    %c0_496 = arith.constant 0 : index
    %c0_497 = arith.constant 0 : index
    %c2_498 = arith.constant 2 : index
    %544 = vector.load %arg9[%c0_496, %c0_497, %c2_498] : memref<1x10x10xf32, #tpu.memory_space<vmem>>, vector<1x8x8xf32>
    %c4_499 = arith.constant 4 : index
    %c2_500 = arith.constant 2 : index
    %545 = memref.load %arg5[%c4_499, %c2_500] : memref<8x9xf32, #tpu.memory_space<smem>>
    %546 = vector.broadcast %545 : f32 to vector<1x8x8xf32>
    %547 = arith.mulf %544, %546 : vector<1x8x8xf32>
    %548 = arith.addf %543, %547 : vector<1x8x8xf32>
    %c0_501 = arith.constant 0 : index
    %c1_502 = arith.constant 1 : index
    %c0_503 = arith.constant 0 : index
    %549 = vector.load %arg9[%c0_501, %c1_502, %c0_503] : memref<1x10x10xf32, #tpu.memory_space<vmem>>, vector<1x8x8xf32>
    %c4_504 = arith.constant 4 : index
    %c3_505 = arith.constant 3 : index
    %550 = memref.load %arg5[%c4_504, %c3_505] : memref<8x9xf32, #tpu.memory_space<smem>>
    %551 = vector.broadcast %550 : f32 to vector<1x8x8xf32>
    %552 = arith.mulf %549, %551 : vector<1x8x8xf32>
    %553 = arith.addf %548, %552 : vector<1x8x8xf32>
    %c0_506 = arith.constant 0 : index
    %c1_507 = arith.constant 1 : index
    %c1_508 = arith.constant 1 : index
    %554 = vector.load %arg9[%c0_506, %c1_507, %c1_508] : memref<1x10x10xf32, #tpu.memory_space<vmem>>, vector<1x8x8xf32>
    %c4_509 = arith.constant 4 : index
    %c4_510 = arith.constant 4 : index
    %555 = memref.load %arg5[%c4_509, %c4_510] : memref<8x9xf32, #tpu.memory_space<smem>>
    %556 = vector.broadcast %555 : f32 to vector<1x8x8xf32>
    %557 = arith.mulf %554, %556 : vector<1x8x8xf32>
    %558 = arith.addf %553, %557 : vector<1x8x8xf32>
    %c0_511 = arith.constant 0 : index
    %c1_512 = arith.constant 1 : index
    %c2_513 = arith.constant 2 : index
    %559 = vector.load %arg9[%c0_511, %c1_512, %c2_513] : memref<1x10x10xf32, #tpu.memory_space<vmem>>, vector<1x8x8xf32>
    %c4_514 = arith.constant 4 : index
    %c5_515 = arith.constant 5 : index
    %560 = memref.load %arg5[%c4_514, %c5_515] : memref<8x9xf32, #tpu.memory_space<smem>>
    %561 = vector.broadcast %560 : f32 to vector<1x8x8xf32>
    %562 = arith.mulf %559, %561 : vector<1x8x8xf32>
    %563 = arith.addf %558, %562 : vector<1x8x8xf32>
    %c0_516 = arith.constant 0 : index
    %c2_517 = arith.constant 2 : index
    %c0_518 = arith.constant 0 : index
    %564 = vector.load %arg9[%c0_516, %c2_517, %c0_518] : memref<1x10x10xf32, #tpu.memory_space<vmem>>, vector<1x8x8xf32>
    %c4_519 = arith.constant 4 : index
    %c6_520 = arith.constant 6 : index
    %565 = memref.load %arg5[%c4_519, %c6_520] : memref<8x9xf32, #tpu.memory_space<smem>>
    %566 = vector.broadcast %565 : f32 to vector<1x8x8xf32>
    %567 = arith.mulf %564, %566 : vector<1x8x8xf32>
    %568 = arith.addf %563, %567 : vector<1x8x8xf32>
    %c0_521 = arith.constant 0 : index
    %c2_522 = arith.constant 2 : index
    %c1_523 = arith.constant 1 : index
    %569 = vector.load %arg9[%c0_521, %c2_522, %c1_523] : memref<1x10x10xf32, #tpu.memory_space<vmem>>, vector<1x8x8xf32>
    %c4_524 = arith.constant 4 : index
    %c7_525 = arith.constant 7 : index
    %570 = memref.load %arg5[%c4_524, %c7_525] : memref<8x9xf32, #tpu.memory_space<smem>>
    %571 = vector.broadcast %570 : f32 to vector<1x8x8xf32>
    %572 = arith.mulf %569, %571 : vector<1x8x8xf32>
    %573 = arith.addf %568, %572 : vector<1x8x8xf32>
    %c0_526 = arith.constant 0 : index
    %c2_527 = arith.constant 2 : index
    %c2_528 = arith.constant 2 : index
    %574 = vector.load %arg9[%c0_526, %c2_527, %c2_528] : memref<1x10x10xf32, #tpu.memory_space<vmem>>, vector<1x8x8xf32>
    %c4_529 = arith.constant 4 : index
    %c8_530 = arith.constant 8 : index
    %575 = memref.load %arg5[%c4_529, %c8_530] : memref<8x9xf32, #tpu.memory_space<smem>>
    %576 = vector.broadcast %575 : f32 to vector<1x8x8xf32>
    %577 = arith.mulf %574, %576 : vector<1x8x8xf32>
    %578 = arith.addf %573, %577 : vector<1x8x8xf32>
    %c0_531 = arith.constant 0 : index
    %c1_532 = arith.constant 1 : index
    %c1_533 = arith.constant 1 : index
    %579 = vector.load %arg9[%c0_531, %c1_532, %c1_533] : memref<1x10x10xf32, #tpu.memory_space<vmem>>, vector<1x8x8xf32>
    tpu.vector_store %arg9[%c0_531, %c1_532, %c1_533], %313 {strides = array<i32>} : memref<1x10x10xf32, #tpu.memory_space<vmem>>, vector<1x8x8xf32>,
    %c0_534 = arith.constant 0 : index
    %c0_535 = arith.constant 0 : index
    %c0_536 = arith.constant 0 : index
    %580 = vector.load %arg9[%c0_534, %c0_535, %c0_536] : memref<1x10x10xf32, #tpu.memory_space<vmem>>, vector<1x8x8xf32>
    %c5_537 = arith.constant 5 : index
    %c0_538 = arith.constant 0 : index
    %581 = memref.load %arg5[%c5_537, %c0_538] : memref<8x9xf32, #tpu.memory_space<smem>>
    %582 = vector.broadcast %581 : f32 to vector<1x8x8xf32>
    %583 = arith.mulf %580, %582 : vector<1x8x8xf32>
    %c0_539 = arith.constant 0 : index
    %c0_540 = arith.constant 0 : index
    %c1_541 = arith.constant 1 : index
    %584 = vector.load %arg9[%c0_539, %c0_540, %c1_541] : memref<1x10x10xf32, #tpu.memory_space<vmem>>, vector<1x8x8xf32>
    %c5_542 = arith.constant 5 : index
    %c1_543 = arith.constant 1 : index
    %585 = memref.load %arg5[%c5_542, %c1_543] : memref<8x9xf32, #tpu.memory_space<smem>>
    %586 = vector.broadcast %585 : f32 to vector<1x8x8xf32>
    %587 = arith.mulf %584, %586 : vector<1x8x8xf32>
    %588 = arith.addf %583, %587 : vector<1x8x8xf32>
    %c0_544 = arith.constant 0 : index
    %c0_545 = arith.constant 0 : index
    %c2_546 = arith.constant 2 : index
    %589 = vector.load %arg9[%c0_544, %c0_545, %c2_546] : memref<1x10x10xf32, #tpu.memory_space<vmem>>, vector<1x8x8xf32>
    %c5_547 = arith.constant 5 : index
    %c2_548 = arith.constant 2 : index
    %590 = memref.load %arg5[%c5_547, %c2_548] : memref<8x9xf32, #tpu.memory_space<smem>>
    %591 = vector.broadcast %590 : f32 to vector<1x8x8xf32>
    %592 = arith.mulf %589, %591 : vector<1x8x8xf32>
    %593 = arith.addf %588, %592 : vector<1x8x8xf32>
    %c0_549 = arith.constant 0 : index
    %c1_550 = arith.constant 1 : index
    %c0_551 = arith.constant 0 : index
    %594 = vector.load %arg9[%c0_549, %c1_550, %c0_551] : memref<1x10x10xf32, #tpu.memory_space<vmem>>, vector<1x8x8xf32>
    %c5_552 = arith.constant 5 : index
    %c3_553 = arith.constant 3 : index
    %595 = memref.load %arg5[%c5_552, %c3_553] : memref<8x9xf32, #tpu.memory_space<smem>>
    %596 = vector.broadcast %595 : f32 to vector<1x8x8xf32>
    %597 = arith.mulf %594, %596 : vector<1x8x8xf32>
    %598 = arith.addf %593, %597 : vector<1x8x8xf32>
    %c0_554 = arith.constant 0 : index
    %c1_555 = arith.constant 1 : index
    %c1_556 = arith.constant 1 : index
    %599 = vector.load %arg9[%c0_554, %c1_555, %c1_556] : memref<1x10x10xf32, #tpu.memory_space<vmem>>, vector<1x8x8xf32>
    %c5_557 = arith.constant 5 : index
    %c4_558 = arith.constant 4 : index
    %600 = memref.load %arg5[%c5_557, %c4_558] : memref<8x9xf32, #tpu.memory_space<smem>>
    %601 = vector.broadcast %600 : f32 to vector<1x8x8xf32>
    %602 = arith.mulf %599, %601 : vector<1x8x8xf32>
    %603 = arith.addf %598, %602 : vector<1x8x8xf32>
    %c0_559 = arith.constant 0 : index
    %c1_560 = arith.constant 1 : index
    %c2_561 = arith.constant 2 : index
    %604 = vector.load %arg9[%c0_559, %c1_560, %c2_561] : memref<1x10x10xf32, #tpu.memory_space<vmem>>, vector<1x8x8xf32>
    %c5_562 = arith.constant 5 : index
    %c5_563 = arith.constant 5 : index
    %605 = memref.load %arg5[%c5_562, %c5_563] : memref<8x9xf32, #tpu.memory_space<smem>>
    %606 = vector.broadcast %605 : f32 to vector<1x8x8xf32>
    %607 = arith.mulf %604, %606 : vector<1x8x8xf32>
    %608 = arith.addf %603, %607 : vector<1x8x8xf32>
    %c0_564 = arith.constant 0 : index
    %c2_565 = arith.constant 2 : index
    %c0_566 = arith.constant 0 : index
    %609 = vector.load %arg9[%c0_564, %c2_565, %c0_566] : memref<1x10x10xf32, #tpu.memory_space<vmem>>, vector<1x8x8xf32>
    %c5_567 = arith.constant 5 : index
    %c6_568 = arith.constant 6 : index
    %610 = memref.load %arg5[%c5_567, %c6_568] : memref<8x9xf32, #tpu.memory_space<smem>>
    %611 = vector.broadcast %610 : f32 to vector<1x8x8xf32>
    %612 = arith.mulf %609, %611 : vector<1x8x8xf32>
    %613 = arith.addf %608, %612 : vector<1x8x8xf32>
    %c0_569 = arith.constant 0 : index
    %c2_570 = arith.constant 2 : index
    %c1_571 = arith.constant 1 : index
    %614 = vector.load %arg9[%c0_569, %c2_570, %c1_571] : memref<1x10x10xf32, #tpu.memory_space<vmem>>, vector<1x8x8xf32>
    %c5_572 = arith.constant 5 : index
    %c7_573 = arith.constant 7 : index
    %615 = memref.load %arg5[%c5_572, %c7_573] : memref<8x9xf32, #tpu.memory_space<smem>>
    %616 = vector.broadcast %615 : f32 to vector<1x8x8xf32>
    %617 = arith.mulf %614, %616 : vector<1x8x8xf32>
    %618 = arith.addf %613, %617 : vector<1x8x8xf32>
    %c0_574 = arith.constant 0 : index
    %c2_575 = arith.constant 2 : index
    %c2_576 = arith.constant 2 : index
    %619 = vector.load %arg9[%c0_574, %c2_575, %c2_576] : memref<1x10x10xf32, #tpu.memory_space<vmem>>, vector<1x8x8xf32>
    %c5_577 = arith.constant 5 : index
    %c8_578 = arith.constant 8 : index
    %620 = memref.load %arg5[%c5_577, %c8_578] : memref<8x9xf32, #tpu.memory_space<smem>>
    %621 = vector.broadcast %620 : f32 to vector<1x8x8xf32>
    %622 = arith.mulf %619, %621 : vector<1x8x8xf32>
    %623 = arith.addf %618, %622 : vector<1x8x8xf32>
    %c0_579 = arith.constant 0 : index
    %c1_580 = arith.constant 1 : index
    %c1_581 = arith.constant 1 : index
    %624 = vector.load %arg9[%c0_579, %c1_580, %c1_581] : memref<1x10x10xf32, #tpu.memory_space<vmem>>, vector<1x8x8xf32>
    tpu.vector_store %arg9[%c0_579, %c1_580, %c1_581], %333 {strides = array<i32>} : memref<1x10x10xf32, #tpu.memory_space<vmem>>, vector<1x8x8xf32>,
    %c0_582 = arith.constant 0 : index
    %c0_583 = arith.constant 0 : index
    %c0_584 = arith.constant 0 : index
    %625 = vector.load %arg9[%c0_582, %c0_583, %c0_584] : memref<1x10x10xf32, #tpu.memory_space<vmem>>, vector<1x8x8xf32>
    %c6_585 = arith.constant 6 : index
    %c0_586 = arith.constant 0 : index
    %626 = memref.load %arg5[%c6_585, %c0_586] : memref<8x9xf32, #tpu.memory_space<smem>>
    %627 = vector.broadcast %626 : f32 to vector<1x8x8xf32>
    %628 = arith.mulf %625, %627 : vector<1x8x8xf32>
    %c0_587 = arith.constant 0 : index
    %c0_588 = arith.constant 0 : index
    %c1_589 = arith.constant 1 : index
    %629 = vector.load %arg9[%c0_587, %c0_588, %c1_589] : memref<1x10x10xf32, #tpu.memory_space<vmem>>, vector<1x8x8xf32>
    %c6_590 = arith.constant 6 : index
    %c1_591 = arith.constant 1 : index
    %630 = memref.load %arg5[%c6_590, %c1_591] : memref<8x9xf32, #tpu.memory_space<smem>>
    %631 = vector.broadcast %630 : f32 to vector<1x8x8xf32>
    %632 = arith.mulf %629, %631 : vector<1x8x8xf32>
    %633 = arith.addf %628, %632 : vector<1x8x8xf32>
    %c0_592 = arith.constant 0 : index
    %c0_593 = arith.constant 0 : index
    %c2_594 = arith.constant 2 : index
    %634 = vector.load %arg9[%c0_592, %c0_593, %c2_594] : memref<1x10x10xf32, #tpu.memory_space<vmem>>, vector<1x8x8xf32>
    %c6_595 = arith.constant 6 : index
    %c2_596 = arith.constant 2 : index
    %635 = memref.load %arg5[%c6_595, %c2_596] : memref<8x9xf32, #tpu.memory_space<smem>>
    %636 = vector.broadcast %635 : f32 to vector<1x8x8xf32>
    %637 = arith.mulf %634, %636 : vector<1x8x8xf32>
    %638 = arith.addf %633, %637 : vector<1x8x8xf32>
    %c0_597 = arith.constant 0 : index
    %c1_598 = arith.constant 1 : index
    %c0_599 = arith.constant 0 : index
    %639 = vector.load %arg9[%c0_597, %c1_598, %c0_599] : memref<1x10x10xf32, #tpu.memory_space<vmem>>, vector<1x8x8xf32>
    %c6_600 = arith.constant 6 : index
    %c3_601 = arith.constant 3 : index
    %640 = memref.load %arg5[%c6_600, %c3_601] : memref<8x9xf32, #tpu.memory_space<smem>>
    %641 = vector.broadcast %640 : f32 to vector<1x8x8xf32>
    %642 = arith.mulf %639, %641 : vector<1x8x8xf32>
    %643 = arith.addf %638, %642 : vector<1x8x8xf32>
    %c0_602 = arith.constant 0 : index
    %c1_603 = arith.constant 1 : index
    %c1_604 = arith.constant 1 : index
    %644 = vector.load %arg9[%c0_602, %c1_603, %c1_604] : memref<1x10x10xf32, #tpu.memory_space<vmem>>, vector<1x8x8xf32>
    %c6_605 = arith.constant 6 : index
    %c4_606 = arith.constant 4 : index
    %645 = memref.load %arg5[%c6_605, %c4_606] : memref<8x9xf32, #tpu.memory_space<smem>>
    %646 = vector.broadcast %645 : f32 to vector<1x8x8xf32>
    %647 = arith.mulf %644, %646 : vector<1x8x8xf32>
    %648 = arith.addf %643, %647 : vector<1x8x8xf32>
    %c0_607 = arith.constant 0 : index
    %c1_608 = arith.constant 1 : index
    %c2_609 = arith.constant 2 : index
    %649 = vector.load %arg9[%c0_607, %c1_608, %c2_609] : memref<1x10x10xf32, #tpu.memory_space<vmem>>, vector<1x8x8xf32>
    %c6_610 = arith.constant 6 : index
    %c5_611 = arith.constant 5 : index
    %650 = memref.load %arg5[%c6_610, %c5_611] : memref<8x9xf32, #tpu.memory_space<smem>>
    %651 = vector.broadcast %650 : f32 to vector<1x8x8xf32>
    %652 = arith.mulf %649, %651 : vector<1x8x8xf32>
    %653 = arith.addf %648, %652 : vector<1x8x8xf32>
    %c0_612 = arith.constant 0 : index
    %c2_613 = arith.constant 2 : index
    %c0_614 = arith.constant 0 : index
    %654 = vector.load %arg9[%c0_612, %c2_613, %c0_614] : memref<1x10x10xf32, #tpu.memory_space<vmem>>, vector<1x8x8xf32>
    %c6_615 = arith.constant 6 : index
    %c6_616 = arith.constant 6 : index
    %655 = memref.load %arg5[%c6_615, %c6_616] : memref<8x9xf32, #tpu.memory_space<smem>>
    %656 = vector.broadcast %655 : f32 to vector<1x8x8xf32>
    %657 = arith.mulf %654, %656 : vector<1x8x8xf32>
    %658 = arith.addf %653, %657 : vector<1x8x8xf32>
    %c0_617 = arith.constant 0 : index
    %c2_618 = arith.constant 2 : index
    %c1_619 = arith.constant 1 : index
    %659 = vector.load %arg9[%c0_617, %c2_618, %c1_619] : memref<1x10x10xf32, #tpu.memory_space<vmem>>, vector<1x8x8xf32>
    %c6_620 = arith.constant 6 : index
    %c7_621 = arith.constant 7 : index
    %660 = memref.load %arg5[%c6_620, %c7_621] : memref<8x9xf32, #tpu.memory_space<smem>>
    %661 = vector.broadcast %660 : f32 to vector<1x8x8xf32>
    %662 = arith.mulf %659, %661 : vector<1x8x8xf32>
    %663 = arith.addf %658, %662 : vector<1x8x8xf32>
    %c0_622 = arith.constant 0 : index
    %c2_623 = arith.constant 2 : index
    %c2_624 = arith.constant 2 : index
    %664 = vector.load %arg9[%c0_622, %c2_623, %c2_624] : memref<1x10x10xf32, #tpu.memory_space<vmem>>, vector<1x8x8xf32>
    %c6_625 = arith.constant 6 : index
    %c8_626 = arith.constant 8 : index
    %665 = memref.load %arg5[%c6_625, %c8_626] : memref<8x9xf32, #tpu.memory_space<smem>>
    %666 = vector.broadcast %665 : f32 to vector<1x8x8xf32>
    %667 = arith.mulf %664, %666 : vector<1x8x8xf32>
    %668 = arith.addf %663, %667 : vector<1x8x8xf32>
    %c0_627 = arith.constant 0 : index
    %c1_628 = arith.constant 1 : index
    %c1_629 = arith.constant 1 : index
    %669 = vector.load %arg9[%c0_627, %c1_628, %c1_629] : memref<1x10x10xf32, #tpu.memory_space<vmem>>, vector<1x8x8xf32>
    tpu.vector_store %arg9[%c0_627, %c1_628, %c1_629], %353 {strides = array<i32>} : memref<1x10x10xf32, #tpu.memory_space<vmem>>, vector<1x8x8xf32>,
    %c0_630 = arith.constant 0 : index
    %c0_631 = arith.constant 0 : index
    %c0_632 = arith.constant 0 : index
    %670 = vector.load %arg9[%c0_630, %c0_631, %c0_632] : memref<1x10x10xf32, #tpu.memory_space<vmem>>, vector<1x8x8xf32>
    %c7_633 = arith.constant 7 : index
    %c0_634 = arith.constant 0 : index
    %671 = memref.load %arg5[%c7_633, %c0_634] : memref<8x9xf32, #tpu.memory_space<smem>>
    %672 = vector.broadcast %671 : f32 to vector<1x8x8xf32>
    %673 = arith.mulf %670, %672 : vector<1x8x8xf32>
    %c0_635 = arith.constant 0 : index
    %c0_636 = arith.constant 0 : index
    %c1_637 = arith.constant 1 : index
    %674 = vector.load %arg9[%c0_635, %c0_636, %c1_637] : memref<1x10x10xf32, #tpu.memory_space<vmem>>, vector<1x8x8xf32>
    %c7_638 = arith.constant 7 : index
    %c1_639 = arith.constant 1 : index
    %675 = memref.load %arg5[%c7_638, %c1_639] : memref<8x9xf32, #tpu.memory_space<smem>>
    %676 = vector.broadcast %675 : f32 to vector<1x8x8xf32>
    %677 = arith.mulf %674, %676 : vector<1x8x8xf32>
    %678 = arith.addf %673, %677 : vector<1x8x8xf32>
    %c0_640 = arith.constant 0 : index
    %c0_641 = arith.constant 0 : index
    %c2_642 = arith.constant 2 : index
    %679 = vector.load %arg9[%c0_640, %c0_641, %c2_642] : memref<1x10x10xf32, #tpu.memory_space<vmem>>, vector<1x8x8xf32>
    %c7_643 = arith.constant 7 : index
    %c2_644 = arith.constant 2 : index
    %680 = memref.load %arg5[%c7_643, %c2_644] : memref<8x9xf32, #tpu.memory_space<smem>>
    %681 = vector.broadcast %680 : f32 to vector<1x8x8xf32>
    %682 = arith.mulf %679, %681 : vector<1x8x8xf32>
    %683 = arith.addf %678, %682 : vector<1x8x8xf32>
    %c0_645 = arith.constant 0 : index
    %c1_646 = arith.constant 1 : index
    %c0_647 = arith.constant 0 : index
    %684 = vector.load %arg9[%c0_645, %c1_646, %c0_647] : memref<1x10x10xf32, #tpu.memory_space<vmem>>, vector<1x8x8xf32>
    %c7_648 = arith.constant 7 : index
    %c3_649 = arith.constant 3 : index
    %685 = memref.load %arg5[%c7_648, %c3_649] : memref<8x9xf32, #tpu.memory_space<smem>>
    %686 = vector.broadcast %685 : f32 to vector<1x8x8xf32>
    %687 = arith.mulf %684, %686 : vector<1x8x8xf32>
    %688 = arith.addf %683, %687 : vector<1x8x8xf32>
    %c0_650 = arith.constant 0 : index
    %c1_651 = arith.constant 1 : index
    %c1_652 = arith.constant 1 : index
    %689 = vector.load %arg9[%c0_650, %c1_651, %c1_652] : memref<1x10x10xf32, #tpu.memory_space<vmem>>, vector<1x8x8xf32>
    %c7_653 = arith.constant 7 : index
    %c4_654 = arith.constant 4 : index
    %690 = memref.load %arg5[%c7_653, %c4_654] : memref<8x9xf32, #tpu.memory_space<smem>>
    %691 = vector.broadcast %690 : f32 to vector<1x8x8xf32>
    %692 = arith.mulf %689, %691 : vector<1x8x8xf32>
    %693 = arith.addf %688, %692 : vector<1x8x8xf32>
    %c0_655 = arith.constant 0 : index
    %c1_656 = arith.constant 1 : index
    %c2_657 = arith.constant 2 : index
    %694 = vector.load %arg9[%c0_655, %c1_656, %c2_657] : memref<1x10x10xf32, #tpu.memory_space<vmem>>, vector<1x8x8xf32>
    %c7_658 = arith.constant 7 : index
    %c5_659 = arith.constant 5 : index
    %695 = memref.load %arg5[%c7_658, %c5_659] : memref<8x9xf32, #tpu.memory_space<smem>>
    %696 = vector.broadcast %695 : f32 to vector<1x8x8xf32>
    %697 = arith.mulf %694, %696 : vector<1x8x8xf32>
    %698 = arith.addf %693, %697 : vector<1x8x8xf32>
    %c0_660 = arith.constant 0 : index
    %c2_661 = arith.constant 2 : index
    %c0_662 = arith.constant 0 : index
    %699 = vector.load %arg9[%c0_660, %c2_661, %c0_662] : memref<1x10x10xf32, #tpu.memory_space<vmem>>, vector<1x8x8xf32>
    %c7_663 = arith.constant 7 : index
    %c6_664 = arith.constant 6 : index
    %700 = memref.load %arg5[%c7_663, %c6_664] : memref<8x9xf32, #tpu.memory_space<smem>>
    %701 = vector.broadcast %700 : f32 to vector<1x8x8xf32>
    %702 = arith.mulf %699, %701 : vector<1x8x8xf32>
    %703 = arith.addf %698, %702 : vector<1x8x8xf32>
    %c0_665 = arith.constant 0 : index
    %c2_666 = arith.constant 2 : index
    %c1_667 = arith.constant 1 : index
    %704 = vector.load %arg9[%c0_665, %c2_666, %c1_667] : memref<1x10x10xf32, #tpu.memory_space<vmem>>, vector<1x8x8xf32>
    %c7_668 = arith.constant 7 : index
    %c7_669 = arith.constant 7 : index
    %705 = memref.load %arg5[%c7_668, %c7_669] : memref<8x9xf32, #tpu.memory_space<smem>>
    %706 = vector.broadcast %705 : f32 to vector<1x8x8xf32>
    %707 = arith.mulf %704, %706 : vector<1x8x8xf32>
    %708 = arith.addf %703, %707 : vector<1x8x8xf32>
    %c0_670 = arith.constant 0 : index
    %c2_671 = arith.constant 2 : index
    %c2_672 = arith.constant 2 : index
    %709 = vector.load %arg9[%c0_670, %c2_671, %c2_672] : memref<1x10x10xf32, #tpu.memory_space<vmem>>, vector<1x8x8xf32>
    %c7_673 = arith.constant 7 : index
    %c8_674 = arith.constant 8 : index
    %710 = memref.load %arg5[%c7_673, %c8_674] : memref<8x9xf32, #tpu.memory_space<smem>>
    %711 = vector.broadcast %710 : f32 to vector<1x8x8xf32>
    %712 = arith.mulf %709, %711 : vector<1x8x8xf32>
    %713 = arith.addf %708, %712 : vector<1x8x8xf32>
    %c0_675 = arith.constant 0 : index
    %c0_676 = arith.constant 0 : index
    %714 = memref.load %arg6[%c0_675, %c0_676] : memref<8x8xf32, #tpu.memory_space<smem>>
    %715 = vector.broadcast %714 : f32 to vector<1x8x8xf32>
    %716 = arith.mulf %398, %715 : vector<1x8x8xf32>
    %c1_677 = arith.constant 1 : index
    %c0_678 = arith.constant 0 : index
    %717 = memref.load %arg6[%c1_677, %c0_678] : memref<8x8xf32, #tpu.memory_space<smem>>
    %718 = vector.broadcast %717 : f32 to vector<1x8x8xf32>
    %719 = arith.mulf %443, %718 : vector<1x8x8xf32>
    %720 = arith.addf %716, %719 : vector<1x8x8xf32>
    %c2_679 = arith.constant 2 : index
    %c0_680 = arith.constant 0 : index
    %721 = memref.load %arg6[%c2_679, %c0_680] : memref<8x8xf32, #tpu.memory_space<smem>>
    %722 = vector.broadcast %721 : f32 to vector<1x8x8xf32>
    %723 = arith.mulf %488, %722 : vector<1x8x8xf32>
    %724 = arith.addf %720, %723 : vector<1x8x8xf32>
    %c3_681 = arith.constant 3 : index
    %c0_682 = arith.constant 0 : index
    %725 = memref.load %arg6[%c3_681, %c0_682] : memref<8x8xf32, #tpu.memory_space<smem>>
    %726 = vector.broadcast %725 : f32 to vector<1x8x8xf32>
    %727 = arith.mulf %533, %726 : vector<1x8x8xf32>
    %728 = arith.addf %724, %727 : vector<1x8x8xf32>
    %c4_683 = arith.constant 4 : index
    %c0_684 = arith.constant 0 : index
    %729 = memref.load %arg6[%c4_683, %c0_684] : memref<8x8xf32, #tpu.memory_space<smem>>
    %730 = vector.broadcast %729 : f32 to vector<1x8x8xf32>
    %731 = arith.mulf %578, %730 : vector<1x8x8xf32>
    %732 = arith.addf %728, %731 : vector<1x8x8xf32>
    %c5_685 = arith.constant 5 : index
    %c0_686 = arith.constant 0 : index
    %733 = memref.load %arg6[%c5_685, %c0_686] : memref<8x8xf32, #tpu.memory_space<smem>>
    %734 = vector.broadcast %733 : f32 to vector<1x8x8xf32>
    %735 = arith.mulf %623, %734 : vector<1x8x8xf32>
    %736 = arith.addf %732, %735 : vector<1x8x8xf32>
    %c6_687 = arith.constant 6 : index
    %c0_688 = arith.constant 0 : index
    %737 = memref.load %arg6[%c6_687, %c0_688] : memref<8x8xf32, #tpu.memory_space<smem>>
    %738 = vector.broadcast %737 : f32 to vector<1x8x8xf32>
    %739 = arith.mulf %668, %738 : vector<1x8x8xf32>
    %740 = arith.addf %736, %739 : vector<1x8x8xf32>
    %c7_689 = arith.constant 7 : index
    %c0_690 = arith.constant 0 : index
    %741 = memref.load %arg6[%c7_689, %c0_690] : memref<8x8xf32, #tpu.memory_space<smem>>
    %742 = vector.broadcast %741 : f32 to vector<1x8x8xf32>
    %743 = arith.mulf %713, %742 : vector<1x8x8xf32>
    %744 = arith.addf %740, %743 : vector<1x8x8xf32>
    %c0_691 = arith.constant 0 : index
    %745 = memref.load %arg7[%c0_691] : memref<8xf32, #tpu.memory_space<smem>>
    %746 = vector.broadcast %745 : f32 to vector<1x8x8xf32>
    %747 = arith.addf %744, %746 : vector<1x8x8xf32>
    %cst_692 = arith.constant 0.000000e+00 : f32
    %748 = vector.broadcast %cst_692 : f32 to vector<1x8x8xf32>
    %749 = arith.maximumf %747, %748 : vector<1x8x8xf32>
    %c0_693 = arith.constant 0 : index
    %c0_694 = arith.constant 0 : index
    %c0_695 = arith.constant 0 : index
    %c0_696 = arith.constant 0 : index
    %750 = vector.load %arg8[%c0_693, %c0_694, %c0_695, %c0_696] : memref<1x8x8x8xf32, #tpu.memory_space<vmem>>, vector<1x1x8x8xf32>
    %751 = vector.shape_cast %750 : vector<1x1x8x8xf32> to vector<1x8x8xf32>
    %752 = vector.shape_cast %749 : vector<1x8x8xf32> to vector<1x1x8x8xf32>
    tpu.vector_store %arg8[%c0_693, %c0_694, %c0_695, %c0_696], %752 {strides = array<i32>} : memref<1x8x8x8xf32, #tpu.memory_space<vmem>>, vector<1x1x8x8xf32>,
    %c0_697 = arith.constant 0 : index
    %c1_698 = arith.constant 1 : index
    %753 = memref.load %arg6[%c0_697, %c1_698] : memref<8x8xf32, #tpu.memory_space<smem>>
    %754 = vector.broadcast %753 : f32 to vector<1x8x8xf32>
    %755 = arith.mulf %398, %754 : vector<1x8x8xf32>
    %c1_699 = arith.constant 1 : index
    %c1_700 = arith.constant 1 : index
    %756 = memref.load %arg6[%c1_699, %c1_700] : memref<8x8xf32, #tpu.memory_space<smem>>
    %757 = vector.broadcast %756 : f32 to vector<1x8x8xf32>
    %758 = arith.mulf %443, %757 : vector<1x8x8xf32>
    %759 = arith.addf %755, %758 : vector<1x8x8xf32>
    %c2_701 = arith.constant 2 : index
    %c1_702 = arith.constant 1 : index
    %760 = memref.load %arg6[%c2_701, %c1_702] : memref<8x8xf32, #tpu.memory_space<smem>>
    %761 = vector.broadcast %760 : f32 to vector<1x8x8xf32>
    %762 = arith.mulf %488, %761 : vector<1x8x8xf32>
    %763 = arith.addf %759, %762 : vector<1x8x8xf32>
    %c3_703 = arith.constant 3 : index
    %c1_704 = arith.constant 1 : index
    %764 = memref.load %arg6[%c3_703, %c1_704] : memref<8x8xf32, #tpu.memory_space<smem>>
    %765 = vector.broadcast %764 : f32 to vector<1x8x8xf32>
    %766 = arith.mulf %533, %765 : vector<1x8x8xf32>
    %767 = arith.addf %763, %766 : vector<1x8x8xf32>
    %c4_705 = arith.constant 4 : index
    %c1_706 = arith.constant 1 : index
    %768 = memref.load %arg6[%c4_705, %c1_706] : memref<8x8xf32, #tpu.memory_space<smem>>
    %769 = vector.broadcast %768 : f32 to vector<1x8x8xf32>
    %770 = arith.mulf %578, %769 : vector<1x8x8xf32>
    %771 = arith.addf %767, %770 : vector<1x8x8xf32>
    %c5_707 = arith.constant 5 : index
    %c1_708 = arith.constant 1 : index
    %772 = memref.load %arg6[%c5_707, %c1_708] : memref<8x8xf32, #tpu.memory_space<smem>>
    %773 = vector.broadcast %772 : f32 to vector<1x8x8xf32>
    %774 = arith.mulf %623, %773 : vector<1x8x8xf32>
    %775 = arith.addf %771, %774 : vector<1x8x8xf32>
    %c6_709 = arith.constant 6 : index
    %c1_710 = arith.constant 1 : index
    %776 = memref.load %arg6[%c6_709, %c1_710] : memref<8x8xf32, #tpu.memory_space<smem>>
    %777 = vector.broadcast %776 : f32 to vector<1x8x8xf32>
    %778 = arith.mulf %668, %777 : vector<1x8x8xf32>
    %779 = arith.addf %775, %778 : vector<1x8x8xf32>
    %c7_711 = arith.constant 7 : index
    %c1_712 = arith.constant 1 : index
    %780 = memref.load %arg6[%c7_711, %c1_712] : memref<8x8xf32, #tpu.memory_space<smem>>
    %781 = vector.broadcast %780 : f32 to vector<1x8x8xf32>
    %782 = arith.mulf %713, %781 : vector<1x8x8xf32>
    %783 = arith.addf %779, %782 : vector<1x8x8xf32>
    %c1_713 = arith.constant 1 : index
    %784 = memref.load %arg7[%c1_713] : memref<8xf32, #tpu.memory_space<smem>>
    %785 = vector.broadcast %784 : f32 to vector<1x8x8xf32>
    %786 = arith.addf %783, %785 : vector<1x8x8xf32>
    %cst_714 = arith.constant 0.000000e+00 : f32
    %787 = vector.broadcast %cst_714 : f32 to vector<1x8x8xf32>
    %788 = arith.maximumf %786, %787 : vector<1x8x8xf32>
    %c0_715 = arith.constant 0 : index
    %c1_716 = arith.constant 1 : index
    %c0_717 = arith.constant 0 : index
    %c0_718 = arith.constant 0 : index
    %789 = vector.load %arg8[%c0_715, %c1_716, %c0_717, %c0_718] : memref<1x8x8x8xf32, #tpu.memory_space<vmem>>, vector<1x1x8x8xf32>
    %790 = vector.shape_cast %789 : vector<1x1x8x8xf32> to vector<1x8x8xf32>
    %791 = vector.shape_cast %788 : vector<1x8x8xf32> to vector<1x1x8x8xf32>
    tpu.vector_store %arg8[%c0_715, %c1_716, %c0_717, %c0_718], %791 {strides = array<i32>} : memref<1x8x8x8xf32, #tpu.memory_space<vmem>>, vector<1x1x8x8xf32>,
    %c0_719 = arith.constant 0 : index
    %c2_720 = arith.constant 2 : index
    %792 = memref.load %arg6[%c0_719, %c2_720] : memref<8x8xf32, #tpu.memory_space<smem>>
    %793 = vector.broadcast %792 : f32 to vector<1x8x8xf32>
    %794 = arith.mulf %398, %793 : vector<1x8x8xf32>
    %c1_721 = arith.constant 1 : index
    %c2_722 = arith.constant 2 : index
    %795 = memref.load %arg6[%c1_721, %c2_722] : memref<8x8xf32, #tpu.memory_space<smem>>
    %796 = vector.broadcast %795 : f32 to vector<1x8x8xf32>
    %797 = arith.mulf %443, %796 : vector<1x8x8xf32>
    %798 = arith.addf %794, %797 : vector<1x8x8xf32>
    %c2_723 = arith.constant 2 : index
    %c2_724 = arith.constant 2 : index
    %799 = memref.load %arg6[%c2_723, %c2_724] : memref<8x8xf32, #tpu.memory_space<smem>>
    %800 = vector.broadcast %799 : f32 to vector<1x8x8xf32>
    %801 = arith.mulf %488, %800 : vector<1x8x8xf32>
    %802 = arith.addf %798, %801 : vector<1x8x8xf32>
    %c3_725 = arith.constant 3 : index
    %c2_726 = arith.constant 2 : index
    %803 = memref.load %arg6[%c3_725, %c2_726] : memref<8x8xf32, #tpu.memory_space<smem>>
    %804 = vector.broadcast %803 : f32 to vector<1x8x8xf32>
    %805 = arith.mulf %533, %804 : vector<1x8x8xf32>
    %806 = arith.addf %802, %805 : vector<1x8x8xf32>
    %c4_727 = arith.constant 4 : index
    %c2_728 = arith.constant 2 : index
    %807 = memref.load %arg6[%c4_727, %c2_728] : memref<8x8xf32, #tpu.memory_space<smem>>
    %808 = vector.broadcast %807 : f32 to vector<1x8x8xf32>
    %809 = arith.mulf %578, %808 : vector<1x8x8xf32>
    %810 = arith.addf %806, %809 : vector<1x8x8xf32>
    %c5_729 = arith.constant 5 : index
    %c2_730 = arith.constant 2 : index
    %811 = memref.load %arg6[%c5_729, %c2_730] : memref<8x8xf32, #tpu.memory_space<smem>>
    %812 = vector.broadcast %811 : f32 to vector<1x8x8xf32>
    %813 = arith.mulf %623, %812 : vector<1x8x8xf32>
    %814 = arith.addf %810, %813 : vector<1x8x8xf32>
    %c6_731 = arith.constant 6 : index
    %c2_732 = arith.constant 2 : index
    %815 = memref.load %arg6[%c6_731, %c2_732] : memref<8x8xf32, #tpu.memory_space<smem>>
    %816 = vector.broadcast %815 : f32 to vector<1x8x8xf32>
    %817 = arith.mulf %668, %816 : vector<1x8x8xf32>
    %818 = arith.addf %814, %817 : vector<1x8x8xf32>
    %c7_733 = arith.constant 7 : index
    %c2_734 = arith.constant 2 : index
    %819 = memref.load %arg6[%c7_733, %c2_734] : memref<8x8xf32, #tpu.memory_space<smem>>
    %820 = vector.broadcast %819 : f32 to vector<1x8x8xf32>
    %821 = arith.mulf %713, %820 : vector<1x8x8xf32>
    %822 = arith.addf %818, %821 : vector<1x8x8xf32>
    %c2_735 = arith.constant 2 : index
    %823 = memref.load %arg7[%c2_735] : memref<8xf32, #tpu.memory_space<smem>>
    %824 = vector.broadcast %823 : f32 to vector<1x8x8xf32>
    %825 = arith.addf %822, %824 : vector<1x8x8xf32>
    %cst_736 = arith.constant 0.000000e+00 : f32
    %826 = vector.broadcast %cst_736 : f32 to vector<1x8x8xf32>
    %827 = arith.maximumf %825, %826 : vector<1x8x8xf32>
    %c0_737 = arith.constant 0 : index
    %c2_738 = arith.constant 2 : index
    %c0_739 = arith.constant 0 : index
    %c0_740 = arith.constant 0 : index
    %828 = vector.load %arg8[%c0_737, %c2_738, %c0_739, %c0_740] : memref<1x8x8x8xf32, #tpu.memory_space<vmem>>, vector<1x1x8x8xf32>
    %829 = vector.shape_cast %828 : vector<1x1x8x8xf32> to vector<1x8x8xf32>
    %830 = vector.shape_cast %827 : vector<1x8x8xf32> to vector<1x1x8x8xf32>
    tpu.vector_store %arg8[%c0_737, %c2_738, %c0_739, %c0_740], %830 {strides = array<i32>} : memref<1x8x8x8xf32, #tpu.memory_space<vmem>>, vector<1x1x8x8xf32>,
    %c0_741 = arith.constant 0 : index
    %c3_742 = arith.constant 3 : index
    %831 = memref.load %arg6[%c0_741, %c3_742] : memref<8x8xf32, #tpu.memory_space<smem>>
    %832 = vector.broadcast %831 : f32 to vector<1x8x8xf32>
    %833 = arith.mulf %398, %832 : vector<1x8x8xf32>
    %c1_743 = arith.constant 1 : index
    %c3_744 = arith.constant 3 : index
    %834 = memref.load %arg6[%c1_743, %c3_744] : memref<8x8xf32, #tpu.memory_space<smem>>
    %835 = vector.broadcast %834 : f32 to vector<1x8x8xf32>
    %836 = arith.mulf %443, %835 : vector<1x8x8xf32>
    %837 = arith.addf %833, %836 : vector<1x8x8xf32>
    %c2_745 = arith.constant 2 : index
    %c3_746 = arith.constant 3 : index
    %838 = memref.load %arg6[%c2_745, %c3_746] : memref<8x8xf32, #tpu.memory_space<smem>>
    %839 = vector.broadcast %838 : f32 to vector<1x8x8xf32>
    %840 = arith.mulf %488, %839 : vector<1x8x8xf32>
    %841 = arith.addf %837, %840 : vector<1x8x8xf32>
    %c3_747 = arith.constant 3 : index
    %c3_748 = arith.constant 3 : index
    %842 = memref.load %arg6[%c3_747, %c3_748] : memref<8x8xf32, #tpu.memory_space<smem>>
    %843 = vector.broadcast %842 : f32 to vector<1x8x8xf32>
    %844 = arith.mulf %533, %843 : vector<1x8x8xf32>
    %845 = arith.addf %841, %844 : vector<1x8x8xf32>
    %c4_749 = arith.constant 4 : index
    %c3_750 = arith.constant 3 : index
    %846 = memref.load %arg6[%c4_749, %c3_750] : memref<8x8xf32, #tpu.memory_space<smem>>
    %847 = vector.broadcast %846 : f32 to vector<1x8x8xf32>
    %848 = arith.mulf %578, %847 : vector<1x8x8xf32>
    %849 = arith.addf %845, %848 : vector<1x8x8xf32>
    %c5_751 = arith.constant 5 : index
    %c3_752 = arith.constant 3 : index
    %850 = memref.load %arg6[%c5_751, %c3_752] : memref<8x8xf32, #tpu.memory_space<smem>>
    %851 = vector.broadcast %850 : f32 to vector<1x8x8xf32>
    %852 = arith.mulf %623, %851 : vector<1x8x8xf32>
    %853 = arith.addf %849, %852 : vector<1x8x8xf32>
    %c6_753 = arith.constant 6 : index
    %c3_754 = arith.constant 3 : index
    %854 = memref.load %arg6[%c6_753, %c3_754] : memref<8x8xf32, #tpu.memory_space<smem>>
    %855 = vector.broadcast %854 : f32 to vector<1x8x8xf32>
    %856 = arith.mulf %668, %855 : vector<1x8x8xf32>
    %857 = arith.addf %853, %856 : vector<1x8x8xf32>
    %c7_755 = arith.constant 7 : index
    %c3_756 = arith.constant 3 : index
    %858 = memref.load %arg6[%c7_755, %c3_756] : memref<8x8xf32, #tpu.memory_space<smem>>
    %859 = vector.broadcast %858 : f32 to vector<1x8x8xf32>
    %860 = arith.mulf %713, %859 : vector<1x8x8xf32>
    %861 = arith.addf %857, %860 : vector<1x8x8xf32>
    %c3_757 = arith.constant 3 : index
    %862 = memref.load %arg7[%c3_757] : memref<8xf32, #tpu.memory_space<smem>>
    %863 = vector.broadcast %862 : f32 to vector<1x8x8xf32>
    %864 = arith.addf %861, %863 : vector<1x8x8xf32>
    %cst_758 = arith.constant 0.000000e+00 : f32
    %865 = vector.broadcast %cst_758 : f32 to vector<1x8x8xf32>
    %866 = arith.maximumf %864, %865 : vector<1x8x8xf32>
    %c0_759 = arith.constant 0 : index
    %c3_760 = arith.constant 3 : index
    %c0_761 = arith.constant 0 : index
    %c0_762 = arith.constant 0 : index
    %867 = vector.load %arg8[%c0_759, %c3_760, %c0_761, %c0_762] : memref<1x8x8x8xf32, #tpu.memory_space<vmem>>, vector<1x1x8x8xf32>
    %868 = vector.shape_cast %867 : vector<1x1x8x8xf32> to vector<1x8x8xf32>
    %869 = vector.shape_cast %866 : vector<1x8x8xf32> to vector<1x1x8x8xf32>
    tpu.vector_store %arg8[%c0_759, %c3_760, %c0_761, %c0_762], %869 {strides = array<i32>} : memref<1x8x8x8xf32, #tpu.memory_space<vmem>>, vector<1x1x8x8xf32>,
    %c0_763 = arith.constant 0 : index
    %c4_764 = arith.constant 4 : index
    %870 = memref.load %arg6[%c0_763, %c4_764] : memref<8x8xf32, #tpu.memory_space<smem>>
    %871 = vector.broadcast %870 : f32 to vector<1x8x8xf32>
    %872 = arith.mulf %398, %871 : vector<1x8x8xf32>
    %c1_765 = arith.constant 1 : index
    %c4_766 = arith.constant 4 : index
    %873 = memref.load %arg6[%c1_765, %c4_766] : memref<8x8xf32, #tpu.memory_space<smem>>
    %874 = vector.broadcast %873 : f32 to vector<1x8x8xf32>
    %875 = arith.mulf %443, %874 : vector<1x8x8xf32>
    %876 = arith.addf %872, %875 : vector<1x8x8xf32>
    %c2_767 = arith.constant 2 : index
    %c4_768 = arith.constant 4 : index
    %877 = memref.load %arg6[%c2_767, %c4_768] : memref<8x8xf32, #tpu.memory_space<smem>>
    %878 = vector.broadcast %877 : f32 to vector<1x8x8xf32>
    %879 = arith.mulf %488, %878 : vector<1x8x8xf32>
    %880 = arith.addf %876, %879 : vector<1x8x8xf32>
    %c3_769 = arith.constant 3 : index
    %c4_770 = arith.constant 4 : index
    %881 = memref.load %arg6[%c3_769, %c4_770] : memref<8x8xf32, #tpu.memory_space<smem>>
    %882 = vector.broadcast %881 : f32 to vector<1x8x8xf32>
    %883 = arith.mulf %533, %882 : vector<1x8x8xf32>
    %884 = arith.addf %880, %883 : vector<1x8x8xf32>
    %c4_771 = arith.constant 4 : index
    %c4_772 = arith.constant 4 : index
    %885 = memref.load %arg6[%c4_771, %c4_772] : memref<8x8xf32, #tpu.memory_space<smem>>
    %886 = vector.broadcast %885 : f32 to vector<1x8x8xf32>
    %887 = arith.mulf %578, %886 : vector<1x8x8xf32>
    %888 = arith.addf %884, %887 : vector<1x8x8xf32>
    %c5_773 = arith.constant 5 : index
    %c4_774 = arith.constant 4 : index
    %889 = memref.load %arg6[%c5_773, %c4_774] : memref<8x8xf32, #tpu.memory_space<smem>>
    %890 = vector.broadcast %889 : f32 to vector<1x8x8xf32>
    %891 = arith.mulf %623, %890 : vector<1x8x8xf32>
    %892 = arith.addf %888, %891 : vector<1x8x8xf32>
    %c6_775 = arith.constant 6 : index
    %c4_776 = arith.constant 4 : index
    %893 = memref.load %arg6[%c6_775, %c4_776] : memref<8x8xf32, #tpu.memory_space<smem>>
    %894 = vector.broadcast %893 : f32 to vector<1x8x8xf32>
    %895 = arith.mulf %668, %894 : vector<1x8x8xf32>
    %896 = arith.addf %892, %895 : vector<1x8x8xf32>
    %c7_777 = arith.constant 7 : index
    %c4_778 = arith.constant 4 : index
    %897 = memref.load %arg6[%c7_777, %c4_778] : memref<8x8xf32, #tpu.memory_space<smem>>
    %898 = vector.broadcast %897 : f32 to vector<1x8x8xf32>
    %899 = arith.mulf %713, %898 : vector<1x8x8xf32>
    %900 = arith.addf %896, %899 : vector<1x8x8xf32>
    %c4_779 = arith.constant 4 : index
    %901 = memref.load %arg7[%c4_779] : memref<8xf32, #tpu.memory_space<smem>>
    %902 = vector.broadcast %901 : f32 to vector<1x8x8xf32>
    %903 = arith.addf %900, %902 : vector<1x8x8xf32>
    %cst_780 = arith.constant 0.000000e+00 : f32
    %904 = vector.broadcast %cst_780 : f32 to vector<1x8x8xf32>
    %905 = arith.maximumf %903, %904 : vector<1x8x8xf32>
    %c0_781 = arith.constant 0 : index
    %c4_782 = arith.constant 4 : index
    %c0_783 = arith.constant 0 : index
    %c0_784 = arith.constant 0 : index
    %906 = vector.load %arg8[%c0_781, %c4_782, %c0_783, %c0_784] : memref<1x8x8x8xf32, #tpu.memory_space<vmem>>, vector<1x1x8x8xf32>
    %907 = vector.shape_cast %906 : vector<1x1x8x8xf32> to vector<1x8x8xf32>
    %908 = vector.shape_cast %905 : vector<1x8x8xf32> to vector<1x1x8x8xf32>
    tpu.vector_store %arg8[%c0_781, %c4_782, %c0_783, %c0_784], %908 {strides = array<i32>} : memref<1x8x8x8xf32, #tpu.memory_space<vmem>>, vector<1x1x8x8xf32>,
    %c0_785 = arith.constant 0 : index
    %c5_786 = arith.constant 5 : index
    %909 = memref.load %arg6[%c0_785, %c5_786] : memref<8x8xf32, #tpu.memory_space<smem>>
    %910 = vector.broadcast %909 : f32 to vector<1x8x8xf32>
    %911 = arith.mulf %398, %910 : vector<1x8x8xf32>
    %c1_787 = arith.constant 1 : index
    %c5_788 = arith.constant 5 : index
    %912 = memref.load %arg6[%c1_787, %c5_788] : memref<8x8xf32, #tpu.memory_space<smem>>
    %913 = vector.broadcast %912 : f32 to vector<1x8x8xf32>
    %914 = arith.mulf %443, %913 : vector<1x8x8xf32>
    %915 = arith.addf %911, %914 : vector<1x8x8xf32>
    %c2_789 = arith.constant 2 : index
    %c5_790 = arith.constant 5 : index
    %916 = memref.load %arg6[%c2_789, %c5_790] : memref<8x8xf32, #tpu.memory_space<smem>>
    %917 = vector.broadcast %916 : f32 to vector<1x8x8xf32>
    %918 = arith.mulf %488, %917 : vector<1x8x8xf32>
    %919 = arith.addf %915, %918 : vector<1x8x8xf32>
    %c3_791 = arith.constant 3 : index
    %c5_792 = arith.constant 5 : index
    %920 = memref.load %arg6[%c3_791, %c5_792] : memref<8x8xf32, #tpu.memory_space<smem>>
    %921 = vector.broadcast %920 : f32 to vector<1x8x8xf32>
    %922 = arith.mulf %533, %921 : vector<1x8x8xf32>
    %923 = arith.addf %919, %922 : vector<1x8x8xf32>
    %c4_793 = arith.constant 4 : index
    %c5_794 = arith.constant 5 : index
    %924 = memref.load %arg6[%c4_793, %c5_794] : memref<8x8xf32, #tpu.memory_space<smem>>
    %925 = vector.broadcast %924 : f32 to vector<1x8x8xf32>
    %926 = arith.mulf %578, %925 : vector<1x8x8xf32>
    %927 = arith.addf %923, %926 : vector<1x8x8xf32>
    %c5_795 = arith.constant 5 : index
    %c5_796 = arith.constant 5 : index
    %928 = memref.load %arg6[%c5_795, %c5_796] : memref<8x8xf32, #tpu.memory_space<smem>>
    %929 = vector.broadcast %928 : f32 to vector<1x8x8xf32>
    %930 = arith.mulf %623, %929 : vector<1x8x8xf32>
    %931 = arith.addf %927, %930 : vector<1x8x8xf32>
    %c6_797 = arith.constant 6 : index
    %c5_798 = arith.constant 5 : index
    %932 = memref.load %arg6[%c6_797, %c5_798] : memref<8x8xf32, #tpu.memory_space<smem>>
    %933 = vector.broadcast %932 : f32 to vector<1x8x8xf32>
    %934 = arith.mulf %668, %933 : vector<1x8x8xf32>
    %935 = arith.addf %931, %934 : vector<1x8x8xf32>
    %c7_799 = arith.constant 7 : index
    %c5_800 = arith.constant 5 : index
    %936 = memref.load %arg6[%c7_799, %c5_800] : memref<8x8xf32, #tpu.memory_space<smem>>
    %937 = vector.broadcast %936 : f32 to vector<1x8x8xf32>
    %938 = arith.mulf %713, %937 : vector<1x8x8xf32>
    %939 = arith.addf %935, %938 : vector<1x8x8xf32>
    %c5_801 = arith.constant 5 : index
    %940 = memref.load %arg7[%c5_801] : memref<8xf32, #tpu.memory_space<smem>>
    %941 = vector.broadcast %940 : f32 to vector<1x8x8xf32>
    %942 = arith.addf %939, %941 : vector<1x8x8xf32>
    %cst_802 = arith.constant 0.000000e+00 : f32
    %943 = vector.broadcast %cst_802 : f32 to vector<1x8x8xf32>
    %944 = arith.maximumf %942, %943 : vector<1x8x8xf32>
    %c0_803 = arith.constant 0 : index
    %c5_804 = arith.constant 5 : index
    %c0_805 = arith.constant 0 : index
    %c0_806 = arith.constant 0 : index
    %945 = vector.load %arg8[%c0_803, %c5_804, %c0_805, %c0_806] : memref<1x8x8x8xf32, #tpu.memory_space<vmem>>, vector<1x1x8x8xf32>
    %946 = vector.shape_cast %945 : vector<1x1x8x8xf32> to vector<1x8x8xf32>
    %947 = vector.shape_cast %944 : vector<1x8x8xf32> to vector<1x1x8x8xf32>
    tpu.vector_store %arg8[%c0_803, %c5_804, %c0_805, %c0_806], %947 {strides = array<i32>} : memref<1x8x8x8xf32, #tpu.memory_space<vmem>>, vector<1x1x8x8xf32>,
    %c0_807 = arith.constant 0 : index
    %c6_808 = arith.constant 6 : index
    %948 = memref.load %arg6[%c0_807, %c6_808] : memref<8x8xf32, #tpu.memory_space<smem>>
    %949 = vector.broadcast %948 : f32 to vector<1x8x8xf32>
    %950 = arith.mulf %398, %949 : vector<1x8x8xf32>
    %c1_809 = arith.constant 1 : index
    %c6_810 = arith.constant 6 : index
    %951 = memref.load %arg6[%c1_809, %c6_810] : memref<8x8xf32, #tpu.memory_space<smem>>
    %952 = vector.broadcast %951 : f32 to vector<1x8x8xf32>
    %953 = arith.mulf %443, %952 : vector<1x8x8xf32>
    %954 = arith.addf %950, %953 : vector<1x8x8xf32>
    %c2_811 = arith.constant 2 : index
    %c6_812 = arith.constant 6 : index
    %955 = memref.load %arg6[%c2_811, %c6_812] : memref<8x8xf32, #tpu.memory_space<smem>>
    %956 = vector.broadcast %955 : f32 to vector<1x8x8xf32>
    %957 = arith.mulf %488, %956 : vector<1x8x8xf32>
    %958 = arith.addf %954, %957 : vector<1x8x8xf32>
    %c3_813 = arith.constant 3 : index
    %c6_814 = arith.constant 6 : index
    %959 = memref.load %arg6[%c3_813, %c6_814] : memref<8x8xf32, #tpu.memory_space<smem>>
    %960 = vector.broadcast %959 : f32 to vector<1x8x8xf32>
    %961 = arith.mulf %533, %960 : vector<1x8x8xf32>
    %962 = arith.addf %958, %961 : vector<1x8x8xf32>
    %c4_815 = arith.constant 4 : index
    %c6_816 = arith.constant 6 : index
    %963 = memref.load %arg6[%c4_815, %c6_816] : memref<8x8xf32, #tpu.memory_space<smem>>
    %964 = vector.broadcast %963 : f32 to vector<1x8x8xf32>
    %965 = arith.mulf %578, %964 : vector<1x8x8xf32>
    %966 = arith.addf %962, %965 : vector<1x8x8xf32>
    %c5_817 = arith.constant 5 : index
    %c6_818 = arith.constant 6 : index
    %967 = memref.load %arg6[%c5_817, %c6_818] : memref<8x8xf32, #tpu.memory_space<smem>>
    %968 = vector.broadcast %967 : f32 to vector<1x8x8xf32>
    %969 = arith.mulf %623, %968 : vector<1x8x8xf32>
    %970 = arith.addf %966, %969 : vector<1x8x8xf32>
    %c6_819 = arith.constant 6 : index
    %c6_820 = arith.constant 6 : index
    %971 = memref.load %arg6[%c6_819, %c6_820] : memref<8x8xf32, #tpu.memory_space<smem>>
    %972 = vector.broadcast %971 : f32 to vector<1x8x8xf32>
    %973 = arith.mulf %668, %972 : vector<1x8x8xf32>
    %974 = arith.addf %970, %973 : vector<1x8x8xf32>
    %c7_821 = arith.constant 7 : index
    %c6_822 = arith.constant 6 : index
    %975 = memref.load %arg6[%c7_821, %c6_822] : memref<8x8xf32, #tpu.memory_space<smem>>
    %976 = vector.broadcast %975 : f32 to vector<1x8x8xf32>
    %977 = arith.mulf %713, %976 : vector<1x8x8xf32>
    %978 = arith.addf %974, %977 : vector<1x8x8xf32>
    %c6_823 = arith.constant 6 : index
    %979 = memref.load %arg7[%c6_823] : memref<8xf32, #tpu.memory_space<smem>>
    %980 = vector.broadcast %979 : f32 to vector<1x8x8xf32>
    %981 = arith.addf %978, %980 : vector<1x8x8xf32>
    %cst_824 = arith.constant 0.000000e+00 : f32
    %982 = vector.broadcast %cst_824 : f32 to vector<1x8x8xf32>
    %983 = arith.maximumf %981, %982 : vector<1x8x8xf32>
    %c0_825 = arith.constant 0 : index
    %c6_826 = arith.constant 6 : index
    %c0_827 = arith.constant 0 : index
    %c0_828 = arith.constant 0 : index
    %984 = vector.load %arg8[%c0_825, %c6_826, %c0_827, %c0_828] : memref<1x8x8x8xf32, #tpu.memory_space<vmem>>, vector<1x1x8x8xf32>
    %985 = vector.shape_cast %984 : vector<1x1x8x8xf32> to vector<1x8x8xf32>
    %986 = vector.shape_cast %983 : vector<1x8x8xf32> to vector<1x1x8x8xf32>
    tpu.vector_store %arg8[%c0_825, %c6_826, %c0_827, %c0_828], %986 {strides = array<i32>} : memref<1x8x8x8xf32, #tpu.memory_space<vmem>>, vector<1x1x8x8xf32>,
    %c0_829 = arith.constant 0 : index
    %c7_830 = arith.constant 7 : index
    %987 = memref.load %arg6[%c0_829, %c7_830] : memref<8x8xf32, #tpu.memory_space<smem>>
    %988 = vector.broadcast %987 : f32 to vector<1x8x8xf32>
    %989 = arith.mulf %398, %988 : vector<1x8x8xf32>
    %c1_831 = arith.constant 1 : index
    %c7_832 = arith.constant 7 : index
    %990 = memref.load %arg6[%c1_831, %c7_832] : memref<8x8xf32, #tpu.memory_space<smem>>
    %991 = vector.broadcast %990 : f32 to vector<1x8x8xf32>
    %992 = arith.mulf %443, %991 : vector<1x8x8xf32>
    %993 = arith.addf %989, %992 : vector<1x8x8xf32>
    %c2_833 = arith.constant 2 : index
    %c7_834 = arith.constant 7 : index
    %994 = memref.load %arg6[%c2_833, %c7_834] : memref<8x8xf32, #tpu.memory_space<smem>>
    %995 = vector.broadcast %994 : f32 to vector<1x8x8xf32>
    %996 = arith.mulf %488, %995 : vector<1x8x8xf32>
    %997 = arith.addf %993, %996 : vector<1x8x8xf32>
    %c3_835 = arith.constant 3 : index
    %c7_836 = arith.constant 7 : index
    %998 = memref.load %arg6[%c3_835, %c7_836] : memref<8x8xf32, #tpu.memory_space<smem>>
    %999 = vector.broadcast %998 : f32 to vector<1x8x8xf32>
    %1000 = arith.mulf %533, %999 : vector<1x8x8xf32>
    %1001 = arith.addf %997, %1000 : vector<1x8x8xf32>
    %c4_837 = arith.constant 4 : index
    %c7_838 = arith.constant 7 : index
    %1002 = memref.load %arg6[%c4_837, %c7_838] : memref<8x8xf32, #tpu.memory_space<smem>>
    %1003 = vector.broadcast %1002 : f32 to vector<1x8x8xf32>
    %1004 = arith.mulf %578, %1003 : vector<1x8x8xf32>
    %1005 = arith.addf %1001, %1004 : vector<1x8x8xf32>
    %c5_839 = arith.constant 5 : index
    %c7_840 = arith.constant 7 : index
    %1006 = memref.load %arg6[%c5_839, %c7_840] : memref<8x8xf32, #tpu.memory_space<smem>>
    %1007 = vector.broadcast %1006 : f32 to vector<1x8x8xf32>
    %1008 = arith.mulf %623, %1007 : vector<1x8x8xf32>
    %1009 = arith.addf %1005, %1008 : vector<1x8x8xf32>
    %c6_841 = arith.constant 6 : index
    %c7_842 = arith.constant 7 : index
    %1010 = memref.load %arg6[%c6_841, %c7_842] : memref<8x8xf32, #tpu.memory_space<smem>>
    %1011 = vector.broadcast %1010 : f32 to vector<1x8x8xf32>
    %1012 = arith.mulf %668, %1011 : vector<1x8x8xf32>
    %1013 = arith.addf %1009, %1012 : vector<1x8x8xf32>
    %c7_843 = arith.constant 7 : index
    %c7_844 = arith.constant 7 : index
    %1014 = memref.load %arg6[%c7_843, %c7_844] : memref<8x8xf32, #tpu.memory_space<smem>>
    %1015 = vector.broadcast %1014 : f32 to vector<1x8x8xf32>
    %1016 = arith.mulf %713, %1015 : vector<1x8x8xf32>
    %1017 = arith.addf %1013, %1016 : vector<1x8x8xf32>
    %c7_845 = arith.constant 7 : index
    %1018 = memref.load %arg7[%c7_845] : memref<8xf32, #tpu.memory_space<smem>>
    %1019 = vector.broadcast %1018 : f32 to vector<1x8x8xf32>
    %1020 = arith.addf %1017, %1019 : vector<1x8x8xf32>
    %cst_846 = arith.constant 0.000000e+00 : f32
    %1021 = vector.broadcast %cst_846 : f32 to vector<1x8x8xf32>
    %1022 = arith.maximumf %1020, %1021 : vector<1x8x8xf32>
    %c0_847 = arith.constant 0 : index
    %c7_848 = arith.constant 7 : index
    %c0_849 = arith.constant 0 : index
    %c0_850 = arith.constant 0 : index
    %1023 = vector.load %arg8[%c0_847, %c7_848, %c0_849, %c0_850] : memref<1x8x8x8xf32, #tpu.memory_space<vmem>>, vector<1x1x8x8xf32>
    %1024 = vector.shape_cast %1023 : vector<1x1x8x8xf32> to vector<1x8x8xf32>
    %1025 = vector.shape_cast %1022 : vector<1x8x8xf32> to vector<1x1x8x8xf32>
    tpu.vector_store %arg8[%c0_847, %c7_848, %c0_849, %c0_850], %1025 {strides = array<i32>} : memref<1x8x8x8xf32, #tpu.memory_space<vmem>>, vector<1x1x8x8xf32>,
    return
  }
  func.func @transform_0(%arg0: i32) -> (i32, i32, i32, i32) {
    %c0_i32 = arith.constant 0 : i32
    %c0_i32_0 = arith.constant 0 : i32
    %c0_i32_1 = arith.constant 0 : i32
    %c0_i32_2 = arith.constant 0 : i32
    return %arg0, %c0_i32, %c0_i32_0, %c0_i32_1 : i32, i32, i32, i32
  }
  func.func @transform_1(%arg0: i32) -> (i32, i32) {
    %c0_i32 = arith.constant 0 : i32
    %c0_i32_0 = arith.constant 0 : i32
    %c0_i32_1 = arith.constant 0 : i32
    return %c0_i32, %c0_i32_0 : i32, i32
  }
  func.func @transform_2(%arg0: i32) -> (i32, i32) {
    %c0_i32 = arith.constant 0 : i32
    %c0_i32_0 = arith.constant 0 : i32
    %c0_i32_1 = arith.constant 0 : i32
    return %c0_i32, %c0_i32_0 : i32, i32
  }
  func.func @transform_3(%arg0: i32) -> i32 {
    %c0_i32 = arith.constant 0 : i32
    %c0_i32_0 = arith.constant 0 : i32
    return %c0_i32 : i32
  }
  func.func @transform_4(%arg0: i32) -> (i32, i32) {
    %c0_i32 = arith.constant 0 : i32
    %c0_i32_0 = arith.constant 0 : i32
    %c0_i32_1 = arith.constant 0 : i32
    return %c0_i32, %c0_i32_0 : i32, i32
  }
  func.func @transform_5(%arg0: i32) -> (i32, i32) {
    %c0_i32 = arith.constant 0 : i32
    %c0_i32_0 = arith.constant 0 : i32
    %c0_i32_1 = arith.constant 0 : i32
    return %c0_i32, %c0_i32_0 : i32, i32
  }
  func.func @transform_6(%arg0: i32) -> i32 {
    %c0_i32 = arith.constant 0 : i32
    %c0_i32_0 = arith.constant 0 : i32
    return %c0_i32 : i32
  }
  func.func @transform_7(%arg0: i32) -> (i32, i32, i32, i32) {
    %c0_i32 = arith.constant 0 : i32
    %c0_i32_0 = arith.constant 0 : i32
    %c0_i32_1 = arith.constant 0 : i32
    %c0_i32_2 = arith.constant 0 : i32
    return %arg0, %c0_i32, %c0_i32_0, %c0_i32_1 : i32, i32, i32, i32
  }
}

</mosaic_0001>

<llo_original>
// kernel: down_forward.1
$region0: #{down_forward.1}
  #allocation0 [shape = 'u32[]', space=smem, size = 0x4, offset = 0x4, fixed_abs, tag = 'smem constant byte address 0x4 - core index']
  #allocation1 [shape = 'u32[144,128]{1,0:T(1,128)}', space=vmem, size = 0x12000, scoped, tag = 'internal scratch']
  #allocation2 [shape = 'f32[1,10,10]{2,1,0:T(8,128)}', space=vmem, size = 0x2000, scoped, tag = 'scratch operand']
  %s0 = inlined_call_operand.vmem [shape: f32[2,4,8,8], index: 0, kind: input, shape index: {}]
  %s1 = inlined_call_operand.vmem [shape: f32[4,9], index: 1, kind: input, shape index: {}]
  %s2 = inlined_call_operand.vmem [shape: f32[4,8], index: 2, kind: input, shape index: {}]
  %s3 = inlined_call_operand.vmem [shape: f32[8], index: 3, kind: input, shape index: {}]
  %s4 = inlined_call_operand.vmem [shape: f32[8,9], index: 4, kind: input, shape index: {}]
  %s5 = inlined_call_operand.vmem [shape: f32[8,8], index: 5, kind: input, shape index: {}]
  %s6 = inlined_call_operand.vmem [shape: f32[8], index: 6, kind: input, shape index: {}]
  %s7 = inlined_call_operand.hbm [shape: f32[2,8,8,8], index: 7, kind: output, shape index: {}]
  %s8 = sld [smem:[#allocation0]]
  $region85: #{down_forward.1} parent=0
    _
  %s10 = ssub.s32 1, %s8
  %s11 = scalar_select 0, %s10, %s8
  $region1: #{down_forward.1} parent=0
    #allocation3 [shape = 'u8[2048]{0}', space=smem, size = 0x800, scoped, tag = 'input window, operand 1, single buffered']
    #allocation4 [shape = 's32[2]{0}', space=sflag, size = 0x8, scoped, tag = 'scoped memory for down_forward.1']
    #allocation5 [shape = 's32[2]{0}', space=sflag, size = 0x8, scoped, tag = 'scoped memory for down_forward.1']
    #allocation6 [shape = 'u8[2048]{0}', space=smem, size = 0x800, scoped, tag = 'input window, operand 2, single buffered']
    #allocation7 [shape = 's32[1]{0}', space=sflag, size = 0x4, scoped, tag = 'scoped memory for down_forward.1']
    #allocation8 [shape = 'u8[512]{0}', space=smem, size = 0x200, scoped, tag = 'input window, operand 3, single buffered']
    #allocation9 [shape = 'u8[4096]{0}', space=smem, size = 0x1000, scoped, tag = 'input window, operand 4, single buffered']
    #allocation10 [shape = 's32[1]{0}', space=sflag, size = 0x4, scoped, tag = 'scoped memory for down_forward.1']
    #allocation11 [shape = 'u8[4096]{0}', space=smem, size = 0x1000, scoped, tag = 'input window, operand 5, single buffered']
    #allocation12 [shape = 'u8[512]{0}', space=smem, size = 0x200, scoped, tag = 'input window, operand 6, single buffered']
    #allocation13 [shape = 's32[1]{0}', space=sflag, size = 0x4, scoped, tag = 'scoped memory for down_forward.1']
    #allocation14 [shape = 'u8[65536]{0}', space=vmem, size = 0x10000, scoped, tag = 'output window, operand 0']
    %12 = vsyncpa [#allocation5], 0
    %13 = vsyncpa [#allocation7], 0
    %14 = vsyncpa [#allocation10], 0
    %15 = vsyncpa [#allocation13], 0
    %16 = vsyncpa [#allocation4], 0
    %s17 = scalar_lea.sflag [#allocation4], 1
    %18 = vsyncpa %s17, 0
    loop: start=0, step=1, limit=4
    $region2: #{down_forward.1} parent=1 // loop_pre_header
      _
    $region3: #{down_forward.1} parent=1 // loop_header
      %s20 = sphi 0, %s24
      %p21 = scmp.ge.s32.totalorder %s20, 4
      %s30 = sphi 0, %s32
      %s33 = sphi 0, %s30
      %s34 = sphi 0, %s33
      %s50 = sphi 0, %s34
      %s54 = sphi 0, %s54
      %s56 = sphi 0, %s54
      %s57 = sphi 0, %s56
      %s71 = sphi 0, %s57
      %s75 = sphi 0, %s75
      %s77 = sphi 0, %s75
      %s78 = sphi 0, %s77
      %s92 = sphi 0, %s78
      %s96 = sphi 0, %s96
      %s98 = sphi 0, %s96
      %s99 = sphi 0, %s98
      %s113 = sphi 0, %s99
      %s117 = sphi 0, %s117
      %s119 = sphi 0, %s117
      %s120 = sphi 0, %s119
      %s134 = sphi 0, %s120
      %s138 = sphi 0, %s138
      %s140 = sphi 0, %s138
      %s141 = sphi 0, %s140
      %s155 = sphi 0, %s141
      %s159 = sphi 0, %s159
      %s161 = sphi 0, %s159
      %s162 = sphi 0, %s161
      %s176 = sphi 0, %s162
      %s182 = sphi 0, %s184
      %s185 = sphi 0, %s182
      %s186 = sphi 0, %s185
      %s202 = sphi 0, %s186
    $region4: #{down_forward.1} parent=1 // loop_header_branch
      %23 = sbr.rel (%p21) target = $region8
    $region5: #{down_forward.1} parent=1 // loop_body
      %s25 = ssub.s32 %s20, 1
      %s26 = ssub.s32 %s20, 2
      %s27 = sadd.s32 %s20, 1
      %s28 = ssub.s32 %s20, %s27
      %p29 = scmp.eq.s32.totalorder %s28, 0
      %s31 = sadd.s32 %s30, 1
      %s32 = scalar_select %p29, %s30, %s31
      %p35 = pneg %p29
      %p36 = scmp.eq.s32.totalorder %s20, 1
      %p37 = por %p35, %p36
      %p38 = scmp.ne.s32.totalorder %s30, %s33
      %p39 = scmp.eq.s32.totalorder %s20, 0
      %p40 = por %p38, %p39
      %p41 = scmp.ne.s32.totalorder %s30, %s33
      %p42 = scmp.eq.s32.totalorder %s25, 1
      %p43 = por %p41, %p42
      %p44 = scmp.ne.s32.totalorder %s33, %s34
      %p45 = scmp.eq.s32.totalorder %s25, 0
      %p46 = por %p44, %p45
      %p47 = scmp.ne.s32.totalorder %s33, %s34
      %p48 = scmp.eq.s32.totalorder %s26, 1
      %p49 = por %p47, %p48
      %p51 = scmp.ne.s32.totalorder %s34, %s50
      %p52 = scmp.eq.s32.totalorder %s26, 0
      %p53 = por %p51, %p52
      %s55 = sadd.s32 %s54, 1
      %p58 = scmp.eq.s32.totalorder %s20, 1
      %p59 = scmp.ne.s32.totalorder %s54, %s56
      %p60 = scmp.eq.s32.totalorder %s20, 0
      %p61 = por %p59, %p60
      %p62 = scmp.ne.s32.totalorder %s54, %s56
      %p63 = scmp.eq.s32.totalorder %s25, 1
      %p64 = por %p62, %p63
      %p65 = scmp.ne.s32.totalorder %s56, %s57
      %p66 = scmp.eq.s32.totalorder %s25, 0
      %p67 = por %p65, %p66
      %p68 = scmp.ne.s32.totalorder %s56, %s57
      %p69 = scmp.eq.s32.totalorder %s26, 1
      %p70 = por %p68, %p69
      %p72 = scmp.ne.s32.totalorder %s57, %s71
      %p73 = scmp.eq.s32.totalorder %s26, 0
      %p74 = por %p72, %p73
      %s76 = sadd.s32 %s75, 1
      %p79 = scmp.eq.s32.totalorder %s20, 1
      %p80 = scmp.ne.s32.totalorder %s75, %s77
      %p81 = scmp.eq.s32.totalorder %s20, 0
      %p82 = por %p80, %p81
      %p83 = scmp.ne.s32.totalorder %s75, %s77
      %p84 = scmp.eq.s32.totalorder %s25, 1
      %p85 = por %p83, %p84
      %p86 = scmp.ne.s32.totalorder %s77, %s78
      %p87 = scmp.eq.s32.totalorder %s25, 0
      %p88 = por %p86, %p87
      %p89 = scmp.ne.s32.totalorder %s77, %s78
      %p90 = scmp.eq.s32.totalorder %s26, 1
      %p91 = por %p89, %p90
      %p93 = scmp.ne.s32.totalorder %s78, %s92
      %p94 = scmp.eq.s32.totalorder %s26, 0
      %p95 = por %p93, %p94
      %s97 = sadd.s32 %s96, 1
      %p100 = scmp.eq.s32.totalorder %s20, 1
      %p101 = scmp.ne.s32.totalorder %s96, %s98
      %p102 = scmp.eq.s32.totalorder %s20, 0
      %p103 = por %p101, %p102
      %p104 = scmp.ne.s32.totalorder %s96, %s98
      %p105 = scmp.eq.s32.totalorder %s25, 1
      %p106 = por %p104, %p105
      %p107 = scmp.ne.s32.totalorder %s98, %s99
      %p108 = scmp.eq.s32.totalorder %s25, 0
      %p109 = por %p107, %p108
      %p110 = scmp.ne.s32.totalorder %s98, %s99
      %p111 = scmp.eq.s32.totalorder %s26, 1
      %p112 = por %p110, %p111
      %p114 = scmp.ne.s32.totalorder %s99, %s113
      %p115 = scmp.eq.s32.totalorder %s26, 0
      %p116 = por %p114, %p115
      %s118 = sadd.s32 %s117, 1
      %p121 = scmp.eq.s32.totalorder %s20, 1
      %p122 = scmp.ne.s32.totalorder %s117, %s119
      %p123 = scmp.eq.s32.totalorder %s20, 0
      %p124 = por %p122, %p123
      %p125 = scmp.ne.s32.totalorder %s117, %s119
      %p126 = scmp.eq.s32.totalorder %s25, 1
      %p127 = por %p125, %p126
      %p128 = scmp.ne.s32.totalorder %s119, %s120
      %p129 = scmp.eq.s32.totalorder %s25, 0
      %p130 = por %p128, %p129
      %p131 = scmp.ne.s32.totalorder %s119, %s120
      %p132 = scmp.eq.s32.totalorder %s26, 1
      %p133 = por %p131, %p132
      %p135 = scmp.ne.s32.totalorder %s120, %s134
      %p136 = scmp.eq.s32.totalorder %s26, 0
      %p137 = por %p135, %p136
      %s139 = sadd.s32 %s138, 1
      %p142 = scmp.eq.s32.totalorder %s20, 1
      %p143 = scmp.ne.s32.totalorder %s138, %s140
      %p144 = scmp.eq.s32.totalorder %s20, 0
      %p145 = por %p143, %p144
      %p146 = scmp.ne.s32.totalorder %s138, %s140
      %p147 = scmp.eq.s32.totalorder %s25, 1
      %p148 = por %p146, %p147
      %p149 = scmp.ne.s32.totalorder %s140, %s141
      %p150 = scmp.eq.s32.totalorder %s25, 0
      %p151 = por %p149, %p150
      %p152 = scmp.ne.s32.totalorder %s140, %s141
      %p153 = scmp.eq.s32.totalorder %s26, 1
      %p154 = por %p152, %p153
      %p156 = scmp.ne.s32.totalorder %s141, %s155
      %p157 = scmp.eq.s32.totalorder %s26, 0
      %p158 = por %p156, %p157
      %s160 = sadd.s32 %s159, 1
      %p163 = scmp.eq.s32.totalorder %s20, 1
      %p164 = scmp.ne.s32.totalorder %s159, %s161
      %p165 = scmp.eq.s32.totalorder %s20, 0
      %p166 = por %p164, %p165
      %p167 = scmp.ne.s32.totalorder %s159, %s161
      %p168 = scmp.eq.s32.totalorder %s25, 1
      %p169 = por %p167, %p168
      %p170 = scmp.ne.s32.totalorder %s161, %s162
      %p171 = scmp.eq.s32.totalorder %s25, 0
      %p172 = por %p170, %p171
      %p173 = scmp.ne.s32.totalorder %s161, %s162
      %p174 = scmp.eq.s32.totalorder %s26, 1
      %p175 = por %p173, %p174
      %p177 = scmp.ne.s32.totalorder %s162, %s176
      %p178 = scmp.eq.s32.totalorder %s26, 0
      %p179 = por %p177, %p178
      %s180 = ssub.s32 %s20, %s27
      %p181 = scmp.eq.s32.totalorder %s180, 0
      %s183 = sadd.s32 %s182, 1
      %s184 = scalar_select %p181, %s182, %s183
      %p187 = pneg %p181
      %p188 = scmp.eq.s32.totalorder %s20, 1
      %p189 = por %p187, %p188
      %p190 = scmp.ne.s32.totalorder %s182, %s185
      %p191 = scmp.eq.s32.totalorder %s20, 0
      %p192 = por %p190, %p191
      %p193 = scmp.ne.s32.totalorder %s182, %s185
      %p194 = scmp.eq.s32.totalorder %s25, 1
      %p195 = por %p193, %p194
      %p196 = scmp.ne.s32.totalorder %s185, %s186
      %p197 = scmp.eq.s32.totalorder %s25, 0
      %p198 = por %p196, %p197
      %p199 = scmp.ne.s32.totalorder %s185, %s186
      %p200 = scmp.eq.s32.totalorder %s26, 1
      %p201 = por %p199, %p200
      %p203 = scmp.ne.s32.totalorder %s186, %s202
      %p204 = scmp.eq.s32.totalorder %s26, 0
      %p205 = por %p203, %p204
      %p206 = scmp.le.s32.totalorder 1, %s20
      %p207 = scmp.lt.s32.totalorder %s20, 3
      %p208 = pnand %p206, %p207
      %p209 = pneg %p208
      // Predicated region
      $region9: #{down_forward.1} parent=5 // pred_check
        _
      $region10: #{down_forward.1} parent=5 // pred_check_branch
        %211 = sbr.rel (%p208) target = $region12
      $region11: #{down_forward.1} parent=5 // pred_region
        %s212 = ssub.s32 %s20, 1
        // Predicated region
        $region13: #{down_forward.1} parent=11 // pred_check
          %p213 = pneg %p67
        $region14: #{down_forward.1} parent=11 // pred_check_branch
          %215 = sbr.rel (%p213) target = $region16
        $region15: #{down_forward.1} parent=11 // pred_region
          %s217 = ssub.s32 64, 64
          %218 = vsyncadd [#allocation5], %s217
          %s220 = sshll.u32 %s1, 4
          %s221 = int_to_ptr.vmem [resolvable:$true] %s220
          %223 = dma.vmem_to_smem %s221, 64, [#allocation3], [#allocation5]
        $region16: #{down_forward.1} parent=11 // pred_fallthru
          _
        // Predicated region
        $region17: #{down_forward.1} parent=11 // pred_check
          %p224 = pneg %p88
        $region18: #{down_forward.1} parent=11 // pred_check_branch
          %226 = sbr.rel (%p224) target = $region20
        $region19: #{down_forward.1} parent=11 // pred_region
          %s228 = ssub.s32 64, 64
          %229 = vsyncadd [#allocation7], %s228
          %s231 = sshll.u32 %s2, 4
          %s232 = int_to_ptr.vmem [resolvable:$true] %s231
          %234 = dma.vmem_to_smem %s232, 64, [#allocation6], [#allocation7]
        $region20: #{down_forward.1} parent=11 // pred_fallthru
          _
        // Predicated region
        $region21: #{down_forward.1} parent=11 // pred_check
          %p235 = pneg %p109
        $region22: #{down_forward.1} parent=11 // pred_check_branch
          %237 = sbr.rel (%p235) target = $region24
        $region23: #{down_forward.1} parent=11 // pred_region
          %s239 = ssub.s32 16, 16
          %240 = vsyncadd [#allocation7], %s239
          %s242 = sshll.u32 %s3, 4
          %s243 = int_to_ptr.vmem [resolvable:$true] %s242
          %245 = dma.vmem_to_smem %s243, 16, [#allocation8], [#allocation7]
        $region24: #{down_forward.1} parent=11 // pred_fallthru
          _
        // Predicated region
        $region25: #{down_forward.1} parent=11 // pred_check
          %p246 = pneg %p130
        $region26: #{down_forward.1} parent=11 // pred_check_branch
          %248 = sbr.rel (%p246) target = $region28
        $region27: #{down_forward.1} parent=11 // pred_region
          %s250 = ssub.s32 128, 128
          %251 = vsyncadd [#allocation10], %s250
          %s253 = sshll.u32 %s4, 4
          %s254 = int_to_ptr.vmem [resolvable:$true] %s253
          %256 = dma.vmem_to_smem %s254, 128, [#allocation9], [#allocation10]
        $region28: #{down_forward.1} parent=11 // pred_fallthru
          _
        // Predicated region
        $region29: #{down_forward.1} parent=11 // pred_check
          %p257 = pneg %p151
        $region30: #{down_forward.1} parent=11 // pred_check_branch
          %259 = sbr.rel (%p257) target = $region32
        $region31: #{down_forward.1} parent=11 // pred_region
          %s261 = ssub.s32 128, 128
          %262 = vsyncadd [#allocation10], %s261
          %s264 = sshll.u32 %s5, 4
          %s265 = int_to_ptr.vmem [resolvable:$true] %s264
          %267 = dma.vmem_to_smem %s265, 128, [#allocation11], [#allocation10]
        $region32: #{down_forward.1} parent=11 // pred_fallthru
          _
        // Predicated region
        $region33: #{down_forward.1} parent=11 // pred_check
          %p268 = pneg %p172
        $region34: #{down_forward.1} parent=11 // pred_check_branch
          %270 = sbr.rel (%p268) target = $region36
        $region35: #{down_forward.1} parent=11 // pred_region
          %s272 = ssub.s32 16, 16
          %273 = vsyncadd [#allocation13], %s272
          %s275 = sshll.u32 %s6, 4
          %s276 = int_to_ptr.vmem [resolvable:$true] %s275
          %278 = dma.vmem_to_smem %s276, 16, [#allocation12], [#allocation13]
        $region36: #{down_forward.1} parent=11 // pred_fallthru
          _
      $region12: #{down_forward.1} parent=5 // pred_fallthru
        _
      %p279 = scmp.lt.s32.totalorder %s20, 2
      // Predicated region
      $region37: #{down_forward.1} parent=5 // pred_check
        %p280 = pneg %p279
      $region38: #{down_forward.1} parent=5 // pred_check_branch
        %282 = sbr.rel (%p280) target = $region40
      $region39: #{down_forward.1} parent=5 // pred_region
        // Predicated region
        $region41: #{down_forward.1} parent=39 // pred_check
          %p283 = pneg %p40
        $region42: #{down_forward.1} parent=39 // pred_check_branch
          %285 = sbr.rel (%p283) target = $region44
        $region43: #{down_forward.1} parent=39 // pred_region
          %p286 = scmp.lt.s32.totalorder %s20, 1
          %s287 = scalar_select %p286, %s20, 1
          %s288 = smul.addr %s287, 4
          %s289 = smul.addr %s288, 8
          %s290 = scalar_lea.vmem %s0, %s289
        $region44: #{down_forward.1} parent=39 // pred_fallthru
          _
      $region40: #{down_forward.1} parent=5 // pred_fallthru
        _
      %p291 = scmp.le.s32.totalorder 1, %s20
      %p292 = scmp.lt.s32.totalorder %s20, 3
      %p293 = pnand %p291, %p292
      %p294 = pneg %p293
      // Predicated region
      $region45: #{down_forward.1} parent=5 // pred_check
        _
      $region46: #{down_forward.1} parent=5 // pred_check_branch
        %296 = sbr.rel (%p293) target = $region48
      $region47: #{down_forward.1} parent=5 // pred_region
        %s297 = ssub.s32 %s20, 1
        // Predicated region
        $region49: #{down_forward.1} parent=47 // pred_check
          %p298 = pneg %p67
        $region50: #{down_forward.1} parent=47 // pred_check_branch
          %300 = sbr.rel (%p298) target = $region52
        $region51: #{down_forward.1} parent=47 // pred_region
          %301 = dma.done [#allocation5], 64
        $region52: #{down_forward.1} parent=47 // pred_fallthru
          _
        // Predicated region
        $region53: #{down_forward.1} parent=47 // pred_check
          %p302 = pneg %p88
        $region54: #{down_forward.1} parent=47 // pred_check_branch
          %304 = sbr.rel (%p302) target = $region56
        $region55: #{down_forward.1} parent=47 // pred_region
          %305 = dma.done [#allocation7], 64
        $region56: #{down_forward.1} parent=47 // pred_fallthru
          _
        // Predicated region
        $region57: #{down_forward.1} parent=47 // pred_check
          %p306 = pneg %p109
        $region58: #{down_forward.1} parent=47 // pred_check_branch
          %308 = sbr.rel (%p306) target = $region60
        $region59: #{down_forward.1} parent=47 // pred_region
          %309 = dma.done [#allocation7], 16
        $region60: #{down_forward.1} parent=47 // pred_fallthru
          _
        // Predicated region
        $region61: #{down_forward.1} parent=47 // pred_check
          %p310 = pneg %p130
        $region62: #{down_forward.1} parent=47 // pred_check_branch
          %312 = sbr.rel (%p310) target = $region64
        $region63: #{down_forward.1} parent=47 // pred_region
          %313 = dma.done [#allocation10], 128
        $region64: #{down_forward.1} parent=47 // pred_fallthru
          _
        // Predicated region
        $region65: #{down_forward.1} parent=47 // pred_check
          %p314 = pneg %p151
        $region66: #{down_forward.1} parent=47 // pred_check_branch
          %316 = sbr.rel (%p314) target = $region68
        $region67: #{down_forward.1} parent=47 // pred_region
          %317 = dma.done [#allocation10], 128
        $region68: #{down_forward.1} parent=47 // pred_fallthru
          _
        // Predicated region
        $region69: #{down_forward.1} parent=47 // pred_check
          %p318 = pneg %p172
        $region70: #{down_forward.1} parent=47 // pred_check_branch
          %320 = sbr.rel (%p318) target = $region72
        $region71: #{down_forward.1} parent=47 // pred_region
          %321 = dma.done [#allocation13], 16
        $region72: #{down_forward.1} parent=47 // pred_fallthru
          _
        %322 = sfence
        %p323 = scmp.lt.s32.totalorder %s25, 1
        %s324 = scalar_select %p323, %s25, 1
        %s325 = smul.addr %s324, 4
        %s326 = smul.addr %s325, 8
        %s327 = scalar_lea.vmem %s0, %s326
        %p328 = pneg %p46
        %p329 = pneg %p43
        %p330 = pneg %p67
        %p331 = pneg %p64
        %p332 = pneg %p88
        %p333 = pneg %p85
        %p334 = pneg %p109
        %p335 = pneg %p106
        %p336 = pneg %p130
        %p337 = pneg %p127
        %p338 = pneg %p151
        %p339 = pneg %p148
        %p340 = pneg %p172
        %p341 = pneg %p169
        %p342 = pneg %p198
        %p343 = pneg %p195
        %s344 = sand.u32 %s185, 1
        %s345 = scalar_lea.sflag [#allocation4], %s344
        %s346 = sand.u32 %s185, 1
        %s347 = smul.addr %s346, 64
        %s348 = scalar_lea.vmem [#allocation14], %s347
        %p349 = scmp.lt.s32.totalorder %s25, 1
        %s350 = scalar_select %p349, %s25, 1
        %s351 = smul.addr %s350, 4
        %s352 = smul.addr %s351, 8
        %s353 = scalar_lea.vmem %s0, %s352
        %vm354 = vcmask 73728
        %355 = vst.msk [vmem:[#allocation2] sm:$0x1] %vm354, 0.0
        %356 = vst.msk [vmem:[#allocation2 + $0x9] sm:$0x1] %vm354, 0.0
        %vm357 = vcmask 7168
        %358 = vst.msk [vmem:[#allocation2] sm:$0xff] %vm357, 0.0
        %vm359 = vcmask 1024
        %360 = vst.msk [vmem:[#allocation2 + $0x8] sm:$0x3] %vm359, 0.0
        %vm361 = vcmask 80968
        %362 = vst.msk [vmem:[#allocation2] sm:$0xff] %vm361, 0.0
        %vm363 = vcmask 74824
        %364 = vst.msk [vmem:[#allocation2 + $0x8] sm:$0x3] %vm363, 0.0
        %v365 = vld [vmem:[%s353] sm:$0xff]
        %367 = vrot.lane.b32.xlu0 %v365, 1
        %v368 = vpop.permute.xlu0 %367
        %vm370 = vcmask 72712
        %371 = vst.msk [vmem:[#allocation2 + $0x1] sm:$0xff] %vm370, %v368
        %v372 = vld [vmem:[#allocation2] sm:$0xff]
        %s373 = sld [smem:[#allocation3]]
        %v374 = vstv %s373
        %v375 = vmul.f32 %v372, %v374
        %s376 = sld [smem:[#allocation3 + $0x1]]
        %v377 = vstv %s376
        %v378 = vmul.f32 %v372, %v377
        %380 = vrot.lane.b32.xlu0 %v378, 127
        %v381 = vpop.permute.xlu0 %380
        %v383 = vadd.f32 %v375, %v381
        %s384 = sld [smem:[#allocation3 + $0x2]]
        %v385 = vstv %s384
        %v386 = vmul.f32 %v372, %v385
        %388 = vrot.lane.b32.xlu0 %v386, 126
        %v389 = vpop.permute.xlu0 %388
        %v391 = vadd.f32 %v383, %v389
        %v392 = vld [vmem:[#allocation2 + $0x1] sm:$0xff]
        %s393 = sld [smem:[#allocation3 + $0x3]]
        %v394 = vstv %s393
        %v395 = vmul.f32 %v392, %v394
        %v396 = vadd.f32 %v391, %v395
        %s397 = sld [smem:[#allocation3 + $0x4]]
        %v398 = vstv %s397
        %v399 = vmul.f32 %v392, %v398
        %401 = vrot.lane.b32.xlu0 %v399, 127
        %v402 = vpop.permute.xlu0 %401
        %v404 = vadd.f32 %v396, %v402
        %s405 = sld [smem:[#allocation3 + $0x5]]
        %v406 = vstv %s405
        %v407 = vmul.f32 %v392, %v406
        %409 = vrot.lane.b32.xlu0 %v407, 126
        %v410 = vpop.permute.xlu0 %409
        %v412 = vadd.f32 %v404, %v410
        %v413 = vld [vmem:[#allocation2 + $0x2] sm:$0xff]
        %s414 = sld [smem:[#allocation3 + $0x6]]
        %v415 = vstv %s414
        %v416 = vmul.f32 %v413, %v415
        %v417 = vadd.f32 %v412, %v416
        %s418 = sld [smem:[#allocation3 + $0x7]]
        %v419 = vstv %s418
        %v420 = vmul.f32 %v413, %v419
        %422 = vrot.lane.b32.xlu0 %v420, 127
        %v423 = vpop.permute.xlu0 %422
        %v425 = vadd.f32 %v417, %v423
        %s426 = sld [smem:[#allocation3 + $0x8]]
        %v427 = vstv %s426
        %v428 = vmul.f32 %v413, %v427
        %430 = vrot.lane.b32.xlu0 %v428, 126
        %v431 = vpop.permute.xlu0 %430
        %v433 = vadd.f32 %v425, %v431
        %s434 = scalar_lea.vmem %s353, 8
        %v435 = vld [vmem:[%s434] sm:$0xff]
        %437 = vrot.lane.b32.xlu0 %v435, 1
        %v438 = vpop.permute.xlu0 %437
        %440 = vst.msk [vmem:[#allocation2 + $0x1] sm:$0xff] %vm370, %v438
        %v441 = vld [vmem:[#allocation2] sm:$0xff]
        %s442 = sld [smem:[#allocation3 + $0x80]]
        %v443 = vstv %s442
        %v444 = vmul.f32 %v441, %v443
        %s445 = sld [smem:[#allocation3 + $0x81]]
        %v446 = vstv %s445
        %v447 = vmul.f32 %v441, %v446
        %449 = vrot.lane.b32.xlu0 %v447, 127
        %v450 = vpop.permute.xlu0 %449
        %v452 = vadd.f32 %v444, %v450
        %s453 = sld [smem:[#allocation3 + $0x82]]
        %v454 = vstv %s453
        %v455 = vmul.f32 %v441, %v454
        %457 = vrot.lane.b32.xlu0 %v455, 126
        %v458 = vpop.permute.xlu0 %457
        %v460 = vadd.f32 %v452, %v458
        %v461 = vld [vmem:[#allocation2 + $0x1] sm:$0xff]
        %s462 = sld [smem:[#allocation3 + $0x83]]
        %v463 = vstv %s462
        %v464 = vmul.f32 %v461, %v463
        %v465 = vadd.f32 %v460, %v464
        %s466 = sld [smem:[#allocation3 + $0x84]]
        %v467 = vstv %s466
        %v468 = vmul.f32 %v461, %v467
        %470 = vrot.lane.b32.xlu0 %v468, 127
        %v471 = vpop.permute.xlu0 %470
        %v473 = vadd.f32 %v465, %v471
        %s474 = sld [smem:[#allocation3 + $0x85]]
        %v475 = vstv %s474
        %v476 = vmul.f32 %v461, %v475
        %478 = vrot.lane.b32.xlu0 %v476, 126
        %v479 = vpop.permute.xlu0 %478
        %v481 = vadd.f32 %v473, %v479
        %v482 = vld [vmem:[#allocation2 + $0x2] sm:$0xff]
        %s483 = sld [smem:[#allocation3 + $0x86]]
        %v484 = vstv %s483
        %v485 = vmul.f32 %v482, %v484
        %v486 = vadd.f32 %v481, %v485
        %s487 = sld [smem:[#allocation3 + $0x87]]
        %v488 = vstv %s487
        %v489 = vmul.f32 %v482, %v488
        %491 = vrot.lane.b32.xlu0 %v489, 127
        %v492 = vpop.permute.xlu0 %491
        %v494 = vadd.f32 %v486, %v492
        %s495 = sld [smem:[#allocation3 + $0x88]]
        %v496 = vstv %s495
        %v497 = vmul.f32 %v482, %v496
        %499 = vrot.lane.b32.xlu0 %v497, 126
        %v500 = vpop.permute.xlu0 %499
        %v502 = vadd.f32 %v494, %v500
        %s503 = scalar_lea.vmem %s353, 16
        %v504 = vld [vmem:[%s503] sm:$0xff]
        %506 = vrot.lane.b32.xlu0 %v504, 1
        %v507 = vpop.permute.xlu0 %506
        %509 = vst.msk [vmem:[#allocation2 + $0x1] sm:$0xff] %vm370, %v507
        %v510 = vld [vmem:[#allocation2] sm:$0xff]
        %s511 = sld [smem:[#allocation3 + $0x100]]
        %v512 = vstv %s511
        %v513 = vmul.f32 %v510, %v512
        %s514 = sld [smem:[#allocation3 + $0x101]]
        %v515 = vstv %s514
        %v516 = vmul.f32 %v510, %v515
        %518 = vrot.lane.b32.xlu0 %v516, 127
        %v519 = vpop.permute.xlu0 %518
        %v521 = vadd.f32 %v513, %v519
        %s522 = sld [smem:[#allocation3 + $0x102]]
        %v523 = vstv %s522
        %v524 = vmul.f32 %v510, %v523
        %526 = vrot.lane.b32.xlu0 %v524, 126
        %v527 = vpop.permute.xlu0 %526
        %v529 = vadd.f32 %v521, %v527
        %v530 = vld [vmem:[#allocation2 + $0x1] sm:$0xff]
        %s531 = sld [smem:[#allocation3 + $0x103]]
        %v532 = vstv %s531
        %v533 = vmul.f32 %v530, %v532
        %v534 = vadd.f32 %v529, %v533
        %s535 = sld [smem:[#allocation3 + $0x104]]
        %v536 = vstv %s535
        %v537 = vmul.f32 %v530, %v536
        %539 = vrot.lane.b32.xlu0 %v537, 127
        %v540 = vpop.permute.xlu0 %539
        %v542 = vadd.f32 %v534, %v540
        %s543 = sld [smem:[#allocation3 + $0x105]]
        %v544 = vstv %s543
        %v545 = vmul.f32 %v530, %v544
        %547 = vrot.lane.b32.xlu0 %v545, 126
        %v548 = vpop.permute.xlu0 %547
        %v550 = vadd.f32 %v542, %v548
        %v551 = vld [vmem:[#allocation2 + $0x2] sm:$0xff]
        %s552 = sld [smem:[#allocation3 + $0x106]]
        %v553 = vstv %s552
        %v554 = vmul.f32 %v551, %v553
        %v555 = vadd.f32 %v550, %v554
        %s556 = sld [smem:[#allocation3 + $0x107]]
        %v557 = vstv %s556
        %v558 = vmul.f32 %v551, %v557
        %560 = vrot.lane.b32.xlu0 %v558, 127
        %v561 = vpop.permute.xlu0 %560
        %v563 = vadd.f32 %v555, %v561
        %s564 = sld [smem:[#allocation3 + $0x108]]
        %v565 = vstv %s564
        %v566 = vmul.f32 %v551, %v565
        %568 = vrot.lane.b32.xlu0 %v566, 126
        %v569 = vpop.permute.xlu0 %568
        %v571 = vadd.f32 %v563, %v569
        %s572 = scalar_lea.vmem %s353, 24
        %v573 = vld [vmem:[%s572] sm:$0xff]
        %575 = vrot.lane.b32.xlu0 %v573, 1
        %v576 = vpop.permute.xlu0 %575
        %578 = vst.msk [vmem:[#allocation2 + $0x1] sm:$0xff] %vm370, %v576
        %v579 = vld [vmem:[#allocation2] sm:$0xff]
        %s580 = sld [smem:[#allocation3 + $0x180]]
        %v581 = vstv %s580
        %v582 = vmul.f32 %v579, %v581
        %s583 = sld [smem:[#allocation3 + $0x181]]
        %v584 = vstv %s583
        %v585 = vmul.f32 %v579, %v584
        %587 = vrot.lane.b32.xlu0 %v585, 127
        %v588 = vpop.permute.xlu0 %587
        %v590 = vadd.f32 %v582, %v588
        %s591 = sld [smem:[#allocation3 + $0x182]]
        %v592 = vstv %s591
        %v593 = vmul.f32 %v579, %v592
        %595 = vrot.lane.b32.xlu0 %v593, 126
        %v596 = vpop.permute.xlu0 %595
        %v598 = vadd.f32 %v590, %v596
        %v599 = vld [vmem:[#allocation2 + $0x1] sm:$0xff]
        %s600 = sld [smem:[#allocation3 + $0x183]]
        %v601 = vstv %s600
        %v602 = vmul.f32 %v599, %v601
        %v603 = vadd.f32 %v598, %v602
        %s604 = sld [smem:[#allocation3 + $0x184]]
        %v605 = vstv %s604
        %v606 = vmul.f32 %v599, %v605
        %608 = vrot.lane.b32.xlu0 %v606, 127
        %v609 = vpop.permute.xlu0 %608
        %v611 = vadd.f32 %v603, %v609
        %s612 = sld [smem:[#allocation3 + $0x185]]
        %v613 = vstv %s612
        %v614 = vmul.f32 %v599, %v613
        %616 = vrot.lane.b32.xlu0 %v614, 126
        %v617 = vpop.permute.xlu0 %616
        %v619 = vadd.f32 %v611, %v617
        %v620 = vld [vmem:[#allocation2 + $0x2] sm:$0xff]
        %s621 = sld [smem:[#allocation3 + $0x186]]
        %v622 = vstv %s621
        %v623 = vmul.f32 %v620, %v622
        %v624 = vadd.f32 %v619, %v623
        %s625 = sld [smem:[#allocation3 + $0x187]]
        %v626 = vstv %s625
        %v627 = vmul.f32 %v620, %v626
        %629 = vrot.lane.b32.xlu0 %v627, 127
        %v630 = vpop.permute.xlu0 %629
        %v632 = vadd.f32 %v624, %v630
        %s633 = sld [smem:[#allocation3 + $0x188]]
        %v634 = vstv %s633
        %v635 = vmul.f32 %v620, %v634
        %637 = vrot.lane.b32.xlu0 %v635, 126
        %v638 = vpop.permute.xlu0 %637
        %v640 = vadd.f32 %v632, %v638
        %s641 = sld [smem:[#allocation6]]
        %v642 = vstv %s641
        %v643 = vmul.f32 %v433, %v642
        %s644 = sld [smem:[#allocation6 + $0x80]]
        %v645 = vstv %s644
        %v646 = vmul.f32 %v502, %v645
        %v647 = vadd.f32 %v643, %v646
        %s648 = sld [smem:[#allocation6 + $0x100]]
        %v649 = vstv %s648
        %v650 = vmul.f32 %v571, %v649
        %v651 = vadd.f32 %v647, %v650
        %s652 = sld [smem:[#allocation6 + $0x180]]
        %v653 = vstv %s652
        %v654 = vmul.f32 %v640, %v653
        %v655 = vadd.f32 %v651, %v654
        %s656 = sld [smem:[#allocation8]]
        %v657 = vstv %s656
        %v658 = vadd.f32 %v655, %v657
        %v659 = vmax.f32 %v658, 0.0
        %s660 = sld [smem:[#allocation6 + $0x1]]
        %v661 = vstv %s660
        %v662 = vmul.f32 %v433, %v661
        %s663 = sld [smem:[#allocation6 + $0x81]]
        %v664 = vstv %s663
        %v665 = vmul.f32 %v502, %v664
        %v666 = vadd.f32 %v662, %v665
        %s667 = sld [smem:[#allocation6 + $0x101]]
        %v668 = vstv %s667
        %v669 = vmul.f32 %v571, %v668
        %v670 = vadd.f32 %v666, %v669
        %s671 = sld [smem:[#allocation6 + $0x181]]
        %v672 = vstv %s671
        %v673 = vmul.f32 %v640, %v672
        %v674 = vadd.f32 %v670, %v673
        %s675 = sld [smem:[#allocation8 + $0x1]]
        %v676 = vstv %s675
        %v677 = vadd.f32 %v674, %v676
        %v678 = vmax.f32 %v677, 0.0
        %s679 = sld [smem:[#allocation6 + $0x2]]
        %v680 = vstv %s679
        %v681 = vmul.f32 %v433, %v680
        %s682 = sld [smem:[#allocation6 + $0x82]]
        %v683 = vstv %s682
        %v684 = vmul.f32 %v502, %v683
        %v685 = vadd.f32 %v681, %v684
        %s686 = sld [smem:[#allocation6 + $0x102]]
        %v687 = vstv %s686
        %v688 = vmul.f32 %v571, %v687
        %v689 = vadd.f32 %v685, %v688
        %s690 = sld [smem:[#allocation6 + $0x182]]
        %v691 = vstv %s690
        %v692 = vmul.f32 %v640, %v691
        %v693 = vadd.f32 %v689, %v692
        %s694 = sld [smem:[#allocation8 + $0x2]]
        %v695 = vstv %s694
        %v696 = vadd.f32 %v693, %v695
        %v697 = vmax.f32 %v696, 0.0
        %s698 = sld [smem:[#allocation6 + $0x3]]
        %v699 = vstv %s698
        %v700 = vmul.f32 %v433, %v699
        %s701 = sld [smem:[#allocation6 + $0x83]]
        %v702 = vstv %s701
        %v703 = vmul.f32 %v502, %v702
        %v704 = vadd.f32 %v700, %v703
        %s705 = sld [smem:[#allocation6 + $0x103]]
        %v706 = vstv %s705
        %v707 = vmul.f32 %v571, %v706
        %v708 = vadd.f32 %v704, %v707
        %s709 = sld [smem:[#allocation6 + $0x183]]
        %v710 = vstv %s709
        %v711 = vmul.f32 %v640, %v710
        %v712 = vadd.f32 %v708, %v711
        %s713 = sld [smem:[#allocation8 + $0x3]]
        %v714 = vstv %s713
        %v715 = vadd.f32 %v712, %v714
        %v716 = vmax.f32 %v715, 0.0
        %s717 = sld [smem:[#allocation6 + $0x4]]
        %v718 = vstv %s717
        %v719 = vmul.f32 %v433, %v718
        %s720 = sld [smem:[#allocation6 + $0x84]]
        %v721 = vstv %s720
        %v722 = vmul.f32 %v502, %v721
        %v723 = vadd.f32 %v719, %v722
        %s724 = sld [smem:[#allocation6 + $0x104]]
        %v725 = vstv %s724
        %v726 = vmul.f32 %v571, %v725
        %v727 = vadd.f32 %v723, %v726
        %s728 = sld [smem:[#allocation6 + $0x184]]
        %v729 = vstv %s728
        %v730 = vmul.f32 %v640, %v729
        %v731 = vadd.f32 %v727, %v730
        %s732 = sld [smem:[#allocation8 + $0x4]]
        %v733 = vstv %s732
        %v734 = vadd.f32 %v731, %v733
        %v735 = vmax.f32 %v734, 0.0
        %s736 = sld [smem:[#allocation6 + $0x5]]
        %v737 = vstv %s736
        %v738 = vmul.f32 %v433, %v737
        %s739 = sld [smem:[#allocation6 + $0x85]]
        %v740 = vstv %s739
        %v741 = vmul.f32 %v502, %v740
        %v742 = vadd.f32 %v738, %v741
        %s743 = sld [smem:[#allocation6 + $0x105]]
        %v744 = vstv %s743
        %v745 = vmul.f32 %v571, %v744
        %v746 = vadd.f32 %v742, %v745
        %s747 = sld [smem:[#allocation6 + $0x185]]
        %v748 = vstv %s747
        %v749 = vmul.f32 %v640, %v748
        %v750 = vadd.f32 %v746, %v749
        %s751 = sld [smem:[#allocation8 + $0x5]]
        %v752 = vstv %s751
        %v753 = vadd.f32 %v750, %v752
        %v754 = vmax.f32 %v753, 0.0
        %s755 = sld [smem:[#allocation6 + $0x6]]
        %v756 = vstv %s755
        %v757 = vmul.f32 %v433, %v756
        %s758 = sld [smem:[#allocation6 + $0x86]]
        %v759 = vstv %s758
        %v760 = vmul.f32 %v502, %v759
        %v761 = vadd.f32 %v757, %v760
        %s762 = sld [smem:[#allocation6 + $0x106]]
        %v763 = vstv %s762
        %v764 = vmul.f32 %v571, %v763
        %v765 = vadd.f32 %v761, %v764
        %s766 = sld [smem:[#allocation6 + $0x186]]
        %v767 = vstv %s766
        %v768 = vmul.f32 %v640, %v767
        %v769 = vadd.f32 %v765, %v768
        %s770 = sld [smem:[#allocation8 + $0x6]]
        %v771 = vstv %s770
        %v772 = vadd.f32 %v769, %v771
        %v773 = vmax.f32 %v772, 0.0
        %s774 = sld [smem:[#allocation6 + $0x7]]
        %v775 = vstv %s774
        %v776 = vmul.f32 %v433, %v775
        %s777 = sld [smem:[#allocation6 + $0x87]]
        %v778 = vstv %s777
        %v779 = vmul.f32 %v502, %v778
        %v780 = vadd.f32 %v776, %v779
        %s781 = sld [smem:[#allocation6 + $0x107]]
        %v782 = vstv %s781
        %v783 = vmul.f32 %v571, %v782
        %v784 = vadd.f32 %v780, %v783
        %s785 = sld [smem:[#allocation6 + $0x187]]
        %v786 = vstv %s785
        %v787 = vmul.f32 %v640, %v786
        %v788 = vadd.f32 %v784, %v787
        %s789 = sld [smem:[#allocation8 + $0x7]]
        %v790 = vstv %s789
        %v791 = vadd.f32 %v788, %v790
        %v792 = vmax.f32 %v791, 0.0
        %794 = vrot.lane.b32.xlu0 %v659, 1
        %v795 = vpop.permute.xlu0 %794
        %797 = vst.msk [vmem:[#allocation2 + $0x1] sm:$0xff] %vm370, %v795
        %v798 = vld [vmem:[#allocation2] sm:$0xff]
        %s799 = sld [smem:[#allocation9]]
        %v800 = vstv %s799
        %v801 = vmul.f32 %v798, %v800
        %s802 = sld [smem:[#allocation9 + $0x1]]
        %v803 = vstv %s802
        %v804 = vmul.f32 %v798, %v803
        %806 = vrot.lane.b32.xlu0 %v804, 127
        %v807 = vpop.permute.xlu0 %806
        %v809 = vadd.f32 %v801, %v807
        %s810 = sld [smem:[#allocation9 + $0x2]]
        %v811 = vstv %s810
        %v812 = vmul.f32 %v798, %v811
        %814 = vrot.lane.b32.xlu0 %v812, 126
        %v815 = vpop.permute.xlu0 %814
        %v817 = vadd.f32 %v809, %v815
        %v818 = vld [vmem:[#allocation2 + $0x1] sm:$0xff]
        %s819 = sld [smem:[#allocation9 + $0x3]]
        %v820 = vstv %s819
        %v821 = vmul.f32 %v818, %v820
        %v822 = vadd.f32 %v817, %v821
        %s823 = sld [smem:[#allocation9 + $0x4]]
        %v824 = vstv %s823
        %v825 = vmul.f32 %v818, %v824
        %827 = vrot.lane.b32.xlu0 %v825, 127
        %v828 = vpop.permute.xlu0 %827
        %v830 = vadd.f32 %v822, %v828
        %s831 = sld [smem:[#allocation9 + $0x5]]
        %v832 = vstv %s831
        %v833 = vmul.f32 %v818, %v832
        %835 = vrot.lane.b32.xlu0 %v833, 126
        %v836 = vpop.permute.xlu0 %835
        %v838 = vadd.f32 %v830, %v836
        %v839 = vld [vmem:[#allocation2 + $0x2] sm:$0xff]
        %s840 = sld [smem:[#allocation9 + $0x6]]
        %v841 = vstv %s840
        %v842 = vmul.f32 %v839, %v841
        %v843 = vadd.f32 %v838, %v842
        %s844 = sld [smem:[#allocation9 + $0x7]]
        %v845 = vstv %s844
        %v846 = vmul.f32 %v839, %v845
        %848 = vrot.lane.b32.xlu0 %v846, 127
        %v849 = vpop.permute.xlu0 %848
        %v851 = vadd.f32 %v843, %v849
        %s852 = sld [smem:[#allocation9 + $0x8]]
        %v853 = vstv %s852
        %v854 = vmul.f32 %v839, %v853
        %856 = vrot.lane.b32.xlu0 %v854, 126
        %v857 = vpop.permute.xlu0 %856
        %v859 = vadd.f32 %v851, %v857
        %861 = vrot.lane.b32.xlu0 %v678, 1
        %v862 = vpop.permute.xlu0 %861
        %864 = vst.msk [vmem:[#allocation2 + $0x1] sm:$0xff] %vm370, %v862
        %v865 = vld [vmem:[#allocation2] sm:$0xff]
        %s866 = sld [smem:[#allocation9 + $0x80]]
        %v867 = vstv %s866
        %v868 = vmul.f32 %v865, %v867
        %s869 = sld [smem:[#allocation9 + $0x81]]
        %v870 = vstv %s869
        %v871 = vmul.f32 %v865, %v870
        %873 = vrot.lane.b32.xlu0 %v871, 127
        %v874 = vpop.permute.xlu0 %873
        %v876 = vadd.f32 %v868, %v874
        %s877 = sld [smem:[#allocation9 + $0x82]]
        %v878 = vstv %s877
        %v879 = vmul.f32 %v865, %v878
        %881 = vrot.lane.b32.xlu0 %v879, 126
        %v882 = vpop.permute.xlu0 %881
        %v884 = vadd.f32 %v876, %v882
        %v885 = vld [vmem:[#allocation2 + $0x1] sm:$0xff]
        %s886 = sld [smem:[#allocation9 + $0x83]]
        %v887 = vstv %s886
        %v888 = vmul.f32 %v885, %v887
        %v889 = vadd.f32 %v884, %v888
        %s890 = sld [smem:[#allocation9 + $0x84]]
        %v891 = vstv %s890
        %v892 = vmul.f32 %v885, %v891
        %894 = vrot.lane.b32.xlu0 %v892, 127
        %v895 = vpop.permute.xlu0 %894
        %v897 = vadd.f32 %v889, %v895
        %s898 = sld [smem:[#allocation9 + $0x85]]
        %v899 = vstv %s898
        %v900 = vmul.f32 %v885, %v899
        %902 = vrot.lane.b32.xlu0 %v900, 126
        %v903 = vpop.permute.xlu0 %902
        %v905 = vadd.f32 %v897, %v903
        %v906 = vld [vmem:[#allocation2 + $0x2] sm:$0xff]
        %s907 = sld [smem:[#allocation9 + $0x86]]
        %v908 = vstv %s907
        %v909 = vmul.f32 %v906, %v908
        %v910 = vadd.f32 %v905, %v909
        %s911 = sld [smem:[#allocation9 + $0x87]]
        %v912 = vstv %s911
        %v913 = vmul.f32 %v906, %v912
        %915 = vrot.lane.b32.xlu0 %v913, 127
        %v916 = vpop.permute.xlu0 %915
        %v918 = vadd.f32 %v910, %v916
        %s919 = sld [smem:[#allocation9 + $0x88]]
        %v920 = vstv %s919
        %v921 = vmul.f32 %v906, %v920
        %923 = vrot.lane.b32.xlu0 %v921, 126
        %v924 = vpop.permute.xlu0 %923
        %v926 = vadd.f32 %v918, %v924
        %928 = vrot.lane.b32.xlu0 %v697, 1
        %v929 = vpop.permute.xlu0 %928
        %931 = vst.msk [vmem:[#allocation2 + $0x1] sm:$0xff] %vm370, %v929
        %v932 = vld [vmem:[#allocation2] sm:$0xff]
        %s933 = sld [smem:[#allocation9 + $0x100]]
        %v934 = vstv %s933
        %v935 = vmul.f32 %v932, %v934
        %s936 = sld [smem:[#allocation9 + $0x101]]
        %v937 = vstv %s936
        %v938 = vmul.f32 %v932, %v937
        %940 = vrot.lane.b32.xlu0 %v938, 127
        %v941 = vpop.permute.xlu0 %940
        %v943 = vadd.f32 %v935, %v941
        %s944 = sld [smem:[#allocation9 + $0x102]]
        %v945 = vstv %s944
        %v946 = vmul.f32 %v932, %v945
        %948 = vrot.lane.b32.xlu0 %v946, 126
        %v949 = vpop.permute.xlu0 %948
        %v951 = vadd.f32 %v943, %v949
        %v952 = vld [vmem:[#allocation2 + $0x1] sm:$0xff]
        %s953 = sld [smem:[#allocation9 + $0x103]]
        %v954 = vstv %s953
        %v955 = vmul.f32 %v952, %v954
        %v956 = vadd.f32 %v951, %v955
        %s957 = sld [smem:[#allocation9 + $0x104]]
        %v958 = vstv %s957
        %v959 = vmul.f32 %v952, %v958
        %961 = vrot.lane.b32.xlu0 %v959, 127
        %v962 = vpop.permute.xlu0 %961
        %v964 = vadd.f32 %v956, %v962
        %s965 = sld [smem:[#allocation9 + $0x105]]
        %v966 = vstv %s965
        %v967 = vmul.f32 %v952, %v966
        %969 = vrot.lane.b32.xlu0 %v967, 126
        %v970 = vpop.permute.xlu0 %969
        %v972 = vadd.f32 %v964, %v970
        %v973 = vld [vmem:[#allocation2 + $0x2] sm:$0xff]
        %s974 = sld [smem:[#allocation9 + $0x106]]
        %v975 = vstv %s974
        %v976 = vmul.f32 %v973, %v975
        %v977 = vadd.f32 %v972, %v976
        %s978 = sld [smem:[#allocation9 + $0x107]]
        %v979 = vstv %s978
        %v980 = vmul.f32 %v973, %v979
        %982 = vrot.lane.b32.xlu0 %v980, 127
        %v983 = vpop.permute.xlu0 %982
        %v985 = vadd.f32 %v977, %v983
        %s986 = sld [smem:[#allocation9 + $0x108]]
        %v987 = vstv %s986
        %v988 = vmul.f32 %v973, %v987
        %990 = vrot.lane.b32.xlu0 %v988, 126
        %v991 = vpop.permute.xlu0 %990
        %v993 = vadd.f32 %v985, %v991
        %995 = vrot.lane.b32.xlu0 %v716, 1
        %v996 = vpop.permute.xlu0 %995
        %998 = vst.msk [vmem:[#allocation2 + $0x1] sm:$0xff] %vm370, %v996
        %v999 = vld [vmem:[#allocation2] sm:$0xff]
        %s1000 = sld [smem:[#allocation9 + $0x180]]
        %v1001 = vstv %s1000
        %v1002 = vmul.f32 %v999, %v1001
        %s1003 = sld [smem:[#allocation9 + $0x181]]
        %v1004 = vstv %s1003
        %v1005 = vmul.f32 %v999, %v1004
        %1007 = vrot.lane.b32.xlu0 %v1005, 127
        %v1008 = vpop.permute.xlu0 %1007
        %v1010 = vadd.f32 %v1002, %v1008
        %s1011 = sld [smem:[#allocation9 + $0x182]]
        %v1012 = vstv %s1011
        %v1013 = vmul.f32 %v999, %v1012
        %1015 = vrot.lane.b32.xlu0 %v1013, 126
        %v1016 = vpop.permute.xlu0 %1015
        %v1018 = vadd.f32 %v1010, %v1016
        %v1019 = vld [vmem:[#allocation2 + $0x1] sm:$0xff]
        %s1020 = sld [smem:[#allocation9 + $0x183]]
        %v1021 = vstv %s1020
        %v1022 = vmul.f32 %v1019, %v1021
        %v1023 = vadd.f32 %v1018, %v1022
        %s1024 = sld [smem:[#allocation9 + $0x184]]
        %v1025 = vstv %s1024
        %v1026 = vmul.f32 %v1019, %v1025
        %1028 = vrot.lane.b32.xlu0 %v1026, 127
        %v1029 = vpop.permute.xlu0 %1028
        %v1031 = vadd.f32 %v1023, %v1029
        %s1032 = sld [smem:[#allocation9 + $0x185]]
        %v1033 = vstv %s1032
        %v1034 = vmul.f32 %v1019, %v1033
        %1036 = vrot.lane.b32.xlu0 %v1034, 126
        %v1037 = vpop.permute.xlu0 %1036
        %v1039 = vadd.f32 %v1031, %v1037
        %v1040 = vld [vmem:[#allocation2 + $0x2] sm:$0xff]
        %s1041 = sld [smem:[#allocation9 + $0x186]]
        %v1042 = vstv %s1041
        %v1043 = vmul.f32 %v1040, %v1042
        %v1044 = vadd.f32 %v1039, %v1043
        %s1045 = sld [smem:[#allocation9 + $0x187]]
        %v1046 = vstv %s1045
        %v1047 = vmul.f32 %v1040, %v1046
        %1049 = vrot.lane.b32.xlu0 %v1047, 127
        %v1050 = vpop.permute.xlu0 %1049
        %v1052 = vadd.f32 %v1044, %v1050
        %s1053 = sld [smem:[#allocation9 + $0x188]]
        %v1054 = vstv %s1053
        %v1055 = vmul.f32 %v1040, %v1054
        %1057 = vrot.lane.b32.xlu0 %v1055, 126
        %v1058 = vpop.permute.xlu0 %1057
        %v1060 = vadd.f32 %v1052, %v1058
        %1062 = vrot.lane.b32.xlu0 %v735, 1
        %v1063 = vpop.permute.xlu0 %1062
        %1065 = vst.msk [vmem:[#allocation2 + $0x1] sm:$0xff] %vm370, %v1063
        %v1066 = vld [vmem:[#allocation2] sm:$0xff]
        %s1067 = sld [smem:[#allocation9 + $0x200]]
        %v1068 = vstv %s1067
        %v1069 = vmul.f32 %v1066, %v1068
        %s1070 = sld [smem:[#allocation9 + $0x201]]
        %v1071 = vstv %s1070
        %v1072 = vmul.f32 %v1066, %v1071
        %1074 = vrot.lane.b32.xlu0 %v1072, 127
        %v1075 = vpop.permute.xlu0 %1074
        %v1077 = vadd.f32 %v1069, %v1075
        %s1078 = sld [smem:[#allocation9 + $0x202]]
        %v1079 = vstv %s1078
        %v1080 = vmul.f32 %v1066, %v1079
        %1082 = vrot.lane.b32.xlu0 %v1080, 126
        %v1083 = vpop.permute.xlu0 %1082
        %v1085 = vadd.f32 %v1077, %v1083
        %v1086 = vld [vmem:[#allocation2 + $0x1] sm:$0xff]
        %s1087 = sld [smem:[#allocation9 + $0x203]]
        %v1088 = vstv %s1087
        %v1089 = vmul.f32 %v1086, %v1088
        %v1090 = vadd.f32 %v1085, %v1089
        %s1091 = sld [smem:[#allocation9 + $0x204]]
        %v1092 = vstv %s1091
        %v1093 = vmul.f32 %v1086, %v1092
        %1095 = vrot.lane.b32.xlu0 %v1093, 127
        %v1096 = vpop.permute.xlu0 %1095
        %v1098 = vadd.f32 %v1090, %v1096
        %s1099 = sld [smem:[#allocation9 + $0x205]]
        %v1100 = vstv %s1099
        %v1101 = vmul.f32 %v1086, %v1100
        %1103 = vrot.lane.b32.xlu0 %v1101, 126
        %v1104 = vpop.permute.xlu0 %1103
        %v1106 = vadd.f32 %v1098, %v1104
        %v1107 = vld [vmem:[#allocation2 + $0x2] sm:$0xff]
        %s1108 = sld [smem:[#allocation9 + $0x206]]
        %v1109 = vstv %s1108
        %v1110 = vmul.f32 %v1107, %v1109
        %v1111 = vadd.f32 %v1106, %v1110
        %s1112 = sld [smem:[#allocation9 + $0x207]]
        %v1113 = vstv %s1112
        %v1114 = vmul.f32 %v1107, %v1113
        %1116 = vrot.lane.b32.xlu0 %v1114, 127
        %v1117 = vpop.permute.xlu0 %1116
        %v1119 = vadd.f32 %v1111, %v1117
        %s1120 = sld [smem:[#allocation9 + $0x208]]
        %v1121 = vstv %s1120
        %v1122 = vmul.f32 %v1107, %v1121
        %1124 = vrot.lane.b32.xlu0 %v1122, 126
        %v1125 = vpop.permute.xlu0 %1124
        %v1127 = vadd.f32 %v1119, %v1125
        %1129 = vrot.lane.b32.xlu0 %v754, 1
        %v1130 = vpop.permute.xlu0 %1129
        %1132 = vst.msk [vmem:[#allocation2 + $0x1] sm:$0xff] %vm370, %v1130
        %v1133 = vld [vmem:[#allocation2] sm:$0xff]
        %s1134 = sld [smem:[#allocation9 + $0x280]]
        %v1135 = vstv %s1134
        %v1136 = vmul.f32 %v1133, %v1135
        %s1137 = sld [smem:[#allocation9 + $0x281]]
        %v1138 = vstv %s1137
        %v1139 = vmul.f32 %v1133, %v1138
        %1141 = vrot.lane.b32.xlu0 %v1139, 127
        %v1142 = vpop.permute.xlu0 %1141
        %v1144 = vadd.f32 %v1136, %v1142
        %s1145 = sld [smem:[#allocation9 + $0x282]]
        %v1146 = vstv %s1145
        %v1147 = vmul.f32 %v1133, %v1146
        %1149 = vrot.lane.b32.xlu0 %v1147, 126
        %v1150 = vpop.permute.xlu0 %1149
        %v1152 = vadd.f32 %v1144, %v1150
        %v1153 = vld [vmem:[#allocation2 + $0x1] sm:$0xff]
        %s1154 = sld [smem:[#allocation9 + $0x283]]
        %v1155 = vstv %s1154
        %v1156 = vmul.f32 %v1153, %v1155
        %v1157 = vadd.f32 %v1152, %v1156
        %s1158 = sld [smem:[#allocation9 + $0x284]]
        %v1159 = vstv %s1158
        %v1160 = vmul.f32 %v1153, %v1159
        %1162 = vrot.lane.b32.xlu0 %v1160, 127
        %v1163 = vpop.permute.xlu0 %1162
        %v1165 = vadd.f32 %v1157, %v1163
        %s1166 = sld [smem:[#allocation9 + $0x285]]
        %v1167 = vstv %s1166
        %v1168 = vmul.f32 %v1153, %v1167
        %1170 = vrot.lane.b32.xlu0 %v1168, 126
        %v1171 = vpop.permute.xlu0 %1170
        %v1173 = vadd.f32 %v1165, %v1171
        %v1174 = vld [vmem:[#allocation2 + $0x2] sm:$0xff]
        %s1175 = sld [smem:[#allocation9 + $0x286]]
        %v1176 = vstv %s1175
        %v1177 = vmul.f32 %v1174, %v1176
        %v1178 = vadd.f32 %v1173, %v1177
        %s1179 = sld [smem:[#allocation9 + $0x287]]
        %v1180 = vstv %s1179
        %v1181 = vmul.f32 %v1174, %v1180
        %1183 = vrot.lane.b32.xlu0 %v1181, 127
        %v1184 = vpop.permute.xlu0 %1183
        %v1186 = vadd.f32 %v1178, %v1184
        %s1187 = sld [smem:[#allocation9 + $0x288]]
        %v1188 = vstv %s1187
        %v1189 = vmul.f32 %v1174, %v1188
        %1191 = vrot.lane.b32.xlu0 %v1189, 126
        %v1192 = vpop.permute.xlu0 %1191
        %v1194 = vadd.f32 %v1186, %v1192
        %1196 = vrot.lane.b32.xlu0 %v773, 1
        %v1197 = vpop.permute.xlu0 %1196
        %1199 = vst.msk [vmem:[#allocation2 + $0x1] sm:$0xff] %vm370, %v1197
        %v1200 = vld [vmem:[#allocation2] sm:$0xff]
        %s1201 = sld [smem:[#allocation9 + $0x300]]
        %v1202 = vstv %s1201
        %v1203 = vmul.f32 %v1200, %v1202
        %s1204 = sld [smem:[#allocation9 + $0x301]]
        %v1205 = vstv %s1204
        %v1206 = vmul.f32 %v1200, %v1205
        %1208 = vrot.lane.b32.xlu0 %v1206, 127
        %v1209 = vpop.permute.xlu0 %1208
        %v1211 = vadd.f32 %v1203, %v1209
        %s1212 = sld [smem:[#allocation9 + $0x302]]
        %v1213 = vstv %s1212
        %v1214 = vmul.f32 %v1200, %v1213
        %1216 = vrot.lane.b32.xlu0 %v1214, 126
        %v1217 = vpop.permute.xlu0 %1216
        %v1219 = vadd.f32 %v1211, %v1217
        %v1220 = vld [vmem:[#allocation2 + $0x1] sm:$0xff]
        %s1221 = sld [smem:[#allocation9 + $0x303]]
        %v1222 = vstv %s1221
        %v1223 = vmul.f32 %v1220, %v1222
        %v1224 = vadd.f32 %v1219, %v1223
        %s1225 = sld [smem:[#allocation9 + $0x304]]
        %v1226 = vstv %s1225
        %v1227 = vmul.f32 %v1220, %v1226
        %1229 = vrot.lane.b32.xlu0 %v1227, 127
        %v1230 = vpop.permute.xlu0 %1229
        %v1232 = vadd.f32 %v1224, %v1230
        %s1233 = sld [smem:[#allocation9 + $0x305]]
        %v1234 = vstv %s1233
        %v1235 = vmul.f32 %v1220, %v1234
        %1237 = vrot.lane.b32.xlu0 %v1235, 126
        %v1238 = vpop.permute.xlu0 %1237
        %v1240 = vadd.f32 %v1232, %v1238
        %v1241 = vld [vmem:[#allocation2 + $0x2] sm:$0xff]
        %s1242 = sld [smem:[#allocation9 + $0x306]]
        %v1243 = vstv %s1242
        %v1244 = vmul.f32 %v1241, %v1243
        %v1245 = vadd.f32 %v1240, %v1244
        %s1246 = sld [smem:[#allocation9 + $0x307]]
        %v1247 = vstv %s1246
        %v1248 = vmul.f32 %v1241, %v1247
        %1250 = vrot.lane.b32.xlu0 %v1248, 127
        %v1251 = vpop.permute.xlu0 %1250
        %v1253 = vadd.f32 %v1245, %v1251
        %s1254 = sld [smem:[#allocation9 + $0x308]]
        %v1255 = vstv %s1254
        %v1256 = vmul.f32 %v1241, %v1255
        %1258 = vrot.lane.b32.xlu0 %v1256, 126
        %v1259 = vpop.permute.xlu0 %1258
        %v1261 = vadd.f32 %v1253, %v1259
        %1263 = vrot.lane.b32.xlu0 %v792, 1
        %v1264 = vpop.permute.xlu0 %1263
        %1266 = vst.msk [vmem:[#allocation2 + $0x1] sm:$0xff] %vm370, %v1264
        %v1267 = vld [vmem:[#allocation2] sm:$0xff]
        %s1268 = sld [smem:[#allocation9 + $0x380]]
        %v1269 = vstv %s1268
        %v1270 = vmul.f32 %v1267, %v1269
        %s1271 = sld [smem:[#allocation9 + $0x381]]
        %v1272 = vstv %s1271
        %v1273 = vmul.f32 %v1267, %v1272
        %1275 = vrot.lane.b32.xlu0 %v1273, 127
        %v1276 = vpop.permute.xlu0 %1275
        %v1278 = vadd.f32 %v1270, %v1276
        %s1279 = sld [smem:[#allocation9 + $0x382]]
        %v1280 = vstv %s1279
        %v1281 = vmul.f32 %v1267, %v1280
        %1283 = vrot.lane.b32.xlu0 %v1281, 126
        %v1284 = vpop.permute.xlu0 %1283
        %v1286 = vadd.f32 %v1278, %v1284
        %v1287 = vld [vmem:[#allocation2 + $0x1] sm:$0xff]
        %s1288 = sld [smem:[#allocation9 + $0x383]]
        %v1289 = vstv %s1288
        %v1290 = vmul.f32 %v1287, %v1289
        %v1291 = vadd.f32 %v1286, %v1290
        %s1292 = sld [smem:[#allocation9 + $0x384]]
        %v1293 = vstv %s1292
        %v1294 = vmul.f32 %v1287, %v1293
        %1296 = vrot.lane.b32.xlu0 %v1294, 127
        %v1297 = vpop.permute.xlu0 %1296
        %v1299 = vadd.f32 %v1291, %v1297
        %s1300 = sld [smem:[#allocation9 + $0x385]]
        %v1301 = vstv %s1300
        %v1302 = vmul.f32 %v1287, %v1301
        %1304 = vrot.lane.b32.xlu0 %v1302, 126
        %v1305 = vpop.permute.xlu0 %1304
        %v1307 = vadd.f32 %v1299, %v1305
        %v1308 = vld [vmem:[#allocation2 + $0x2] sm:$0xff]
        %s1309 = sld [smem:[#allocation9 + $0x386]]
        %v1310 = vstv %s1309
        %v1311 = vmul.f32 %v1308, %v1310
        %v1312 = vadd.f32 %v1307, %v1311
        %s1313 = sld [smem:[#allocation9 + $0x387]]
        %v1314 = vstv %s1313
        %v1315 = vmul.f32 %v1308, %v1314
        %1317 = vrot.lane.b32.xlu0 %v1315, 127
        %v1318 = vpop.permute.xlu0 %1317
        %v1320 = vadd.f32 %v1312, %v1318
        %s1321 = sld [smem:[#allocation9 + $0x388]]
        %v1322 = vstv %s1321
        %v1323 = vmul.f32 %v1308, %v1322
        %1325 = vrot.lane.b32.xlu0 %v1323, 126
        %v1326 = vpop.permute.xlu0 %1325
        %v1328 = vadd.f32 %v1320, %v1326
        %s1329 = sld [smem:[#allocation11]]
        %v1330 = vstv %s1329
        %v1331 = vmul.f32 %v859, %v1330
        %s1332 = sld [smem:[#allocation11 + $0x80]]
        %v1333 = vstv %s1332
        %v1334 = vmul.f32 %v926, %v1333
        %v1335 = vadd.f32 %v1331, %v1334
        %s1336 = sld [smem:[#allocation11 + $0x100]]
        %v1337 = vstv %s1336
        %v1338 = vmul.f32 %v993, %v1337
        %v1339 = vadd.f32 %v1335, %v1338
        %s1340 = sld [smem:[#allocation11 + $0x180]]
        %v1341 = vstv %s1340
        %v1342 = vmul.f32 %v1060, %v1341
        %v1343 = vadd.f32 %v1339, %v1342
        %s1344 = sld [smem:[#allocation11 + $0x200]]
        %v1345 = vstv %s1344
        %v1346 = vmul.f32 %v1127, %v1345
        %v1347 = vadd.f32 %v1343, %v1346
        %s1348 = sld [smem:[#allocation11 + $0x280]]
        %v1349 = vstv %s1348
        %v1350 = vmul.f32 %v1194, %v1349
        %v1351 = vadd.f32 %v1347, %v1350
        %s1352 = sld [smem:[#allocation11 + $0x300]]
        %v1353 = vstv %s1352
        %v1354 = vmul.f32 %v1261, %v1353
        %v1355 = vadd.f32 %v1351, %v1354
        %s1356 = sld [smem:[#allocation11 + $0x380]]
        %v1357 = vstv %s1356
        %v1358 = vmul.f32 %v1328, %v1357
        %v1359 = vadd.f32 %v1355, %v1358
        %s1360 = sld [smem:[#allocation12]]
        %v1361 = vstv %s1360
        %v1362 = vadd.f32 %v1359, %v1361
        %v1363 = vmax.f32 %v1362, 0.0
        %vm1364 = vcmask 64512
        %1365 = vst.msk [vmem:[%s348] sm:$0xff] %vm1364, %v1363
        %s1366 = sld [smem:[#allocation11 + $0x1]]
        %v1367 = vstv %s1366
        %v1368 = vmul.f32 %v859, %v1367
        %s1369 = sld [smem:[#allocation11 + $0x81]]
        %v1370 = vstv %s1369
        %v1371 = vmul.f32 %v926, %v1370
        %v1372 = vadd.f32 %v1368, %v1371
        %s1373 = sld [smem:[#allocation11 + $0x101]]
        %v1374 = vstv %s1373
        %v1375 = vmul.f32 %v993, %v1374
        %v1376 = vadd.f32 %v1372, %v1375
        %s1377 = sld [smem:[#allocation11 + $0x181]]
        %v1378 = vstv %s1377
        %v1379 = vmul.f32 %v1060, %v1378
        %v1380 = vadd.f32 %v1376, %v1379
        %s1381 = sld [smem:[#allocation11 + $0x201]]
        %v1382 = vstv %s1381
        %v1383 = vmul.f32 %v1127, %v1382
        %v1384 = vadd.f32 %v1380, %v1383
        %s1385 = sld [smem:[#allocation11 + $0x281]]
        %v1386 = vstv %s1385
        %v1387 = vmul.f32 %v1194, %v1386
        %v1388 = vadd.f32 %v1384, %v1387
        %s1389 = sld [smem:[#allocation11 + $0x301]]
        %v1390 = vstv %s1389
        %v1391 = vmul.f32 %v1261, %v1390
        %v1392 = vadd.f32 %v1388, %v1391
        %s1393 = sld [smem:[#allocation11 + $0x381]]
        %v1394 = vstv %s1393
        %v1395 = vmul.f32 %v1328, %v1394
        %v1396 = vadd.f32 %v1392, %v1395
        %s1397 = sld [smem:[#allocation12 + $0x1]]
        %v1398 = vstv %s1397
        %v1399 = vadd.f32 %v1396, %v1398
        %v1400 = vmax.f32 %v1399, 0.0
        %s1401 = scalar_lea.vmem %s348, 8 [#allocation14]
        %1402 = vst.msk [vmem:[%s1401] sm:$0xff] %vm1364, %v1400
        %s1403 = sld [smem:[#allocation11 + $0x2]]
        %v1404 = vstv %s1403
        %v1405 = vmul.f32 %v859, %v1404
        %s1406 = sld [smem:[#allocation11 + $0x82]]
        %v1407 = vstv %s1406
        %v1408 = vmul.f32 %v926, %v1407
        %v1409 = vadd.f32 %v1405, %v1408
        %s1410 = sld [smem:[#allocation11 + $0x102]]
        %v1411 = vstv %s1410
        %v1412 = vmul.f32 %v993, %v1411
        %v1413 = vadd.f32 %v1409, %v1412
        %s1414 = sld [smem:[#allocation11 + $0x182]]
        %v1415 = vstv %s1414
        %v1416 = vmul.f32 %v1060, %v1415
        %v1417 = vadd.f32 %v1413, %v1416
        %s1418 = sld [smem:[#allocation11 + $0x202]]
        %v1419 = vstv %s1418
        %v1420 = vmul.f32 %v1127, %v1419
        %v1421 = vadd.f32 %v1417, %v1420
        %s1422 = sld [smem:[#allocation11 + $0x282]]
        %v1423 = vstv %s1422
        %v1424 = vmul.f32 %v1194, %v1423
        %v1425 = vadd.f32 %v1421, %v1424
        %s1426 = sld [smem:[#allocation11 + $0x302]]
        %v1427 = vstv %s1426
        %v1428 = vmul.f32 %v1261, %v1427
        %v1429 = vadd.f32 %v1425, %v1428
        %s1430 = sld [smem:[#allocation11 + $0x382]]
        %v1431 = vstv %s1430
        %v1432 = vmul.f32 %v1328, %v1431
        %v1433 = vadd.f32 %v1429, %v1432
        %s1434 = sld [smem:[#allocation12 + $0x2]]
        %v1435 = vstv %s1434
        %v1436 = vadd.f32 %v1433, %v1435
        %v1437 = vmax.f32 %v1436, 0.0
        %s1438 = scalar_lea.vmem %s348, 16 [#allocation14]
        %1439 = vst.msk [vmem:[%s1438] sm:$0xff] %vm1364, %v1437
        %s1440 = sld [smem:[#allocation11 + $0x3]]
        %v1441 = vstv %s1440
        %v1442 = vmul.f32 %v859, %v1441
        %s1443 = sld [smem:[#allocation11 + $0x83]]
        %v1444 = vstv %s1443
        %v1445 = vmul.f32 %v926, %v1444
        %v1446 = vadd.f32 %v1442, %v1445
        %s1447 = sld [smem:[#allocation11 + $0x103]]
        %v1448 = vstv %s1447
        %v1449 = vmul.f32 %v993, %v1448
        %v1450 = vadd.f32 %v1446, %v1449
        %s1451 = sld [smem:[#allocation11 + $0x183]]
        %v1452 = vstv %s1451
        %v1453 = vmul.f32 %v1060, %v1452
        %v1454 = vadd.f32 %v1450, %v1453
        %s1455 = sld [smem:[#allocation11 + $0x203]]
        %v1456 = vstv %s1455
        %v1457 = vmul.f32 %v1127, %v1456
        %v1458 = vadd.f32 %v1454, %v1457
        %s1459 = sld [smem:[#allocation11 + $0x283]]
        %v1460 = vstv %s1459
        %v1461 = vmul.f32 %v1194, %v1460
        %v1462 = vadd.f32 %v1458, %v1461
        %s1463 = sld [smem:[#allocation11 + $0x303]]
        %v1464 = vstv %s1463
        %v1465 = vmul.f32 %v1261, %v1464
        %v1466 = vadd.f32 %v1462, %v1465
        %s1467 = sld [smem:[#allocation11 + $0x383]]
        %v1468 = vstv %s1467
        %v1469 = vmul.f32 %v1328, %v1468
        %v1470 = vadd.f32 %v1466, %v1469
        %s1471 = sld [smem:[#allocation12 + $0x3]]
        %v1472 = vstv %s1471
        %v1473 = vadd.f32 %v1470, %v1472
        %v1474 = vmax.f32 %v1473, 0.0
        %s1475 = scalar_lea.vmem %s348, 24 [#allocation14]
        %1476 = vst.msk [vmem:[%s1475] sm:$0xff] %vm1364, %v1474
        %s1477 = sld [smem:[#allocation11 + $0x4]]
        %v1478 = vstv %s1477
        %v1479 = vmul.f32 %v859, %v1478
        %s1480 = sld [smem:[#allocation11 + $0x84]]
        %v1481 = vstv %s1480
        %v1482 = vmul.f32 %v926, %v1481
        %v1483 = vadd.f32 %v1479, %v1482
        %s1484 = sld [smem:[#allocation11 + $0x104]]
        %v1485 = vstv %s1484
        %v1486 = vmul.f32 %v993, %v1485
        %v1487 = vadd.f32 %v1483, %v1486
        %s1488 = sld [smem:[#allocation11 + $0x184]]
        %v1489 = vstv %s1488
        %v1490 = vmul.f32 %v1060, %v1489
        %v1491 = vadd.f32 %v1487, %v1490
        %s1492 = sld [smem:[#allocation11 + $0x204]]
        %v1493 = vstv %s1492
        %v1494 = vmul.f32 %v1127, %v1493
        %v1495 = vadd.f32 %v1491, %v1494
        %s1496 = sld [smem:[#allocation11 + $0x284]]
        %v1497 = vstv %s1496
        %v1498 = vmul.f32 %v1194, %v1497
        %v1499 = vadd.f32 %v1495, %v1498
        %s1500 = sld [smem:[#allocation11 + $0x304]]
        %v1501 = vstv %s1500
        %v1502 = vmul.f32 %v1261, %v1501
        %v1503 = vadd.f32 %v1499, %v1502
        %s1504 = sld [smem:[#allocation11 + $0x384]]
        %v1505 = vstv %s1504
        %v1506 = vmul.f32 %v1328, %v1505
        %v1507 = vadd.f32 %v1503, %v1506
        %s1508 = sld [smem:[#allocation12 + $0x4]]
        %v1509 = vstv %s1508
        %v1510 = vadd.f32 %v1507, %v1509
        %v1511 = vmax.f32 %v1510, 0.0
        %s1512 = scalar_lea.vmem %s348, 32 [#allocation14]
        %1513 = vst.msk [vmem:[%s1512] sm:$0xff] %vm1364, %v1511
        %s1514 = sld [smem:[#allocation11 + $0x5]]
        %v1515 = vstv %s1514
        %v1516 = vmul.f32 %v859, %v1515
        %s1517 = sld [smem:[#allocation11 + $0x85]]
        %v1518 = vstv %s1517
        %v1519 = vmul.f32 %v926, %v1518
        %v1520 = vadd.f32 %v1516, %v1519
        %s1521 = sld [smem:[#allocation11 + $0x105]]
        %v1522 = vstv %s1521
        %v1523 = vmul.f32 %v993, %v1522
        %v1524 = vadd.f32 %v1520, %v1523
        %s1525 = sld [smem:[#allocation11 + $0x185]]
        %v1526 = vstv %s1525
        %v1527 = vmul.f32 %v1060, %v1526
        %v1528 = vadd.f32 %v1524, %v1527
        %s1529 = sld [smem:[#allocation11 + $0x205]]
        %v1530 = vstv %s1529
        %v1531 = vmul.f32 %v1127, %v1530
        %v1532 = vadd.f32 %v1528, %v1531
        %s1533 = sld [smem:[#allocation11 + $0x285]]
        %v1534 = vstv %s1533
        %v1535 = vmul.f32 %v1194, %v1534
        %v1536 = vadd.f32 %v1532, %v1535
        %s1537 = sld [smem:[#allocation11 + $0x305]]
        %v1538 = vstv %s1537
        %v1539 = vmul.f32 %v1261, %v1538
        %v1540 = vadd.f32 %v1536, %v1539
        %s1541 = sld [smem:[#allocation11 + $0x385]]
        %v1542 = vstv %s1541
        %v1543 = vmul.f32 %v1328, %v1542
        %v1544 = vadd.f32 %v1540, %v1543
        %s1545 = sld [smem:[#allocation12 + $0x5]]
        %v1546 = vstv %s1545
        %v1547 = vadd.f32 %v1544, %v1546
        %v1548 = vmax.f32 %v1547, 0.0
        %s1549 = scalar_lea.vmem %s348, 40 [#allocation14]
        %1550 = vst.msk [vmem:[%s1549] sm:$0xff] %vm1364, %v1548
        %s1551 = sld [smem:[#allocation11 + $0x6]]
        %v1552 = vstv %s1551
        %v1553 = vmul.f32 %v859, %v1552
        %s1554 = sld [smem:[#allocation11 + $0x86]]
        %v1555 = vstv %s1554
        %v1556 = vmul.f32 %v926, %v1555
        %v1557 = vadd.f32 %v1553, %v1556
        %s1558 = sld [smem:[#allocation11 + $0x106]]
        %v1559 = vstv %s1558
        %v1560 = vmul.f32 %v993, %v1559
        %v1561 = vadd.f32 %v1557, %v1560
        %s1562 = sld [smem:[#allocation11 + $0x186]]
        %v1563 = vstv %s1562
        %v1564 = vmul.f32 %v1060, %v1563
        %v1565 = vadd.f32 %v1561, %v1564
        %s1566 = sld [smem:[#allocation11 + $0x206]]
        %v1567 = vstv %s1566
        %v1568 = vmul.f32 %v1127, %v1567
        %v1569 = vadd.f32 %v1565, %v1568
        %s1570 = sld [smem:[#allocation11 + $0x286]]
        %v1571 = vstv %s1570
        %v1572 = vmul.f32 %v1194, %v1571
        %v1573 = vadd.f32 %v1569, %v1572
        %s1574 = sld [smem:[#allocation11 + $0x306]]
        %v1575 = vstv %s1574
        %v1576 = vmul.f32 %v1261, %v1575
        %v1577 = vadd.f32 %v1573, %v1576
        %s1578 = sld [smem:[#allocation11 + $0x386]]
        %v1579 = vstv %s1578
        %v1580 = vmul.f32 %v1328, %v1579
        %v1581 = vadd.f32 %v1577, %v1580
        %s1582 = sld [smem:[#allocation12 + $0x6]]
        %v1583 = vstv %s1582
        %v1584 = vadd.f32 %v1581, %v1583
        %v1585 = vmax.f32 %v1584, 0.0
        %s1586 = scalar_lea.vmem %s348, 48 [#allocation14]
        %1587 = vst.msk [vmem:[%s1586] sm:$0xff] %vm1364, %v1585
        %s1588 = sld [smem:[#allocation11 + $0x7]]
        %v1589 = vstv %s1588
        %v1590 = vmul.f32 %v859, %v1589
        %s1591 = sld [smem:[#allocation11 + $0x87]]
        %v1592 = vstv %s1591
        %v1593 = vmul.f32 %v926, %v1592
        %v1594 = vadd.f32 %v1590, %v1593
        %s1595 = sld [smem:[#allocation11 + $0x107]]
        %v1596 = vstv %s1595
        %v1597 = vmul.f32 %v993, %v1596
        %v1598 = vadd.f32 %v1594, %v1597
        %s1599 = sld [smem:[#allocation11 + $0x187]]
        %v1600 = vstv %s1599
        %v1601 = vmul.f32 %v1060, %v1600
        %v1602 = vadd.f32 %v1598, %v1601
        %s1603 = sld [smem:[#allocation11 + $0x207]]
        %v1604 = vstv %s1603
        %v1605 = vmul.f32 %v1127, %v1604
        %v1606 = vadd.f32 %v1602, %v1605
        %s1607 = sld [smem:[#allocation11 + $0x287]]
        %v1608 = vstv %s1607
        %v1609 = vmul.f32 %v1194, %v1608
        %v1610 = vadd.f32 %v1606, %v1609
        %s1611 = sld [smem:[#allocation11 + $0x307]]
        %v1612 = vstv %s1611
        %v1613 = vmul.f32 %v1261, %v1612
        %v1614 = vadd.f32 %v1610, %v1613
        %s1615 = sld [smem:[#allocation11 + $0x387]]
        %v1616 = vstv %s1615
        %v1617 = vmul.f32 %v1328, %v1616
        %v1618 = vadd.f32 %v1614, %v1617
        %s1619 = sld [smem:[#allocation12 + $0x7]]
        %v1620 = vstv %s1619
        %v1621 = vadd.f32 %v1618, %v1620
        %v1622 = vmax.f32 %v1621, 0.0
        %s1623 = scalar_lea.vmem %s348, 56 [#allocation14]
        %1624 = vst.msk [vmem:[%s1623] sm:$0xff] %vm1364, %v1622
        %s1625 = sand.u32 %s185, 1
        %s1626 = scalar_lea.sflag [#allocation4], %s1625
        %s1627 = sand.u32 %s185, 1
        %s1628 = smul.addr %s1627, 64
        %s1629 = scalar_lea.vmem [#allocation14], %s1628
        // Predicated region
        $region73: #{down_forward.1} parent=47 // pred_check
          %p1630 = pneg %p195
        $region74: #{down_forward.1} parent=47 // pred_check_branch
          %1632 = sbr.rel (%p1630) target = $region76
        $region75: #{down_forward.1} parent=47 // pred_region
          %s1634 = ssub.s32 1024, 1024
          %1635 = vsyncadd %s1626, %s1634
          %s1636 = smul.addr %s25, 8
          %s1637 = smul.addr %s1636, 128
          %s1638 = scalar_lea.hbm %s7, %s1637
          %s1639 = sshll.u32 %s1629, 4
          %s1640 = int_to_ptr.vmem [resolvable:$true] %s1639
          %1645 = dma.vmem_to_hbm [thread:$0]  %s1640, 1024, %s1638, %s1626, 128, 128, 8
        $region76: #{down_forward.1} parent=47 // pred_fallthru
          _
      $region48: #{down_forward.1} parent=5 // pred_fallthru
        _
      %p1646 = scmp.le.s32.totalorder 2, %s20
      // Predicated region
      $region77: #{down_forward.1} parent=5 // pred_check
        %p1647 = pneg %p1646
      $region78: #{down_forward.1} parent=5 // pred_check_branch
        %1649 = sbr.rel (%p1647) target = $region80
      $region79: #{down_forward.1} parent=5 // pred_region
        %s1650 = ssub.s32 %s20, 2
        // Predicated region
        $region81: #{down_forward.1} parent=79 // pred_check
          %p1651 = pneg %p201
        $region82: #{down_forward.1} parent=79 // pred_check_branch
          %1653 = sbr.rel (%p1651) target = $region84
        $region83: #{down_forward.1} parent=79 // pred_region
          %s1654 = sand.u32 %s186, 1
          %s1655 = scalar_lea.sflag [#allocation4], %s1654
          %s1656 = sand.u32 %s186, 1
          %s1657 = smul.addr %s1656, 64
          %s1658 = scalar_lea.vmem [#allocation14], %s1657
          %1659 = dma.done %s1655, 1024
        $region84: #{down_forward.1} parent=79 // pred_fallthru
          _
      $region80: #{down_forward.1} parent=5 // pred_fallthru
        _
    $region6: #{down_forward.1} parent=1 // loop_footer
      %s24 = sadd.s32 1, %s20
    $region7: #{down_forward.1} parent=1 // loop_footer_branch
      %19 = sbr.rel target = $region3
    $region8: #{down_forward.1} parent=1 // loop_exit
      _
    %1660 = vsyncpa [#allocation4], 1
    %s1661 = scalar_lea.sflag [#allocation4], 1
    %1662 = vsyncpa %s1661, 1
    %1663 = vsyncpa [#allocation5], 1
    %s1664 = scalar_lea.sflag [#allocation5], 1
    %1665 = vsyncpa %s1664, 1
    %1666 = vsyncpa [#allocation7], 1
    %1667 = vsyncpa [#allocation10], 1
    %1668 = vsyncpa [#allocation13], 1

</llo_original>
